<compile_context>
chip_gen: v5e
topology: v5e:2x2
jax: 0.10.0
libtpu: 0.0.40
codegen_flags: <defaults>
</compile_context>

<pallas_src>
import jax
import jax.numpy as jnp
from jax.experimental import pallas as pl
from jax.experimental.pallas import tpu as pltpu

# ---- hyperparameters (the PyTorch module reads these as globals) ----
d_model = 32
d_k = 8
d_v = 8
n_heads = 4
d_ff = 64

_NEG_INF = jnp.float32(-1e9)


def _layer_norm(x, gamma, beta, eps=1e-5):
    mean = jnp.mean(x, axis=-1, keepdims=True)
    var = jnp.mean((x - mean) ** 2, axis=-1, keepdims=True)
    return (x - mean) * jax.lax.rsqrt(var + eps) * gamma + beta


def _softmax_rows(scores):
    m = jnp.max(scores, axis=-1, keepdims=True)
    e = jnp.exp(scores - m)
    denom = jnp.sum(e, axis=-1, keepdims=True)
    # divide goes to the (otherwise idle) EUP slot
    return e * pl.reciprocal(denom, approx=True)


def _attention(q_s, k_s, v_s, bias, ctx_ref, attn_ref, B, Sq, Sk):
    """Scaled-dot-product attention over all (batch, head) pairs.

    q_s: (B*Sq, H*d_k), k_s: (B*Sk, H*d_k), v_s: (B*Sk, H*d_v)
    bias: (B, Sq, Sk) additive (-1e9 where masked)
    Writes context into ctx_ref (B*Sq, H*d_v) and probabilities (lane-dense)
    into attn_ref (B*Sq, H*Sk); the wrapper un-flattens the latter.
    """
    scale = d_k ** -0.5
    for b in range(B):                      # static loops (B, n_heads tiny)
        bias_b = bias[b]                    # (Sq, Sk)
        q_b = q_s[b * Sq:(b + 1) * Sq, :]
        k_b = k_s[b * Sk:(b + 1) * Sk, :]
        v_b = v_s[b * Sk:(b + 1) * Sk, :]
        for h in range(n_heads):
            qh = q_b[:, h * d_k:(h + 1) * d_k]
            kh = k_b[:, h * d_k:(h + 1) * d_k]
            vh = v_b[:, h * d_v:(h + 1) * d_v]
            scores = (jnp.dot(qh, kh.T, preferred_element_type=jnp.float32)
                      * scale + bias_b)
            attn = _softmax_rows(scores)
            attn_ref[b * Sq:(b + 1) * Sq, h * Sk:(h + 1) * Sk] = attn
            ctx_ref[b * Sq:(b + 1) * Sq, h * d_v:(h + 1) * d_v] = jnp.dot(
                attn, vh, preferred_element_type=jnp.float32)


# ----------------------------------------------------------------------------
# Fused decoder-layer kernel: self-attn -> enc-dec attn -> position-wise FFN
# ----------------------------------------------------------------------------
def decoder_layer_kernel(
        dec_ref, enc_ref, self_bias_ref, enc_bias_ref,
        # self-attention params
        wqkv_s_ref, bqkv_s_ref, wo_s_ref, bo_s_ref, g1_ref, be1_ref,
        # encoder-decoder attention params
        wq_e_ref, bq_e_ref, wkv_e_ref, bkv_e_ref, wo_e_ref, bo_e_ref,
        g2_ref, be2_ref,
        # feed-forward params
        w1_ref, bf1_ref, w2_ref, bf2_ref, g3_ref, be3_ref,
        # outputs
        out_ref, self_attn_ref, enc_attn_ref,
        # scratch
        ctx_ref):
    B, Sd, _ = self_bias_ref.shape
    Se = enc_bias_ref.shape[2]
    Hdk = n_heads * d_k

    dec_in = dec_ref[...]                                   # (B*Sd, D) residual 1
    enc_in = enc_ref[...]                                   # (B*Se, D)

    # ---------------- self-attention (fused QKV projection) -----------------
    qkv = jnp.dot(dec_in, wqkv_s_ref[...],
                  preferred_element_type=jnp.float32) + bqkv_s_ref[0]
    _attention(qkv[:, :Hdk], qkv[:, Hdk:2 * Hdk], qkv[:, 2 * Hdk:],
               self_bias_ref[...], ctx_ref, self_attn_ref, B, Sd, Sd)
    attn_o = jnp.dot(ctx_ref[...], wo_s_ref[...],
                     preferred_element_type=jnp.float32) + bo_s_ref[0]
    x1 = _layer_norm(attn_o + dec_in, g1_ref[0], be1_ref[0])

    # ---------------- encoder-decoder attention (fused K|V projection) ------
    q_e = jnp.dot(x1, wq_e_ref[...],
                  preferred_element_type=jnp.float32) + bq_e_ref[0]
    kv_e = jnp.dot(enc_in, wkv_e_ref[...],
                   preferred_element_type=jnp.float32) + bkv_e_ref[0]
    _attention(q_e, kv_e[:, :Hdk], kv_e[:, Hdk:],
               enc_bias_ref[...], ctx_ref, enc_attn_ref, B, Sd, Se)
    attn_o2 = jnp.dot(ctx_ref[...], wo_e_ref[...],
                      preferred_element_type=jnp.float32) + bo_e_ref[0]
    x2 = _layer_norm(attn_o2 + x1, g2_ref[0], be2_ref[0])

    # ---------------- position-wise FFN (Conv1d k=1 == per-token linear) ----
    h = jnp.maximum(jnp.dot(x2, w1_ref[...],
                            preferred_element_type=jnp.float32) + bf1_ref[0], 0.0)
    ffn = jnp.dot(h, w2_ref[...],
                  preferred_element_type=jnp.float32) + bf2_ref[0]
    out_ref[...] = _layer_norm(ffn + x2, g3_ref[0], be3_ref[0])


def _cost_estimate(B, Sd, Se):
    Hdk = n_heads * d_k
    Hdv = n_heads * d_v
    flops = 2 * B * Sd * d_model * (3 * Hdk)            # self QKV projection
    flops += 2 * B * n_heads * Sd * Sd * (d_k + d_v)    # self scores + context
    flops += 2 * B * Sd * Hdv * d_model                 # self output projection
    flops += 2 * B * Sd * d_model * Hdk                 # enc-dec Q projection
    flops += 2 * B * Se * d_model * (2 * Hdk)           # enc-dec K|V projection
    flops += 2 * B * n_heads * Sd * Se * (d_k + d_v)    # enc-dec scores + ctx
    flops += 2 * B * Sd * Hdv * d_model                 # enc-dec out projection
    flops += 2 * B * Sd * d_model * d_ff * 2            # FFN
    transcendentals = B * n_heads * Sd * (Sd + Se)      # softmax exps
    bytes_accessed = 4 * (
        B * Sd * d_model + B * Se * d_model             # activations in
        + B * Sd * Sd + B * Sd * Se                     # mask biases
        + d_model * 3 * Hdk + 3 * Hdk                   # self-attn weights
        + Hdv * d_model + d_model + 2 * d_model
        + d_model * Hdk + Hdk + d_model * 2 * Hdk + 2 * Hdk
        + Hdv * d_model + d_model + 2 * d_model         # enc-attn weights
        + d_model * d_ff + d_ff + d_ff * d_model + d_model + 2 * d_model
        + B * Sd * d_model                              # output
        + B * Sd * n_heads * Sd + B * Sd * n_heads * Se)  # attn probs out
    return pl.CostEstimate(flops=flops, transcendentals=transcendentals,
                           bytes_accessed=bytes_accessed)


# ----------------------------------------------------------------------------
# DecoderLayer forward: one fused pallas_call for the whole layer
# ----------------------------------------------------------------------------
def decoder_layer_forward(dec_inputs, enc_outputs,
                          dec_self_attn_mask, dec_enc_attn_mask, params):
    B, Sd, D = dec_inputs.shape
    Se = enc_outputs.shape[1]
    Hdv = n_heads * d_v

    # masks -> additive biases once on the host (no per-head select in-kernel).
    # Matches masked_fill(-1e9) except for fully-masked rows (degenerate case
    # never produced by causal / padding masks).
    self_bias = jnp.where(dec_self_attn_mask, _NEG_INF, jnp.float32(0.0))
    enc_bias = jnp.where(dec_enc_attn_mask, _NEG_INF, jnp.float32(0.0))

    sa, ea, ff = params["self_attn"], params["enc_attn"], params["ffn"]
    # host-side weight fusion for wider MXU pushes
    wqkv_s = jnp.concatenate([sa["wq"], sa["wk"], sa["wv"]], axis=1)  # (32, 96)
    bqkv_s = jnp.concatenate([sa["bq"], sa["bk"], sa["bv"]], axis=1)  # (1, 96)
    wkv_e = jnp.concatenate([ea["wk"], ea["wv"]], axis=1)             # (32, 64)
    bkv_e = jnp.concatenate([ea["bk"], ea["bv"]], axis=1)             # (1, 64)

    # whole batch in one grid step: flatten to (B*S, d_model)
    dec_flat = dec_inputs.reshape(B * Sd, D)
    enc_flat = enc_outputs.reshape(B * Se, D)

    def vspec(shape):
        return pl.BlockSpec(shape, lambda i: (0,) * len(shape))

    in_arrays = [
        dec_flat, enc_flat, self_bias, enc_bias,
        wqkv_s, bqkv_s, sa["wo"], sa["bo"], sa["ln_g"], sa["ln_b"],
        ea["wq"], ea["bq"], wkv_e, bkv_e, ea["wo"], ea["bo"],
        ea["ln_g"], ea["ln_b"],
        ff["w1"], ff["b1"], ff["w2"], ff["b2"], ff["ln_g"], ff["ln_b"],
    ]
    in_specs = [vspec(a.shape) for a in in_arrays]

    out_shape = (
        jax.ShapeDtypeStruct((B * Sd, D), jnp.float32),
        jax.ShapeDtypeStruct((B * Sd, n_heads * Sd), jnp.float32),  # lane-dense
        jax.ShapeDtypeStruct((B * Sd, n_heads * Se), jnp.float32),  # lane-dense
    )
    out_specs = (
        vspec((B * Sd, D)),
        vspec((B * Sd, n_heads * Sd)),
        vspec((B * Sd, n_heads * Se)),
    )

    out_flat, self_attn_flat, enc_attn_flat = pl.pallas_call(
        decoder_layer_kernel,
        grid=(1,),
        in_specs=in_specs,
        out_specs=out_specs,
        out_shape=out_shape,
        scratch_shapes=[pltpu.VMEM((B * Sd, Hdv), jnp.float32)],
        compiler_params=pltpu.CompilerParams(
            dimension_semantics=("arbitrary",)),
        cost_estimate=_cost_estimate(B, Sd, Se),
    )(*in_arrays)

    out = out_flat.reshape(B, Sd, D)
    self_attn = self_attn_flat.reshape(B, Sd, n_heads, Sd).transpose(0, 2, 1, 3)
    enc_attn = enc_attn_flat.reshape(B, Sd, n_heads, Se).transpose(0, 2, 1, 3)
    return out, self_attn, enc_attn


# ----------------------------------------------------------------------------
# Pure-JAX reference (PyTorch-faithful: masked_fill semantics)
# ----------------------------------------------------------------------------
def _ref_mha(Q, K, V, mask_b, p):
    B, Sq, _ = Q.shape
    Sk = K.shape[1]
    q_s = (Q @ p["wq"] + p["bq"][0]).reshape(B, Sq, n_heads, d_k).transpose(0, 2, 1, 3)
    k_s = (K @ p["wk"] + p["bk"][0]).reshape(B, Sk, n_heads, d_k).transpose(0, 2, 1, 3)
    v_s = (V @ p["wv"] + p["bv"][0]).reshape(B, Sk, n_heads, d_v).transpose(0, 2, 1, 3)
    scores = jnp.einsum("bhqd,bhkd->bhqk", q_s, k_s) / jnp.sqrt(jnp.float32(d_k))
    scores = jnp.where(mask_b[:, None, :, :], -1e9, scores)
    attn = jax.nn.softmax(scores, axis=-1)
    ctx = jnp.einsum("bhqk,bhkd->bhqd", attn, v_s)
    ctx = ctx.transpose(0, 2, 1, 3).reshape(B, Sq, n_heads * d_v)
    out = ctx @ p["wo"] + p["bo"][0]
    return _layer_norm(out + Q, p["ln_g"][0], p["ln_b"][0]), attn


def _ref_ffn(x, p):
    h = jax.nn.relu(x @ p["w1"] + p["b1"][0])
    out = h @ p["w2"] + p["b2"][0]
    return _layer_norm(out + x, p["ln_g"][0], p["ln_b"][0])


def _ref_decoder(dec_inputs, enc_outputs, self_mask, enc_mask, params):
    o, a1 = _ref_mha(dec_inputs, dec_inputs, dec_inputs, self_mask, params["self_attn"])
    o, a2 = _ref_mha(o, enc_outputs, enc_outputs, enc_mask, params["enc_attn"])
    o = _ref_ffn(o, params["ffn"])
    return o, a1, a2


# ----------------------------------------------------------------------------
def init_params(key):
    def nrm(k, shape, scale=0.1):
        return scale * jax.random.normal(k, shape, dtype=jnp.float32)

    ks = jax.random.split(key, 32)
    i = iter(range(32))

    def mha_params():
        return {
            "wq": nrm(ks[next(i)], (d_model, n_heads * d_k)),
            "bq": nrm(ks[next(i)], (1, n_heads * d_k)),
            "wk": nrm(ks[next(i)], (d_model, n_heads * d_k)),
            "bk": nrm(ks[next(i)], (1, n_heads * d_k)),
            "wv": nrm(ks[next(i)], (d_model, n_heads * d_v)),
            "bv": nrm(ks[next(i)], (1, n_heads * d_v)),
            "wo": nrm(ks[next(i)], (n_heads * d_v, d_model)),
            "bo": nrm(ks[next(i)], (1, d_model)),
            "ln_g": jnp.ones((1, d_model), jnp.float32),
            "ln_b": jnp.zeros((1, d_model), jnp.float32),
        }

    return {
        "self_attn": mha_params(),
        "enc_attn": mha_params(),
        "ffn": {
            "w1": nrm(ks[next(i)], (d_model, d_ff)),
            "b1": nrm(ks[next(i)], (1, d_ff)),
            "w2": nrm(ks[next(i)], (d_ff, d_model)),
            "b2": nrm(ks[next(i)], (1, d_model)),
            "ln_g": jnp.ones((1, d_model), jnp.float32),
            "ln_b": jnp.zeros((1, d_model), jnp.float32),
        },
    }


if __name__ == "__main__":
    B, S_dec, S_enc = 2, 8, 8
    key = jax.random.PRNGKey(0)
    k1, k2, k3 = jax.random.split(key, 3)

    dec_inputs = jax.random.normal(k1, (B, S_dec, d_model), dtype=jnp.float32)
    enc_outputs = jax.random.normal(k2, (B, S_enc, d_model), dtype=jnp.float32)

    # causal (subsequent) mask for decoder self-attention: True == masked
    causal = jnp.triu(jnp.ones((S_dec, S_dec), dtype=bool), k=1)
    dec_self_attn_mask = jnp.broadcast_to(causal, (B, S_dec, S_dec))
    # pretend the last encoder position is padding
    enc_pad = jnp.zeros((S_enc,), dtype=bool).at[-1].set(True)
    dec_enc_attn_mask = jnp.broadcast_to(enc_pad[None, None, :], (B, S_dec, S_enc))

    params = init_params(k3)

    fwd = jax.jit(decoder_layer_forward)
    out, self_attn, enc_attn = fwd(
        dec_inputs, enc_outputs, dec_self_attn_mask, dec_enc_attn_mask, params)
    jax.block_until_ready((out, self_attn, enc_attn))

    # sanity check against pure-JAX reference (tolerance accounts for the
    # approximate EUP reciprocal in the in-kernel softmax)
    r_out, r_self, r_enc = _ref_decoder(
        dec_inputs, enc_outputs, dec_self_attn_mask, dec_enc_attn_mask, params)
    assert out.shape == (B, S_dec, d_model)
    assert self_attn.shape == (B, n_heads, S_dec, S_dec)
    assert enc_attn.shape == (B, n_heads, S_dec, S_enc)
    assert jnp.allclose(out, r_out, atol=2e-3), "output mismatch"
    assert jnp.allclose(self_attn, r_self, atol=2e-3), "self-attn mismatch"
    assert jnp.allclose(enc_attn, r_enc, atol=2e-3), "enc-attn mismatch"

    print("KERNEL_OK")
</pallas_src>

<mosaic_0001>
module attributes {stable_mosaic.version = 11 : i64} {
  func.func @decoder_layer_kernel(%arg0: i32, %arg1: memref<16x32xf32, #tpu.memory_space<vmem>>, %arg2: memref<16x32xf32, #tpu.memory_space<vmem>>, %arg3: memref<2x8x8xf32, #tpu.memory_space<vmem>>, %arg4: memref<2x8x8xf32, #tpu.memory_space<vmem>>, %arg5: memref<32x96xf32, #tpu.memory_space<vmem>>, %arg6: memref<1x96xf32, #tpu.memory_space<vmem>>, %arg7: memref<32x32xf32, #tpu.memory_space<vmem>>, %arg8: memref<1x32xf32, #tpu.memory_space<vmem>>, %arg9: memref<1x32xf32, #tpu.memory_space<vmem>>, %arg10: memref<1x32xf32, #tpu.memory_space<vmem>>, %arg11: memref<32x32xf32, #tpu.memory_space<vmem>>, %arg12: memref<1x32xf32, #tpu.memory_space<vmem>>, %arg13: memref<32x64xf32, #tpu.memory_space<vmem>>, %arg14: memref<1x64xf32, #tpu.memory_space<vmem>>, %arg15: memref<32x32xf32, #tpu.memory_space<vmem>>, %arg16: memref<1x32xf32, #tpu.memory_space<vmem>>, %arg17: memref<1x32xf32, #tpu.memory_space<vmem>>, %arg18: memref<1x32xf32, #tpu.memory_space<vmem>>, %arg19: memref<32x64xf32, #tpu.memory_space<vmem>>, %arg20: memref<1x64xf32, #tpu.memory_space<vmem>>, %arg21: memref<64x32xf32, #tpu.memory_space<vmem>>, %arg22: memref<1x32xf32, #tpu.memory_space<vmem>>, %arg23: memref<1x32xf32, #tpu.memory_space<vmem>>, %arg24: memref<1x32xf32, #tpu.memory_space<vmem>>, %arg25: memref<16x32xf32, #tpu.memory_space<vmem>>, %arg26: memref<16x32xf32, #tpu.memory_space<vmem>>, %arg27: memref<16x32xf32, #tpu.memory_space<vmem>>, %arg28: memref<16x32xf32, #tpu.memory_space<vmem>>) attributes {dimension_semantics = [#tpu.dimension_semantics<arbitrary>], iteration_bounds = array<i64: 1>, scalar_prefetch = 0 : i64, scratch_operands = 1 : i64, tpu.core_type = #tpu.core_type<tc>, window_params = [{pipeline_mode = #tpu.pipeline_mode<synchronous>, transform_indices = @transform_0, window_bounds = array<i64: 16, 32>}, {pipeline_mode = #tpu.pipeline_mode<synchronous>, transform_indices = @transform_1, window_bounds = array<i64: 16, 32>}, {pipeline_mode = #tpu.pipeline_mode<synchronous>, transform_indices = @transform_2, window_bounds = array<i64: 2, 8, 8>}, {pipeline_mode = #tpu.pipeline_mode<synchronous>, transform_indices = @transform_3, window_bounds = array<i64: 2, 8, 8>}, {pipeline_mode = #tpu.pipeline_mode<synchronous>, transform_indices = @transform_4, window_bounds = array<i64: 32, 96>}, {pipeline_mode = #tpu.pipeline_mode<synchronous>, transform_indices = @transform_5, window_bounds = array<i64: 1, 96>}, {pipeline_mode = #tpu.pipeline_mode<synchronous>, transform_indices = @transform_6, window_bounds = array<i64: 32, 32>}, {pipeline_mode = #tpu.pipeline_mode<synchronous>, transform_indices = @transform_7, window_bounds = array<i64: 1, 32>}, {pipeline_mode = #tpu.pipeline_mode<synchronous>, transform_indices = @transform_8, window_bounds = array<i64: 1, 32>}, {pipeline_mode = #tpu.pipeline_mode<synchronous>, transform_indices = @transform_9, window_bounds = array<i64: 1, 32>}, {pipeline_mode = #tpu.pipeline_mode<synchronous>, transform_indices = @transform_10, window_bounds = array<i64: 32, 32>}, {pipeline_mode = #tpu.pipeline_mode<synchronous>, transform_indices = @transform_11, window_bounds = array<i64: 1, 32>}, {pipeline_mode = #tpu.pipeline_mode<synchronous>, transform_indices = @transform_12, window_bounds = array<i64: 32, 64>}, {pipeline_mode = #tpu.pipeline_mode<synchronous>, transform_indices = @transform_13, window_bounds = array<i64: 1, 64>}, {pipeline_mode = #tpu.pipeline_mode<synchronous>, transform_indices = @transform_14, window_bounds = array<i64: 32, 32>}, {pipeline_mode = #tpu.pipeline_mode<synchronous>, transform_indices = @transform_15, window_bounds = array<i64: 1, 32>}, {pipeline_mode = #tpu.pipeline_mode<synchronous>, transform_indices = @transform_16, window_bounds = array<i64: 1, 32>}, {pipeline_mode = #tpu.pipeline_mode<synchronous>, transform_indices = @transform_17, window_bounds = array<i64: 1, 32>}, {pipeline_mode = #tpu.pipeline_mode<synchronous>, transform_indices = @transform_18, window_bounds = array<i64: 32, 64>}, {pipeline_mode = #tpu.pipeline_mode<synchronous>, transform_indices = @transform_19, window_bounds = array<i64: 1, 64>}, {pipeline_mode = #tpu.pipeline_mode<synchronous>, transform_indices = @transform_20, window_bounds = array<i64: 64, 32>}, {pipeline_mode = #tpu.pipeline_mode<synchronous>, transform_indices = @transform_21, window_bounds = array<i64: 1, 32>}, {pipeline_mode = #tpu.pipeline_mode<synchronous>, transform_indices = @transform_22, window_bounds = array<i64: 1, 32>}, {pipeline_mode = #tpu.pipeline_mode<synchronous>, transform_indices = @transform_23, window_bounds = array<i64: 1, 32>}, {pipeline_mode = #tpu.pipeline_mode<synchronous>, transform_indices = @transform_24, window_bounds = array<i64: 16, 32>}, {pipeline_mode = #tpu.pipeline_mode<synchronous>, transform_indices = @transform_25, window_bounds = array<i64: 16, 32>}, {pipeline_mode = #tpu.pipeline_mode<synchronous>, transform_indices = @transform_26, window_bounds = array<i64: 16, 32>}]} {
    %c0 = arith.constant 0 : index
    %c0_0 = arith.constant 0 : index
    %0 = vector.load %arg1[%c0, %c0_0] : memref<16x32xf32, #tpu.memory_space<vmem>>, vector<16x32xf32>
    %c0_1 = arith.constant 0 : index
    %c0_2 = arith.constant 0 : index
    %1 = vector.load %arg2[%c0_1, %c0_2] : memref<16x32xf32, #tpu.memory_space<vmem>>, vector<16x32xf32>
    %c0_3 = arith.constant 0 : index
    %c0_4 = arith.constant 0 : index
    %2 = vector.load %arg5[%c0_3, %c0_4] : memref<32x96xf32, #tpu.memory_space<vmem>>, vector<32x96xf32>
    %cst = arith.constant dense<0.000000e+00> : vector<16x96xf32>
    %3 = tpu.matmul %0, %2, %cst {dimension_numbers = #tpu.dot_dimension_numbers<[1], [0], [0], [1], [0, 0, 1, 1], [], []>} : vector<16x32xf32>, vector<32x96xf32>, vector<16x96xf32> -> vector<16x96xf32>
    %c0_5 = arith.constant 0 : index
    %c0_6 = arith.constant 0 : index
    %4 = vector.load %arg6[%c0_5, %c0_6] : memref<1x96xf32, #tpu.memory_space<vmem>>, vector<1x96xf32>
    %5 = vector.shape_cast %4 : vector<1x96xf32> to vector<96xf32>
    %6 = vector.shape_cast %5 : vector<96xf32> to vector<1x96xf32>
    %7 = vector.broadcast %6 : vector<1x96xf32> to vector<16x96xf32>
    %8 = arith.addf %3, %7 : vector<16x96xf32>
    %9 = vector.extract_strided_slice %8 {offsets = [0, 0], sizes = [16, 32], strides = [1, 1]} : vector<16x96xf32> to vector<16x32xf32>
    %10 = vector.extract_strided_slice %8 {offsets = [0, 32], sizes = [16, 32], strides = [1, 1]} : vector<16x96xf32> to vector<16x32xf32>
    %11 = vector.extract_strided_slice %8 {offsets = [0, 64], sizes = [16, 32], strides = [1, 1]} : vector<16x96xf32> to vector<16x32xf32>
    %c0_7 = arith.constant 0 : index
    %c0_8 = arith.constant 0 : index
    %c0_9 = arith.constant 0 : index
    %12 = vector.load %arg3[%c0_7, %c0_8, %c0_9] : memref<2x8x8xf32, #tpu.memory_space<vmem>>, vector<2x8x8xf32>
    %13 = vector.extract_strided_slice %12 {offsets = [0, 0, 0], sizes = [1, 8, 8], strides = [1, 1, 1]} : vector<2x8x8xf32> to vector<1x8x8xf32>
    %14 = vector.shape_cast %13 : vector<1x8x8xf32> to vector<8x8xf32>
    %15 = vector.extract_strided_slice %9 {offsets = [0, 0], sizes = [8, 32], strides = [1, 1]} : vector<16x32xf32> to vector<8x32xf32>
    %16 = vector.extract_strided_slice %10 {offsets = [0, 0], sizes = [8, 32], strides = [1, 1]} : vector<16x32xf32> to vector<8x32xf32>
    %17 = vector.extract_strided_slice %11 {offsets = [0, 0], sizes = [8, 32], strides = [1, 1]} : vector<16x32xf32> to vector<8x32xf32>
    %18 = vector.extract_strided_slice %15 {offsets = [0, 0], sizes = [8, 8], strides = [1, 1]} : vector<8x32xf32> to vector<8x8xf32>
    %19 = vector.extract_strided_slice %16 {offsets = [0, 0], sizes = [8, 8], strides = [1, 1]} : vector<8x32xf32> to vector<8x8xf32>
    %20 = vector.extract_strided_slice %17 {offsets = [0, 0], sizes = [8, 8], strides = [1, 1]} : vector<8x32xf32> to vector<8x8xf32>
    %21 = tpu.transpose %19, [1, 0] : vector<8x8xf32> -> vector<8x8xf32>
    %cst_10 = arith.constant dense<0.000000e+00> : vector<8x8xf32>
    %22 = tpu.matmul %18, %21, %cst_10 {dimension_numbers = #tpu.dot_dimension_numbers<[1], [0], [0], [1], [0, 0, 1, 1], [], []>} : vector<8x8xf32>, vector<8x8xf32>, vector<8x8xf32> -> vector<8x8xf32>
    %cst_11 = arith.constant 0.353553385 : f32
    %23 = vector.broadcast %cst_11 : f32 to vector<8x8xf32>
    %24 = arith.mulf %22, %23 : vector<8x8xf32>
    %25 = arith.addf %24, %14 : vector<8x8xf32>
    %cst_12 = arith.constant dense<0xFF800000> : vector<8xf32>
    %26 = vector.multi_reduction <maximumf>, %25, %cst_12 [1] : vector<8x8xf32> to vector<8xf32>
    %27 = vector.shape_cast %26 : vector<8xf32> to vector<8x1xf32>
    %28 = vector.broadcast %27 : vector<8x1xf32> to vector<8x8xf32>
    %29 = arith.subf %25, %28 : vector<8x8xf32>
    %30 = math.exp %29 : vector<8x8xf32>
    %cst_13 = arith.constant dense<0.000000e+00> : vector<8xf32>
    %31 = vector.multi_reduction <add>, %30, %cst_13 [1] : vector<8x8xf32> to vector<8xf32>
    %32 = vector.shape_cast %31 : vector<8xf32> to vector<8x1xf32>
    %33 = tpu.reciprocal %32 {approx = true} : vector<8x1xf32> -> vector<8x1xf32>
    %34 = vector.broadcast %33 : vector<8x1xf32> to vector<8x8xf32>
    %35 = arith.mulf %30, %34 : vector<8x8xf32>
    %c0_14 = arith.constant 0 : index
    %c0_15 = arith.constant 0 : index
    %36 = vector.load %arg26[%c0_14, %c0_15] : memref<16x32xf32, #tpu.memory_space<vmem>>, vector<8x8xf32>
    tpu.vector_store %arg26[%c0_14, %c0_15], %35 {strides = array<i32>} : memref<16x32xf32, #tpu.memory_space<vmem>>, vector<8x8xf32>,
    %cst_16 = arith.constant dense<0.000000e+00> : vector<8x8xf32>
    %37 = tpu.matmul %35, %20, %cst_16 {dimension_numbers = #tpu.dot_dimension_numbers<[1], [0], [0], [1], [0, 0, 1, 1], [], []>} : vector<8x8xf32>, vector<8x8xf32>, vector<8x8xf32> -> vector<8x8xf32>
    %c0_17 = arith.constant 0 : index
    %c0_18 = arith.constant 0 : index
    %38 = vector.load %arg28[%c0_17, %c0_18] : memref<16x32xf32, #tpu.memory_space<vmem>>, vector<8x8xf32>
    tpu.vector_store %arg28[%c0_17, %c0_18], %37 {strides = array<i32>} : memref<16x32xf32, #tpu.memory_space<vmem>>, vector<8x8xf32>,
    %39 = vector.extract_strided_slice %15 {offsets = [0, 8], sizes = [8, 8], strides = [1, 1]} : vector<8x32xf32> to vector<8x8xf32>
    %40 = vector.extract_strided_slice %16 {offsets = [0, 8], sizes = [8, 8], strides = [1, 1]} : vector<8x32xf32> to vector<8x8xf32>
    %41 = vector.extract_strided_slice %17 {offsets = [0, 8], sizes = [8, 8], strides = [1, 1]} : vector<8x32xf32> to vector<8x8xf32>
    %42 = tpu.transpose %40, [1, 0] : vector<8x8xf32> -> vector<8x8xf32>
    %cst_19 = arith.constant dense<0.000000e+00> : vector<8x8xf32>
    %43 = tpu.matmul %39, %42, %cst_19 {dimension_numbers = #tpu.dot_dimension_numbers<[1], [0], [0], [1], [0, 0, 1, 1], [], []>} : vector<8x8xf32>, vector<8x8xf32>, vector<8x8xf32> -> vector<8x8xf32>
    %cst_20 = arith.constant 0.353553385 : f32
    %44 = vector.broadcast %cst_20 : f32 to vector<8x8xf32>
    %45 = arith.mulf %43, %44 : vector<8x8xf32>
    %46 = arith.addf %45, %14 : vector<8x8xf32>
    %cst_21 = arith.constant dense<0xFF800000> : vector<8xf32>
    %47 = vector.multi_reduction <maximumf>, %46, %cst_21 [1] : vector<8x8xf32> to vector<8xf32>
    %48 = vector.shape_cast %47 : vector<8xf32> to vector<8x1xf32>
    %49 = vector.broadcast %48 : vector<8x1xf32> to vector<8x8xf32>
    %50 = arith.subf %46, %49 : vector<8x8xf32>
    %51 = math.exp %50 : vector<8x8xf32>
    %cst_22 = arith.constant dense<0.000000e+00> : vector<8xf32>
    %52 = vector.multi_reduction <add>, %51, %cst_22 [1] : vector<8x8xf32> to vector<8xf32>
    %53 = vector.shape_cast %52 : vector<8xf32> to vector<8x1xf32>
    %54 = tpu.reciprocal %53 {approx = true} : vector<8x1xf32> -> vector<8x1xf32>
    %55 = vector.broadcast %54 : vector<8x1xf32> to vector<8x8xf32>
    %56 = arith.mulf %51, %55 : vector<8x8xf32>
    %c0_23 = arith.constant 0 : index
    %c8 = arith.constant 8 : index
    %57 = vector.load %arg26[%c0_23, %c8] : memref<16x32xf32, #tpu.memory_space<vmem>>, vector<8x8xf32>
    tpu.vector_store %arg26[%c0_23, %c8], %56 {strides = array<i32>} : memref<16x32xf32, #tpu.memory_space<vmem>>, vector<8x8xf32>,
    %cst_24 = arith.constant dense<0.000000e+00> : vector<8x8xf32>
    %58 = tpu.matmul %56, %41, %cst_24 {dimension_numbers = #tpu.dot_dimension_numbers<[1], [0], [0], [1], [0, 0, 1, 1], [], []>} : vector<8x8xf32>, vector<8x8xf32>, vector<8x8xf32> -> vector<8x8xf32>
    %c0_25 = arith.constant 0 : index
    %c8_26 = arith.constant 8 : index
    %59 = vector.load %arg28[%c0_25, %c8_26] : memref<16x32xf32, #tpu.memory_space<vmem>>, vector<8x8xf32>
    tpu.vector_store %arg28[%c0_25, %c8_26], %58 {strides = array<i32>} : memref<16x32xf32, #tpu.memory_space<vmem>>, vector<8x8xf32>,
    %60 = vector.extract_strided_slice %15 {offsets = [0, 16], sizes = [8, 8], strides = [1, 1]} : vector<8x32xf32> to vector<8x8xf32>
    %61 = vector.extract_strided_slice %16 {offsets = [0, 16], sizes = [8, 8], strides = [1, 1]} : vector<8x32xf32> to vector<8x8xf32>
    %62 = vector.extract_strided_slice %17 {offsets = [0, 16], sizes = [8, 8], strides = [1, 1]} : vector<8x32xf32> to vector<8x8xf32>
    %63 = tpu.transpose %61, [1, 0] : vector<8x8xf32> -> vector<8x8xf32>
    %cst_27 = arith.constant dense<0.000000e+00> : vector<8x8xf32>
    %64 = tpu.matmul %60, %63, %cst_27 {dimension_numbers = #tpu.dot_dimension_numbers<[1], [0], [0], [1], [0, 0, 1, 1], [], []>} : vector<8x8xf32>, vector<8x8xf32>, vector<8x8xf32> -> vector<8x8xf32>
    %cst_28 = arith.constant 0.353553385 : f32
    %65 = vector.broadcast %cst_28 : f32 to vector<8x8xf32>
    %66 = arith.mulf %64, %65 : vector<8x8xf32>
    %67 = arith.addf %66, %14 : vector<8x8xf32>
    %cst_29 = arith.constant dense<0xFF800000> : vector<8xf32>
    %68 = vector.multi_reduction <maximumf>, %67, %cst_29 [1] : vector<8x8xf32> to vector<8xf32>
    %69 = vector.shape_cast %68 : vector<8xf32> to vector<8x1xf32>
    %70 = vector.broadcast %69 : vector<8x1xf32> to vector<8x8xf32>
    %71 = arith.subf %67, %70 : vector<8x8xf32>
    %72 = math.exp %71 : vector<8x8xf32>
    %cst_30 = arith.constant dense<0.000000e+00> : vector<8xf32>
    %73 = vector.multi_reduction <add>, %72, %cst_30 [1] : vector<8x8xf32> to vector<8xf32>
    %74 = vector.shape_cast %73 : vector<8xf32> to vector<8x1xf32>
    %75 = tpu.reciprocal %74 {approx = true} : vector<8x1xf32> -> vector<8x1xf32>
    %76 = vector.broadcast %75 : vector<8x1xf32> to vector<8x8xf32>
    %77 = arith.mulf %72, %76 : vector<8x8xf32>
    %c0_31 = arith.constant 0 : index
    %c16 = arith.constant 16 : index
    %78 = vector.load %arg26[%c0_31, %c16] : memref<16x32xf32, #tpu.memory_space<vmem>>, vector<8x8xf32>
    tpu.vector_store %arg26[%c0_31, %c16], %77 {strides = array<i32>} : memref<16x32xf32, #tpu.memory_space<vmem>>, vector<8x8xf32>,
    %cst_32 = arith.constant dense<0.000000e+00> : vector<8x8xf32>
    %79 = tpu.matmul %77, %62, %cst_32 {dimension_numbers = #tpu.dot_dimension_numbers<[1], [0], [0], [1], [0, 0, 1, 1], [], []>} : vector<8x8xf32>, vector<8x8xf32>, vector<8x8xf32> -> vector<8x8xf32>
    %c0_33 = arith.constant 0 : index
    %c16_34 = arith.constant 16 : index
    %80 = vector.load %arg28[%c0_33, %c16_34] : memref<16x32xf32, #tpu.memory_space<vmem>>, vector<8x8xf32>
    tpu.vector_store %arg28[%c0_33, %c16_34], %79 {strides = array<i32>} : memref<16x32xf32, #tpu.memory_space<vmem>>, vector<8x8xf32>,
    %81 = vector.extract_strided_slice %15 {offsets = [0, 24], sizes = [8, 8], strides = [1, 1]} : vector<8x32xf32> to vector<8x8xf32>
    %82 = vector.extract_strided_slice %16 {offsets = [0, 24], sizes = [8, 8], strides = [1, 1]} : vector<8x32xf32> to vector<8x8xf32>
    %83 = vector.extract_strided_slice %17 {offsets = [0, 24], sizes = [8, 8], strides = [1, 1]} : vector<8x32xf32> to vector<8x8xf32>
    %84 = tpu.transpose %82, [1, 0] : vector<8x8xf32> -> vector<8x8xf32>
    %cst_35 = arith.constant dense<0.000000e+00> : vector<8x8xf32>
    %85 = tpu.matmul %81, %84, %cst_35 {dimension_numbers = #tpu.dot_dimension_numbers<[1], [0], [0], [1], [0, 0, 1, 1], [], []>} : vector<8x8xf32>, vector<8x8xf32>, vector<8x8xf32> -> vector<8x8xf32>
    %cst_36 = arith.constant 0.353553385 : f32
    %86 = vector.broadcast %cst_36 : f32 to vector<8x8xf32>
    %87 = arith.mulf %85, %86 : vector<8x8xf32>
    %88 = arith.addf %87, %14 : vector<8x8xf32>
    %cst_37 = arith.constant dense<0xFF800000> : vector<8xf32>
    %89 = vector.multi_reduction <maximumf>, %88, %cst_37 [1] : vector<8x8xf32> to vector<8xf32>
    %90 = vector.shape_cast %89 : vector<8xf32> to vector<8x1xf32>
    %91 = vector.broadcast %90 : vector<8x1xf32> to vector<8x8xf32>
    %92 = arith.subf %88, %91 : vector<8x8xf32>
    %93 = math.exp %92 : vector<8x8xf32>
    %cst_38 = arith.constant dense<0.000000e+00> : vector<8xf32>
    %94 = vector.multi_reduction <add>, %93, %cst_38 [1] : vector<8x8xf32> to vector<8xf32>
    %95 = vector.shape_cast %94 : vector<8xf32> to vector<8x1xf32>
    %96 = tpu.reciprocal %95 {approx = true} : vector<8x1xf32> -> vector<8x1xf32>
    %97 = vector.broadcast %96 : vector<8x1xf32> to vector<8x8xf32>
    %98 = arith.mulf %93, %97 : vector<8x8xf32>
    %c0_39 = arith.constant 0 : index
    %c24 = arith.constant 24 : index
    %99 = vector.load %arg26[%c0_39, %c24] : memref<16x32xf32, #tpu.memory_space<vmem>>, vector<8x8xf32>
    tpu.vector_store %arg26[%c0_39, %c24], %98 {strides = array<i32>} : memref<16x32xf32, #tpu.memory_space<vmem>>, vector<8x8xf32>,
    %cst_40 = arith.constant dense<0.000000e+00> : vector<8x8xf32>
    %100 = tpu.matmul %98, %83, %cst_40 {dimension_numbers = #tpu.dot_dimension_numbers<[1], [0], [0], [1], [0, 0, 1, 1], [], []>} : vector<8x8xf32>, vector<8x8xf32>, vector<8x8xf32> -> vector<8x8xf32>
    %c0_41 = arith.constant 0 : index
    %c24_42 = arith.constant 24 : index
    %101 = vector.load %arg28[%c0_41, %c24_42] : memref<16x32xf32, #tpu.memory_space<vmem>>, vector<8x8xf32>
    tpu.vector_store %arg28[%c0_41, %c24_42], %100 {strides = array<i32>} : memref<16x32xf32, #tpu.memory_space<vmem>>, vector<8x8xf32>,
    %102 = vector.extract_strided_slice %12 {offsets = [1, 0, 0], sizes = [1, 8, 8], strides = [1, 1, 1]} : vector<2x8x8xf32> to vector<1x8x8xf32>
    %103 = vector.shape_cast %102 : vector<1x8x8xf32> to vector<8x8xf32>
    %104 = vector.extract_strided_slice %9 {offsets = [8, 0], sizes = [8, 32], strides = [1, 1]} : vector<16x32xf32> to vector<8x32xf32>
    %105 = vector.extract_strided_slice %10 {offsets = [8, 0], sizes = [8, 32], strides = [1, 1]} : vector<16x32xf32> to vector<8x32xf32>
    %106 = vector.extract_strided_slice %11 {offsets = [8, 0], sizes = [8, 32], strides = [1, 1]} : vector<16x32xf32> to vector<8x32xf32>
    %107 = vector.extract_strided_slice %104 {offsets = [0, 0], sizes = [8, 8], strides = [1, 1]} : vector<8x32xf32> to vector<8x8xf32>
    %108 = vector.extract_strided_slice %105 {offsets = [0, 0], sizes = [8, 8], strides = [1, 1]} : vector<8x32xf32> to vector<8x8xf32>
    %109 = vector.extract_strided_slice %106 {offsets = [0, 0], sizes = [8, 8], strides = [1, 1]} : vector<8x32xf32> to vector<8x8xf32>
    %110 = tpu.transpose %108, [1, 0] : vector<8x8xf32> -> vector<8x8xf32>
    %cst_43 = arith.constant dense<0.000000e+00> : vector<8x8xf32>
    %111 = tpu.matmul %107, %110, %cst_43 {dimension_numbers = #tpu.dot_dimension_numbers<[1], [0], [0], [1], [0, 0, 1, 1], [], []>} : vector<8x8xf32>, vector<8x8xf32>, vector<8x8xf32> -> vector<8x8xf32>
    %cst_44 = arith.constant 0.353553385 : f32
    %112 = vector.broadcast %cst_44 : f32 to vector<8x8xf32>
    %113 = arith.mulf %111, %112 : vector<8x8xf32>
    %114 = arith.addf %113, %103 : vector<8x8xf32>
    %cst_45 = arith.constant dense<0xFF800000> : vector<8xf32>
    %115 = vector.multi_reduction <maximumf>, %114, %cst_45 [1] : vector<8x8xf32> to vector<8xf32>
    %116 = vector.shape_cast %115 : vector<8xf32> to vector<8x1xf32>
    %117 = vector.broadcast %116 : vector<8x1xf32> to vector<8x8xf32>
    %118 = arith.subf %114, %117 : vector<8x8xf32>
    %119 = math.exp %118 : vector<8x8xf32>
    %cst_46 = arith.constant dense<0.000000e+00> : vector<8xf32>
    %120 = vector.multi_reduction <add>, %119, %cst_46 [1] : vector<8x8xf32> to vector<8xf32>
    %121 = vector.shape_cast %120 : vector<8xf32> to vector<8x1xf32>
    %122 = tpu.reciprocal %121 {approx = true} : vector<8x1xf32> -> vector<8x1xf32>
    %123 = vector.broadcast %122 : vector<8x1xf32> to vector<8x8xf32>
    %124 = arith.mulf %119, %123 : vector<8x8xf32>
    %c8_47 = arith.constant 8 : index
    %c0_48 = arith.constant 0 : index
    %125 = vector.load %arg26[%c8_47, %c0_48] : memref<16x32xf32, #tpu.memory_space<vmem>>, vector<8x8xf32>
    tpu.vector_store %arg26[%c8_47, %c0_48], %124 {strides = array<i32>} : memref<16x32xf32, #tpu.memory_space<vmem>>, vector<8x8xf32>,
    %cst_49 = arith.constant dense<0.000000e+00> : vector<8x8xf32>
    %126 = tpu.matmul %124, %109, %cst_49 {dimension_numbers = #tpu.dot_dimension_numbers<[1], [0], [0], [1], [0, 0, 1, 1], [], []>} : vector<8x8xf32>, vector<8x8xf32>, vector<8x8xf32> -> vector<8x8xf32>
    %c8_50 = arith.constant 8 : index
    %c0_51 = arith.constant 0 : index
    %127 = vector.load %arg28[%c8_50, %c0_51] : memref<16x32xf32, #tpu.memory_space<vmem>>, vector<8x8xf32>
    tpu.vector_store %arg28[%c8_50, %c0_51], %126 {strides = array<i32>} : memref<16x32xf32, #tpu.memory_space<vmem>>, vector<8x8xf32>,
    %128 = vector.extract_strided_slice %104 {offsets = [0, 8], sizes = [8, 8], strides = [1, 1]} : vector<8x32xf32> to vector<8x8xf32>
    %129 = vector.extract_strided_slice %105 {offsets = [0, 8], sizes = [8, 8], strides = [1, 1]} : vector<8x32xf32> to vector<8x8xf32>
    %130 = vector.extract_strided_slice %106 {offsets = [0, 8], sizes = [8, 8], strides = [1, 1]} : vector<8x32xf32> to vector<8x8xf32>
    %131 = tpu.transpose %129, [1, 0] : vector<8x8xf32> -> vector<8x8xf32>
    %cst_52 = arith.constant dense<0.000000e+00> : vector<8x8xf32>
    %132 = tpu.matmul %128, %131, %cst_52 {dimension_numbers = #tpu.dot_dimension_numbers<[1], [0], [0], [1], [0, 0, 1, 1], [], []>} : vector<8x8xf32>, vector<8x8xf32>, vector<8x8xf32> -> vector<8x8xf32>
    %cst_53 = arith.constant 0.353553385 : f32
    %133 = vector.broadcast %cst_53 : f32 to vector<8x8xf32>
    %134 = arith.mulf %132, %133 : vector<8x8xf32>
    %135 = arith.addf %134, %103 : vector<8x8xf32>
    %cst_54 = arith.constant dense<0xFF800000> : vector<8xf32>
    %136 = vector.multi_reduction <maximumf>, %135, %cst_54 [1] : vector<8x8xf32> to vector<8xf32>
    %137 = vector.shape_cast %136 : vector<8xf32> to vector<8x1xf32>
    %138 = vector.broadcast %137 : vector<8x1xf32> to vector<8x8xf32>
    %139 = arith.subf %135, %138 : vector<8x8xf32>
    %140 = math.exp %139 : vector<8x8xf32>
    %cst_55 = arith.constant dense<0.000000e+00> : vector<8xf32>
    %141 = vector.multi_reduction <add>, %140, %cst_55 [1] : vector<8x8xf32> to vector<8xf32>
    %142 = vector.shape_cast %141 : vector<8xf32> to vector<8x1xf32>
    %143 = tpu.reciprocal %142 {approx = true} : vector<8x1xf32> -> vector<8x1xf32>
    %144 = vector.broadcast %143 : vector<8x1xf32> to vector<8x8xf32>
    %145 = arith.mulf %140, %144 : vector<8x8xf32>
    %c8_56 = arith.constant 8 : index
    %c8_57 = arith.constant 8 : index
    %146 = vector.load %arg26[%c8_56, %c8_57] : memref<16x32xf32, #tpu.memory_space<vmem>>, vector<8x8xf32>
    tpu.vector_store %arg26[%c8_56, %c8_57], %145 {strides = array<i32>} : memref<16x32xf32, #tpu.memory_space<vmem>>, vector<8x8xf32>,
    %cst_58 = arith.constant dense<0.000000e+00> : vector<8x8xf32>
    %147 = tpu.matmul %145, %130, %cst_58 {dimension_numbers = #tpu.dot_dimension_numbers<[1], [0], [0], [1], [0, 0, 1, 1], [], []>} : vector<8x8xf32>, vector<8x8xf32>, vector<8x8xf32> -> vector<8x8xf32>
    %c8_59 = arith.constant 8 : index
    %c8_60 = arith.constant 8 : index
    %148 = vector.load %arg28[%c8_59, %c8_60] : memref<16x32xf32, #tpu.memory_space<vmem>>, vector<8x8xf32>
    tpu.vector_store %arg28[%c8_59, %c8_60], %147 {strides = array<i32>} : memref<16x32xf32, #tpu.memory_space<vmem>>, vector<8x8xf32>,
    %149 = vector.extract_strided_slice %104 {offsets = [0, 16], sizes = [8, 8], strides = [1, 1]} : vector<8x32xf32> to vector<8x8xf32>
    %150 = vector.extract_strided_slice %105 {offsets = [0, 16], sizes = [8, 8], strides = [1, 1]} : vector<8x32xf32> to vector<8x8xf32>
    %151 = vector.extract_strided_slice %106 {offsets = [0, 16], sizes = [8, 8], strides = [1, 1]} : vector<8x32xf32> to vector<8x8xf32>
    %152 = tpu.transpose %150, [1, 0] : vector<8x8xf32> -> vector<8x8xf32>
    %cst_61 = arith.constant dense<0.000000e+00> : vector<8x8xf32>
    %153 = tpu.matmul %149, %152, %cst_61 {dimension_numbers = #tpu.dot_dimension_numbers<[1], [0], [0], [1], [0, 0, 1, 1], [], []>} : vector<8x8xf32>, vector<8x8xf32>, vector<8x8xf32> -> vector<8x8xf32>
    %cst_62 = arith.constant 0.353553385 : f32
    %154 = vector.broadcast %cst_62 : f32 to vector<8x8xf32>
    %155 = arith.mulf %153, %154 : vector<8x8xf32>
    %156 = arith.addf %155, %103 : vector<8x8xf32>
    %cst_63 = arith.constant dense<0xFF800000> : vector<8xf32>
    %157 = vector.multi_reduction <maximumf>, %156, %cst_63 [1] : vector<8x8xf32> to vector<8xf32>
    %158 = vector.shape_cast %157 : vector<8xf32> to vector<8x1xf32>
    %159 = vector.broadcast %158 : vector<8x1xf32> to vector<8x8xf32>
    %160 = arith.subf %156, %159 : vector<8x8xf32>
    %161 = math.exp %160 : vector<8x8xf32>
    %cst_64 = arith.constant dense<0.000000e+00> : vector<8xf32>
    %162 = vector.multi_reduction <add>, %161, %cst_64 [1] : vector<8x8xf32> to vector<8xf32>
    %163 = vector.shape_cast %162 : vector<8xf32> to vector<8x1xf32>
    %164 = tpu.reciprocal %163 {approx = true} : vector<8x1xf32> -> vector<8x1xf32>
    %165 = vector.broadcast %164 : vector<8x1xf32> to vector<8x8xf32>
    %166 = arith.mulf %161, %165 : vector<8x8xf32>
    %c8_65 = arith.constant 8 : index
    %c16_66 = arith.constant 16 : index
    %167 = vector.load %arg26[%c8_65, %c16_66] : memref<16x32xf32, #tpu.memory_space<vmem>>, vector<8x8xf32>
    tpu.vector_store %arg26[%c8_65, %c16_66], %166 {strides = array<i32>} : memref<16x32xf32, #tpu.memory_space<vmem>>, vector<8x8xf32>,
    %cst_67 = arith.constant dense<0.000000e+00> : vector<8x8xf32>
    %168 = tpu.matmul %166, %151, %cst_67 {dimension_numbers = #tpu.dot_dimension_numbers<[1], [0], [0], [1], [0, 0, 1, 1], [], []>} : vector<8x8xf32>, vector<8x8xf32>, vector<8x8xf32> -> vector<8x8xf32>
    %c8_68 = arith.constant 8 : index
    %c16_69 = arith.constant 16 : index
    %169 = vector.load %arg28[%c8_68, %c16_69] : memref<16x32xf32, #tpu.memory_space<vmem>>, vector<8x8xf32>
    tpu.vector_store %arg28[%c8_68, %c16_69], %168 {strides = array<i32>} : memref<16x32xf32, #tpu.memory_space<vmem>>, vector<8x8xf32>,
    %170 = vector.extract_strided_slice %104 {offsets = [0, 24], sizes = [8, 8], strides = [1, 1]} : vector<8x32xf32> to vector<8x8xf32>
    %171 = vector.extract_strided_slice %105 {offsets = [0, 24], sizes = [8, 8], strides = [1, 1]} : vector<8x32xf32> to vector<8x8xf32>
    %172 = vector.extract_strided_slice %106 {offsets = [0, 24], sizes = [8, 8], strides = [1, 1]} : vector<8x32xf32> to vector<8x8xf32>
    %173 = tpu.transpose %171, [1, 0] : vector<8x8xf32> -> vector<8x8xf32>
    %cst_70 = arith.constant dense<0.000000e+00> : vector<8x8xf32>
    %174 = tpu.matmul %170, %173, %cst_70 {dimension_numbers = #tpu.dot_dimension_numbers<[1], [0], [0], [1], [0, 0, 1, 1], [], []>} : vector<8x8xf32>, vector<8x8xf32>, vector<8x8xf32> -> vector<8x8xf32>
    %cst_71 = arith.constant 0.353553385 : f32
    %175 = vector.broadcast %cst_71 : f32 to vector<8x8xf32>
    %176 = arith.mulf %174, %175 : vector<8x8xf32>
    %177 = arith.addf %176, %103 : vector<8x8xf32>
    %cst_72 = arith.constant dense<0xFF800000> : vector<8xf32>
    %178 = vector.multi_reduction <maximumf>, %177, %cst_72 [1] : vector<8x8xf32> to vector<8xf32>
    %179 = vector.shape_cast %178 : vector<8xf32> to vector<8x1xf32>
    %180 = vector.broadcast %179 : vector<8x1xf32> to vector<8x8xf32>
    %181 = arith.subf %177, %180 : vector<8x8xf32>
    %182 = math.exp %181 : vector<8x8xf32>
    %cst_73 = arith.constant dense<0.000000e+00> : vector<8xf32>
    %183 = vector.multi_reduction <add>, %182, %cst_73 [1] : vector<8x8xf32> to vector<8xf32>
    %184 = vector.shape_cast %183 : vector<8xf32> to vector<8x1xf32>
    %185 = tpu.reciprocal %184 {approx = true} : vector<8x1xf32> -> vector<8x1xf32>
    %186 = vector.broadcast %185 : vector<8x1xf32> to vector<8x8xf32>
    %187 = arith.mulf %182, %186 : vector<8x8xf32>
    %c8_74 = arith.constant 8 : index
    %c24_75 = arith.constant 24 : index
    %188 = vector.load %arg26[%c8_74, %c24_75] : memref<16x32xf32, #tpu.memory_space<vmem>>, vector<8x8xf32>
    tpu.vector_store %arg26[%c8_74, %c24_75], %187 {strides = array<i32>} : memref<16x32xf32, #tpu.memory_space<vmem>>, vector<8x8xf32>,
    %cst_76 = arith.constant dense<0.000000e+00> : vector<8x8xf32>
    %189 = tpu.matmul %187, %172, %cst_76 {dimension_numbers = #tpu.dot_dimension_numbers<[1], [0], [0], [1], [0, 0, 1, 1], [], []>} : vector<8x8xf32>, vector<8x8xf32>, vector<8x8xf32> -> vector<8x8xf32>
    %c8_77 = arith.constant 8 : index
    %c24_78 = arith.constant 24 : index
    %190 = vector.load %arg28[%c8_77, %c24_78] : memref<16x32xf32, #tpu.memory_space<vmem>>, vector<8x8xf32>
    tpu.vector_store %arg28[%c8_77, %c24_78], %189 {strides = array<i32>} : memref<16x32xf32, #tpu.memory_space<vmem>>, vector<8x8xf32>,
    %c0_79 = arith.constant 0 : index
    %c0_80 = arith.constant 0 : index
    %191 = vector.load %arg28[%c0_79, %c0_80] : memref<16x32xf32, #tpu.memory_space<vmem>>, vector<16x32xf32>
    %c0_81 = arith.constant 0 : index
    %c0_82 = arith.constant 0 : index
    %192 = vector.load %arg7[%c0_81, %c0_82] : memref<32x32xf32, #tpu.memory_space<vmem>>, vector<32x32xf32>
    %cst_83 = arith.constant dense<0.000000e+00> : vector<16x32xf32>
    %193 = tpu.matmul %191, %192, %cst_83 {dimension_numbers = #tpu.dot_dimension_numbers<[1], [0], [0], [1], [0, 0, 1, 1], [], []>} : vector<16x32xf32>, vector<32x32xf32>, vector<16x32xf32> -> vector<16x32xf32>
    %c0_84 = arith.constant 0 : index
    %c0_85 = arith.constant 0 : index
    %194 = vector.load %arg8[%c0_84, %c0_85] : memref<1x32xf32, #tpu.memory_space<vmem>>, vector<1x32xf32>
    %195 = vector.shape_cast %194 : vector<1x32xf32> to vector<32xf32>
    %196 = vector.shape_cast %195 : vector<32xf32> to vector<1x32xf32>
    %197 = vector.broadcast %196 : vector<1x32xf32> to vector<16x32xf32>
    %198 = arith.addf %193, %197 : vector<16x32xf32>
    %199 = arith.addf %198, %0 : vector<16x32xf32>
    %c0_86 = arith.constant 0 : index
    %c0_87 = arith.constant 0 : index
    %200 = vector.load %arg9[%c0_86, %c0_87] : memref<1x32xf32, #tpu.memory_space<vmem>>, vector<1x32xf32>
    %201 = vector.shape_cast %200 : vector<1x32xf32> to vector<32xf32>
    %c0_88 = arith.constant 0 : index
    %c0_89 = arith.constant 0 : index
    %202 = vector.load %arg10[%c0_88, %c0_89] : memref<1x32xf32, #tpu.memory_space<vmem>>, vector<1x32xf32>
    %203 = vector.shape_cast %202 : vector<1x32xf32> to vector<32xf32>
    %cst_90 = arith.constant dense<0.000000e+00> : vector<16xf32>
    %204 = vector.multi_reduction <add>, %199, %cst_90 [1] : vector<16x32xf32> to vector<16xf32>
    %205 = vector.shape_cast %204 : vector<16xf32> to vector<16x1xf32>
    %cst_91 = arith.constant 3.200000e+01 : f32
    %206 = vector.broadcast %cst_91 : f32 to vector<16x1xf32>
    %207 = arith.divf %205, %206 : vector<16x1xf32>
    %208 = vector.broadcast %207 : vector<16x1xf32> to vector<16x32xf32>
    %209 = arith.subf %199, %208 : vector<16x32xf32>
    %210 = arith.mulf %209, %209 : vector<16x32xf32>
    %cst_92 = arith.constant dense<0.000000e+00> : vector<16xf32>
    %211 = vector.multi_reduction <add>, %210, %cst_92 [1] : vector<16x32xf32> to vector<16xf32>
    %212 = vector.shape_cast %211 : vector<16xf32> to vector<16x1xf32>
    %cst_93 = arith.constant 3.200000e+01 : f32
    %213 = vector.broadcast %cst_93 : f32 to vector<16x1xf32>
    %214 = arith.divf %212, %213 : vector<16x1xf32>
    %215 = vector.broadcast %207 : vector<16x1xf32> to vector<16x32xf32>
    %216 = arith.subf %199, %215 : vector<16x32xf32>
    %cst_94 = arith.constant 9.99999974E-6 : f32
    %217 = vector.broadcast %cst_94 : f32 to vector<16x1xf32>
    %218 = arith.addf %214, %217 : vector<16x1xf32>
    %219 = math.rsqrt %218 : vector<16x1xf32>
    %220 = vector.broadcast %219 : vector<16x1xf32> to vector<16x32xf32>
    %221 = arith.mulf %216, %220 : vector<16x32xf32>
    %222 = vector.shape_cast %201 : vector<32xf32> to vector<1x32xf32>
    %223 = vector.broadcast %222 : vector<1x32xf32> to vector<16x32xf32>
    %224 = arith.mulf %221, %223 : vector<16x32xf32>
    %225 = vector.shape_cast %203 : vector<32xf32> to vector<1x32xf32>
    %226 = vector.broadcast %225 : vector<1x32xf32> to vector<16x32xf32>
    %227 = arith.addf %224, %226 : vector<16x32xf32>
    %c0_95 = arith.constant 0 : index
    %c0_96 = arith.constant 0 : index
    %228 = vector.load %arg11[%c0_95, %c0_96] : memref<32x32xf32, #tpu.memory_space<vmem>>, vector<32x32xf32>
    %cst_97 = arith.constant dense<0.000000e+00> : vector<16x32xf32>
    %229 = tpu.matmul %227, %228, %cst_97 {dimension_numbers = #tpu.dot_dimension_numbers<[1], [0], [0], [1], [0, 0, 1, 1], [], []>} : vector<16x32xf32>, vector<32x32xf32>, vector<16x32xf32> -> vector<16x32xf32>
    %c0_98 = arith.constant 0 : index
    %c0_99 = arith.constant 0 : index
    %230 = vector.load %arg12[%c0_98, %c0_99] : memref<1x32xf32, #tpu.memory_space<vmem>>, vector<1x32xf32>
    %231 = vector.shape_cast %230 : vector<1x32xf32> to vector<32xf32>
    %232 = vector.shape_cast %231 : vector<32xf32> to vector<1x32xf32>
    %233 = vector.broadcast %232 : vector<1x32xf32> to vector<16x32xf32>
    %234 = arith.addf %229, %233 : vector<16x32xf32>
    %c0_100 = arith.constant 0 : index
    %c0_101 = arith.constant 0 : index
    %235 = vector.load %arg13[%c0_100, %c0_101] : memref<32x64xf32, #tpu.memory_space<vmem>>, vector<32x64xf32>
    %cst_102 = arith.constant dense<0.000000e+00> : vector<16x64xf32>
    %236 = tpu.matmul %1, %235, %cst_102 {dimension_numbers = #tpu.dot_dimension_numbers<[1], [0], [0], [1], [0, 0, 1, 1], [], []>} : vector<16x32xf32>, vector<32x64xf32>, vector<16x64xf32> -> vector<16x64xf32>
    %c0_103 = arith.constant 0 : index
    %c0_104 = arith.constant 0 : index
    %237 = vector.load %arg14[%c0_103, %c0_104] : memref<1x64xf32, #tpu.memory_space<vmem>>, vector<1x64xf32>
    %238 = vector.shape_cast %237 : vector<1x64xf32> to vector<64xf32>
    %239 = vector.shape_cast %238 : vector<64xf32> to vector<1x64xf32>
    %240 = vector.broadcast %239 : vector<1x64xf32> to vector<16x64xf32>
    %241 = arith.addf %236, %240 : vector<16x64xf32>
    %242 = vector.extract_strided_slice %241 {offsets = [0, 0], sizes = [16, 32], strides = [1, 1]} : vector<16x64xf32> to vector<16x32xf32>
    %243 = vector.extract_strided_slice %241 {offsets = [0, 32], sizes = [16, 32], strides = [1, 1]} : vector<16x64xf32> to vector<16x32xf32>
    %c0_105 = arith.constant 0 : index
    %c0_106 = arith.constant 0 : index
    %c0_107 = arith.constant 0 : index
    %244 = vector.load %arg4[%c0_105, %c0_106, %c0_107] : memref<2x8x8xf32, #tpu.memory_space<vmem>>, vector<2x8x8xf32>
    %245 = vector.extract_strided_slice %244 {offsets = [0, 0, 0], sizes = [1, 8, 8], strides = [1, 1, 1]} : vector<2x8x8xf32> to vector<1x8x8xf32>
    %246 = vector.shape_cast %245 : vector<1x8x8xf32> to vector<8x8xf32>
    %247 = vector.extract_strided_slice %234 {offsets = [0, 0], sizes = [8, 32], strides = [1, 1]} : vector<16x32xf32> to vector<8x32xf32>
    %248 = vector.extract_strided_slice %242 {offsets = [0, 0], sizes = [8, 32], strides = [1, 1]} : vector<16x32xf32> to vector<8x32xf32>
    %249 = vector.extract_strided_slice %243 {offsets = [0, 0], sizes = [8, 32], strides = [1, 1]} : vector<16x32xf32> to vector<8x32xf32>
    %250 = vector.extract_strided_slice %247 {offsets = [0, 0], sizes = [8, 8], strides = [1, 1]} : vector<8x32xf32> to vector<8x8xf32>
    %251 = vector.extract_strided_slice %248 {offsets = [0, 0], sizes = [8, 8], strides = [1, 1]} : vector<8x32xf32> to vector<8x8xf32>
    %252 = vector.extract_strided_slice %249 {offsets = [0, 0], sizes = [8, 8], strides = [1, 1]} : vector<8x32xf32> to vector<8x8xf32>
    %253 = tpu.transpose %251, [1, 0] : vector<8x8xf32> -> vector<8x8xf32>
    %cst_108 = arith.constant dense<0.000000e+00> : vector<8x8xf32>
    %254 = tpu.matmul %250, %253, %cst_108 {dimension_numbers = #tpu.dot_dimension_numbers<[1], [0], [0], [1], [0, 0, 1, 1], [], []>} : vector<8x8xf32>, vector<8x8xf32>, vector<8x8xf32> -> vector<8x8xf32>
    %cst_109 = arith.constant 0.353553385 : f32
    %255 = vector.broadcast %cst_109 : f32 to vector<8x8xf32>
    %256 = arith.mulf %254, %255 : vector<8x8xf32>
    %257 = arith.addf %256, %246 : vector<8x8xf32>
    %cst_110 = arith.constant dense<0xFF800000> : vector<8xf32>
    %258 = vector.multi_reduction <maximumf>, %257, %cst_110 [1] : vector<8x8xf32> to vector<8xf32>
    %259 = vector.shape_cast %258 : vector<8xf32> to vector<8x1xf32>
    %260 = vector.broadcast %259 : vector<8x1xf32> to vector<8x8xf32>
    %261 = arith.subf %257, %260 : vector<8x8xf32>
    %262 = math.exp %261 : vector<8x8xf32>
    %cst_111 = arith.constant dense<0.000000e+00> : vector<8xf32>
    %263 = vector.multi_reduction <add>, %262, %cst_111 [1] : vector<8x8xf32> to vector<8xf32>
    %264 = vector.shape_cast %263 : vector<8xf32> to vector<8x1xf32>
    %265 = tpu.reciprocal %264 {approx = true} : vector<8x1xf32> -> vector<8x1xf32>
    %266 = vector.broadcast %265 : vector<8x1xf32> to vector<8x8xf32>
    %267 = arith.mulf %262, %266 : vector<8x8xf32>
    %c0_112 = arith.constant 0 : index
    %c0_113 = arith.constant 0 : index
    %268 = vector.load %arg27[%c0_112, %c0_113] : memref<16x32xf32, #tpu.memory_space<vmem>>, vector<8x8xf32>
    tpu.vector_store %arg27[%c0_112, %c0_113], %267 {strides = array<i32>} : memref<16x32xf32, #tpu.memory_space<vmem>>, vector<8x8xf32>,
    %cst_114 = arith.constant dense<0.000000e+00> : vector<8x8xf32>
    %269 = tpu.matmul %267, %252, %cst_114 {dimension_numbers = #tpu.dot_dimension_numbers<[1], [0], [0], [1], [0, 0, 1, 1], [], []>} : vector<8x8xf32>, vector<8x8xf32>, vector<8x8xf32> -> vector<8x8xf32>
    %c0_115 = arith.constant 0 : index
    %c0_116 = arith.constant 0 : index
    %270 = vector.load %arg28[%c0_115, %c0_116] : memref<16x32xf32, #tpu.memory_space<vmem>>, vector<8x8xf32>
    tpu.vector_store %arg28[%c0_115, %c0_116], %269 {strides = array<i32>} : memref<16x32xf32, #tpu.memory_space<vmem>>, vector<8x8xf32>,
    %271 = vector.extract_strided_slice %247 {offsets = [0, 8], sizes = [8, 8], strides = [1, 1]} : vector<8x32xf32> to vector<8x8xf32>
    %272 = vector.extract_strided_slice %248 {offsets = [0, 8], sizes = [8, 8], strides = [1, 1]} : vector<8x32xf32> to vector<8x8xf32>
    %273 = vector.extract_strided_slice %249 {offsets = [0, 8], sizes = [8, 8], strides = [1, 1]} : vector<8x32xf32> to vector<8x8xf32>
    %274 = tpu.transpose %272, [1, 0] : vector<8x8xf32> -> vector<8x8xf32>
    %cst_117 = arith.constant dense<0.000000e+00> : vector<8x8xf32>
    %275 = tpu.matmul %271, %274, %cst_117 {dimension_numbers = #tpu.dot_dimension_numbers<[1], [0], [0], [1], [0, 0, 1, 1], [], []>} : vector<8x8xf32>, vector<8x8xf32>, vector<8x8xf32> -> vector<8x8xf32>
    %cst_118 = arith.constant 0.353553385 : f32
    %276 = vector.broadcast %cst_118 : f32 to vector<8x8xf32>
    %277 = arith.mulf %275, %276 : vector<8x8xf32>
    %278 = arith.addf %277, %246 : vector<8x8xf32>
    %cst_119 = arith.constant dense<0xFF800000> : vector<8xf32>
    %279 = vector.multi_reduction <maximumf>, %278, %cst_119 [1] : vector<8x8xf32> to vector<8xf32>
    %280 = vector.shape_cast %279 : vector<8xf32> to vector<8x1xf32>
    %281 = vector.broadcast %280 : vector<8x1xf32> to vector<8x8xf32>
    %282 = arith.subf %278, %281 : vector<8x8xf32>
    %283 = math.exp %282 : vector<8x8xf32>
    %cst_120 = arith.constant dense<0.000000e+00> : vector<8xf32>
    %284 = vector.multi_reduction <add>, %283, %cst_120 [1] : vector<8x8xf32> to vector<8xf32>
    %285 = vector.shape_cast %284 : vector<8xf32> to vector<8x1xf32>
    %286 = tpu.reciprocal %285 {approx = true} : vector<8x1xf32> -> vector<8x1xf32>
    %287 = vector.broadcast %286 : vector<8x1xf32> to vector<8x8xf32>
    %288 = arith.mulf %283, %287 : vector<8x8xf32>
    %c0_121 = arith.constant 0 : index
    %c8_122 = arith.constant 8 : index
    %289 = vector.load %arg27[%c0_121, %c8_122] : memref<16x32xf32, #tpu.memory_space<vmem>>, vector<8x8xf32>
    tpu.vector_store %arg27[%c0_121, %c8_122], %288 {strides = array<i32>} : memref<16x32xf32, #tpu.memory_space<vmem>>, vector<8x8xf32>,
    %cst_123 = arith.constant dense<0.000000e+00> : vector<8x8xf32>
    %290 = tpu.matmul %288, %273, %cst_123 {dimension_numbers = #tpu.dot_dimension_numbers<[1], [0], [0], [1], [0, 0, 1, 1], [], []>} : vector<8x8xf32>, vector<8x8xf32>, vector<8x8xf32> -> vector<8x8xf32>
    %c0_124 = arith.constant 0 : index
    %c8_125 = arith.constant 8 : index
    %291 = vector.load %arg28[%c0_124, %c8_125] : memref<16x32xf32, #tpu.memory_space<vmem>>, vector<8x8xf32>
    tpu.vector_store %arg28[%c0_124, %c8_125], %290 {strides = array<i32>} : memref<16x32xf32, #tpu.memory_space<vmem>>, vector<8x8xf32>,
    %292 = vector.extract_strided_slice %247 {offsets = [0, 16], sizes = [8, 8], strides = [1, 1]} : vector<8x32xf32> to vector<8x8xf32>
    %293 = vector.extract_strided_slice %248 {offsets = [0, 16], sizes = [8, 8], strides = [1, 1]} : vector<8x32xf32> to vector<8x8xf32>
    %294 = vector.extract_strided_slice %249 {offsets = [0, 16], sizes = [8, 8], strides = [1, 1]} : vector<8x32xf32> to vector<8x8xf32>
    %295 = tpu.transpose %293, [1, 0] : vector<8x8xf32> -> vector<8x8xf32>
    %cst_126 = arith.constant dense<0.000000e+00> : vector<8x8xf32>
    %296 = tpu.matmul %292, %295, %cst_126 {dimension_numbers = #tpu.dot_dimension_numbers<[1], [0], [0], [1], [0, 0, 1, 1], [], []>} : vector<8x8xf32>, vector<8x8xf32>, vector<8x8xf32> -> vector<8x8xf32>
    %cst_127 = arith.constant 0.353553385 : f32
    %297 = vector.broadcast %cst_127 : f32 to vector<8x8xf32>
    %298 = arith.mulf %296, %297 : vector<8x8xf32>
    %299 = arith.addf %298, %246 : vector<8x8xf32>
    %cst_128 = arith.constant dense<0xFF800000> : vector<8xf32>
    %300 = vector.multi_reduction <maximumf>, %299, %cst_128 [1] : vector<8x8xf32> to vector<8xf32>
    %301 = vector.shape_cast %300 : vector<8xf32> to vector<8x1xf32>
    %302 = vector.broadcast %301 : vector<8x1xf32> to vector<8x8xf32>
    %303 = arith.subf %299, %302 : vector<8x8xf32>
    %304 = math.exp %303 : vector<8x8xf32>
    %cst_129 = arith.constant dense<0.000000e+00> : vector<8xf32>
    %305 = vector.multi_reduction <add>, %304, %cst_129 [1] : vector<8x8xf32> to vector<8xf32>
    %306 = vector.shape_cast %305 : vector<8xf32> to vector<8x1xf32>
    %307 = tpu.reciprocal %306 {approx = true} : vector<8x1xf32> -> vector<8x1xf32>
    %308 = vector.broadcast %307 : vector<8x1xf32> to vector<8x8xf32>
    %309 = arith.mulf %304, %308 : vector<8x8xf32>
    %c0_130 = arith.constant 0 : index
    %c16_131 = arith.constant 16 : index
    %310 = vector.load %arg27[%c0_130, %c16_131] : memref<16x32xf32, #tpu.memory_space<vmem>>, vector<8x8xf32>
    tpu.vector_store %arg27[%c0_130, %c16_131], %309 {strides = array<i32>} : memref<16x32xf32, #tpu.memory_space<vmem>>, vector<8x8xf32>,
    %cst_132 = arith.constant dense<0.000000e+00> : vector<8x8xf32>
    %311 = tpu.matmul %309, %294, %cst_132 {dimension_numbers = #tpu.dot_dimension_numbers<[1], [0], [0], [1], [0, 0, 1, 1], [], []>} : vector<8x8xf32>, vector<8x8xf32>, vector<8x8xf32> -> vector<8x8xf32>
    %c0_133 = arith.constant 0 : index
    %c16_134 = arith.constant 16 : index
    %312 = vector.load %arg28[%c0_133, %c16_134] : memref<16x32xf32, #tpu.memory_space<vmem>>, vector<8x8xf32>
    tpu.vector_store %arg28[%c0_133, %c16_134], %311 {strides = array<i32>} : memref<16x32xf32, #tpu.memory_space<vmem>>, vector<8x8xf32>,
    %313 = vector.extract_strided_slice %247 {offsets = [0, 24], sizes = [8, 8], strides = [1, 1]} : vector<8x32xf32> to vector<8x8xf32>
    %314 = vector.extract_strided_slice %248 {offsets = [0, 24], sizes = [8, 8], strides = [1, 1]} : vector<8x32xf32> to vector<8x8xf32>
    %315 = vector.extract_strided_slice %249 {offsets = [0, 24], sizes = [8, 8], strides = [1, 1]} : vector<8x32xf32> to vector<8x8xf32>
    %316 = tpu.transpose %314, [1, 0] : vector<8x8xf32> -> vector<8x8xf32>
    %cst_135 = arith.constant dense<0.000000e+00> : vector<8x8xf32>
    %317 = tpu.matmul %313, %316, %cst_135 {dimension_numbers = #tpu.dot_dimension_numbers<[1], [0], [0], [1], [0, 0, 1, 1], [], []>} : vector<8x8xf32>, vector<8x8xf32>, vector<8x8xf32> -> vector<8x8xf32>
    %cst_136 = arith.constant 0.353553385 : f32
    %318 = vector.broadcast %cst_136 : f32 to vector<8x8xf32>
    %319 = arith.mulf %317, %318 : vector<8x8xf32>
    %320 = arith.addf %319, %246 : vector<8x8xf32>
    %cst_137 = arith.constant dense<0xFF800000> : vector<8xf32>
    %321 = vector.multi_reduction <maximumf>, %320, %cst_137 [1] : vector<8x8xf32> to vector<8xf32>
    %322 = vector.shape_cast %321 : vector<8xf32> to vector<8x1xf32>
    %323 = vector.broadcast %322 : vector<8x1xf32> to vector<8x8xf32>
    %324 = arith.subf %320, %323 : vector<8x8xf32>
    %325 = math.exp %324 : vector<8x8xf32>
    %cst_138 = arith.constant dense<0.000000e+00> : vector<8xf32>
    %326 = vector.multi_reduction <add>, %325, %cst_138 [1] : vector<8x8xf32> to vector<8xf32>
    %327 = vector.shape_cast %326 : vector<8xf32> to vector<8x1xf32>
    %328 = tpu.reciprocal %327 {approx = true} : vector<8x1xf32> -> vector<8x1xf32>
    %329 = vector.broadcast %328 : vector<8x1xf32> to vector<8x8xf32>
    %330 = arith.mulf %325, %329 : vector<8x8xf32>
    %c0_139 = arith.constant 0 : index
    %c24_140 = arith.constant 24 : index
    %331 = vector.load %arg27[%c0_139, %c24_140] : memref<16x32xf32, #tpu.memory_space<vmem>>, vector<8x8xf32>
    tpu.vector_store %arg27[%c0_139, %c24_140], %330 {strides = array<i32>} : memref<16x32xf32, #tpu.memory_space<vmem>>, vector<8x8xf32>,
    %cst_141 = arith.constant dense<0.000000e+00> : vector<8x8xf32>
    %332 = tpu.matmul %330, %315, %cst_141 {dimension_numbers = #tpu.dot_dimension_numbers<[1], [0], [0], [1], [0, 0, 1, 1], [], []>} : vector<8x8xf32>, vector<8x8xf32>, vector<8x8xf32> -> vector<8x8xf32>
    %c0_142 = arith.constant 0 : index
    %c24_143 = arith.constant 24 : index
    %333 = vector.load %arg28[%c0_142, %c24_143] : memref<16x32xf32, #tpu.memory_space<vmem>>, vector<8x8xf32>
    tpu.vector_store %arg28[%c0_142, %c24_143], %332 {strides = array<i32>} : memref<16x32xf32, #tpu.memory_space<vmem>>, vector<8x8xf32>,
    %334 = vector.extract_strided_slice %244 {offsets = [1, 0, 0], sizes = [1, 8, 8], strides = [1, 1, 1]} : vector<2x8x8xf32> to vector<1x8x8xf32>
    %335 = vector.shape_cast %334 : vector<1x8x8xf32> to vector<8x8xf32>
    %336 = vector.extract_strided_slice %234 {offsets = [8, 0], sizes = [8, 32], strides = [1, 1]} : vector<16x32xf32> to vector<8x32xf32>
    %337 = vector.extract_strided_slice %242 {offsets = [8, 0], sizes = [8, 32], strides = [1, 1]} : vector<16x32xf32> to vector<8x32xf32>
    %338 = vector.extract_strided_slice %243 {offsets = [8, 0], sizes = [8, 32], strides = [1, 1]} : vector<16x32xf32> to vector<8x32xf32>
    %339 = vector.extract_strided_slice %336 {offsets = [0, 0], sizes = [8, 8], strides = [1, 1]} : vector<8x32xf32> to vector<8x8xf32>
    %340 = vector.extract_strided_slice %337 {offsets = [0, 0], sizes = [8, 8], strides = [1, 1]} : vector<8x32xf32> to vector<8x8xf32>
    %341 = vector.extract_strided_slice %338 {offsets = [0, 0], sizes = [8, 8], strides = [1, 1]} : vector<8x32xf32> to vector<8x8xf32>
    %342 = tpu.transpose %340, [1, 0] : vector<8x8xf32> -> vector<8x8xf32>
    %cst_144 = arith.constant dense<0.000000e+00> : vector<8x8xf32>
    %343 = tpu.matmul %339, %342, %cst_144 {dimension_numbers = #tpu.dot_dimension_numbers<[1], [0], [0], [1], [0, 0, 1, 1], [], []>} : vector<8x8xf32>, vector<8x8xf32>, vector<8x8xf32> -> vector<8x8xf32>
    %cst_145 = arith.constant 0.353553385 : f32
    %344 = vector.broadcast %cst_145 : f32 to vector<8x8xf32>
    %345 = arith.mulf %343, %344 : vector<8x8xf32>
    %346 = arith.addf %345, %335 : vector<8x8xf32>
    %cst_146 = arith.constant dense<0xFF800000> : vector<8xf32>
    %347 = vector.multi_reduction <maximumf>, %346, %cst_146 [1] : vector<8x8xf32> to vector<8xf32>
    %348 = vector.shape_cast %347 : vector<8xf32> to vector<8x1xf32>
    %349 = vector.broadcast %348 : vector<8x1xf32> to vector<8x8xf32>
    %350 = arith.subf %346, %349 : vector<8x8xf32>
    %351 = math.exp %350 : vector<8x8xf32>
    %cst_147 = arith.constant dense<0.000000e+00> : vector<8xf32>
    %352 = vector.multi_reduction <add>, %351, %cst_147 [1] : vector<8x8xf32> to vector<8xf32>
    %353 = vector.shape_cast %352 : vector<8xf32> to vector<8x1xf32>
    %354 = tpu.reciprocal %353 {approx = true} : vector<8x1xf32> -> vector<8x1xf32>
    %355 = vector.broadcast %354 : vector<8x1xf32> to vector<8x8xf32>
    %356 = arith.mulf %351, %355 : vector<8x8xf32>
    %c8_148 = arith.constant 8 : index
    %c0_149 = arith.constant 0 : index
    %357 = vector.load %arg27[%c8_148, %c0_149] : memref<16x32xf32, #tpu.memory_space<vmem>>, vector<8x8xf32>
    tpu.vector_store %arg27[%c8_148, %c0_149], %356 {strides = array<i32>} : memref<16x32xf32, #tpu.memory_space<vmem>>, vector<8x8xf32>,
    %cst_150 = arith.constant dense<0.000000e+00> : vector<8x8xf32>
    %358 = tpu.matmul %356, %341, %cst_150 {dimension_numbers = #tpu.dot_dimension_numbers<[1], [0], [0], [1], [0, 0, 1, 1], [], []>} : vector<8x8xf32>, vector<8x8xf32>, vector<8x8xf32> -> vector<8x8xf32>
    %c8_151 = arith.constant 8 : index
    %c0_152 = arith.constant 0 : index
    %359 = vector.load %arg28[%c8_151, %c0_152] : memref<16x32xf32, #tpu.memory_space<vmem>>, vector<8x8xf32>
    tpu.vector_store %arg28[%c8_151, %c0_152], %358 {strides = array<i32>} : memref<16x32xf32, #tpu.memory_space<vmem>>, vector<8x8xf32>,
    %360 = vector.extract_strided_slice %336 {offsets = [0, 8], sizes = [8, 8], strides = [1, 1]} : vector<8x32xf32> to vector<8x8xf32>
    %361 = vector.extract_strided_slice %337 {offsets = [0, 8], sizes = [8, 8], strides = [1, 1]} : vector<8x32xf32> to vector<8x8xf32>
    %362 = vector.extract_strided_slice %338 {offsets = [0, 8], sizes = [8, 8], strides = [1, 1]} : vector<8x32xf32> to vector<8x8xf32>
    %363 = tpu.transpose %361, [1, 0] : vector<8x8xf32> -> vector<8x8xf32>
    %cst_153 = arith.constant dense<0.000000e+00> : vector<8x8xf32>
    %364 = tpu.matmul %360, %363, %cst_153 {dimension_numbers = #tpu.dot_dimension_numbers<[1], [0], [0], [1], [0, 0, 1, 1], [], []>} : vector<8x8xf32>, vector<8x8xf32>, vector<8x8xf32> -> vector<8x8xf32>
    %cst_154 = arith.constant 0.353553385 : f32
    %365 = vector.broadcast %cst_154 : f32 to vector<8x8xf32>
    %366 = arith.mulf %364, %365 : vector<8x8xf32>
    %367 = arith.addf %366, %335 : vector<8x8xf32>
    %cst_155 = arith.constant dense<0xFF800000> : vector<8xf32>
    %368 = vector.multi_reduction <maximumf>, %367, %cst_155 [1] : vector<8x8xf32> to vector<8xf32>
    %369 = vector.shape_cast %368 : vector<8xf32> to vector<8x1xf32>
    %370 = vector.broadcast %369 : vector<8x1xf32> to vector<8x8xf32>
    %371 = arith.subf %367, %370 : vector<8x8xf32>
    %372 = math.exp %371 : vector<8x8xf32>
    %cst_156 = arith.constant dense<0.000000e+00> : vector<8xf32>
    %373 = vector.multi_reduction <add>, %372, %cst_156 [1] : vector<8x8xf32> to vector<8xf32>
    %374 = vector.shape_cast %373 : vector<8xf32> to vector<8x1xf32>
    %375 = tpu.reciprocal %374 {approx = true} : vector<8x1xf32> -> vector<8x1xf32>
    %376 = vector.broadcast %375 : vector<8x1xf32> to vector<8x8xf32>
    %377 = arith.mulf %372, %376 : vector<8x8xf32>
    %c8_157 = arith.constant 8 : index
    %c8_158 = arith.constant 8 : index
    %378 = vector.load %arg27[%c8_157, %c8_158] : memref<16x32xf32, #tpu.memory_space<vmem>>, vector<8x8xf32>
    tpu.vector_store %arg27[%c8_157, %c8_158], %377 {strides = array<i32>} : memref<16x32xf32, #tpu.memory_space<vmem>>, vector<8x8xf32>,
    %cst_159 = arith.constant dense<0.000000e+00> : vector<8x8xf32>
    %379 = tpu.matmul %377, %362, %cst_159 {dimension_numbers = #tpu.dot_dimension_numbers<[1], [0], [0], [1], [0, 0, 1, 1], [], []>} : vector<8x8xf32>, vector<8x8xf32>, vector<8x8xf32> -> vector<8x8xf32>
    %c8_160 = arith.constant 8 : index
    %c8_161 = arith.constant 8 : index
    %380 = vector.load %arg28[%c8_160, %c8_161] : memref<16x32xf32, #tpu.memory_space<vmem>>, vector<8x8xf32>
    tpu.vector_store %arg28[%c8_160, %c8_161], %379 {strides = array<i32>} : memref<16x32xf32, #tpu.memory_space<vmem>>, vector<8x8xf32>,
    %381 = vector.extract_strided_slice %336 {offsets = [0, 16], sizes = [8, 8], strides = [1, 1]} : vector<8x32xf32> to vector<8x8xf32>
    %382 = vector.extract_strided_slice %337 {offsets = [0, 16], sizes = [8, 8], strides = [1, 1]} : vector<8x32xf32> to vector<8x8xf32>
    %383 = vector.extract_strided_slice %338 {offsets = [0, 16], sizes = [8, 8], strides = [1, 1]} : vector<8x32xf32> to vector<8x8xf32>
    %384 = tpu.transpose %382, [1, 0] : vector<8x8xf32> -> vector<8x8xf32>
    %cst_162 = arith.constant dense<0.000000e+00> : vector<8x8xf32>
    %385 = tpu.matmul %381, %384, %cst_162 {dimension_numbers = #tpu.dot_dimension_numbers<[1], [0], [0], [1], [0, 0, 1, 1], [], []>} : vector<8x8xf32>, vector<8x8xf32>, vector<8x8xf32> -> vector<8x8xf32>
    %cst_163 = arith.constant 0.353553385 : f32
    %386 = vector.broadcast %cst_163 : f32 to vector<8x8xf32>
    %387 = arith.mulf %385, %386 : vector<8x8xf32>
    %388 = arith.addf %387, %335 : vector<8x8xf32>
    %cst_164 = arith.constant dense<0xFF800000> : vector<8xf32>
    %389 = vector.multi_reduction <maximumf>, %388, %cst_164 [1] : vector<8x8xf32> to vector<8xf32>
    %390 = vector.shape_cast %389 : vector<8xf32> to vector<8x1xf32>
    %391 = vector.broadcast %390 : vector<8x1xf32> to vector<8x8xf32>
    %392 = arith.subf %388, %391 : vector<8x8xf32>
    %393 = math.exp %392 : vector<8x8xf32>
    %cst_165 = arith.constant dense<0.000000e+00> : vector<8xf32>
    %394 = vector.multi_reduction <add>, %393, %cst_165 [1] : vector<8x8xf32> to vector<8xf32>
    %395 = vector.shape_cast %394 : vector<8xf32> to vector<8x1xf32>
    %396 = tpu.reciprocal %395 {approx = true} : vector<8x1xf32> -> vector<8x1xf32>
    %397 = vector.broadcast %396 : vector<8x1xf32> to vector<8x8xf32>
    %398 = arith.mulf %393, %397 : vector<8x8xf32>
    %c8_166 = arith.constant 8 : index
    %c16_167 = arith.constant 16 : index
    %399 = vector.load %arg27[%c8_166, %c16_167] : memref<16x32xf32, #tpu.memory_space<vmem>>, vector<8x8xf32>
    tpu.vector_store %arg27[%c8_166, %c16_167], %398 {strides = array<i32>} : memref<16x32xf32, #tpu.memory_space<vmem>>, vector<8x8xf32>,
    %cst_168 = arith.constant dense<0.000000e+00> : vector<8x8xf32>
    %400 = tpu.matmul %398, %383, %cst_168 {dimension_numbers = #tpu.dot_dimension_numbers<[1], [0], [0], [1], [0, 0, 1, 1], [], []>} : vector<8x8xf32>, vector<8x8xf32>, vector<8x8xf32> -> vector<8x8xf32>
    %c8_169 = arith.constant 8 : index
    %c16_170 = arith.constant 16 : index
    %401 = vector.load %arg28[%c8_169, %c16_170] : memref<16x32xf32, #tpu.memory_space<vmem>>, vector<8x8xf32>
    tpu.vector_store %arg28[%c8_169, %c16_170], %400 {strides = array<i32>} : memref<16x32xf32, #tpu.memory_space<vmem>>, vector<8x8xf32>,
    %402 = vector.extract_strided_slice %336 {offsets = [0, 24], sizes = [8, 8], strides = [1, 1]} : vector<8x32xf32> to vector<8x8xf32>
    %403 = vector.extract_strided_slice %337 {offsets = [0, 24], sizes = [8, 8], strides = [1, 1]} : vector<8x32xf32> to vector<8x8xf32>
    %404 = vector.extract_strided_slice %338 {offsets = [0, 24], sizes = [8, 8], strides = [1, 1]} : vector<8x32xf32> to vector<8x8xf32>
    %405 = tpu.transpose %403, [1, 0] : vector<8x8xf32> -> vector<8x8xf32>
    %cst_171 = arith.constant dense<0.000000e+00> : vector<8x8xf32>
    %406 = tpu.matmul %402, %405, %cst_171 {dimension_numbers = #tpu.dot_dimension_numbers<[1], [0], [0], [1], [0, 0, 1, 1], [], []>} : vector<8x8xf32>, vector<8x8xf32>, vector<8x8xf32> -> vector<8x8xf32>
    %cst_172 = arith.constant 0.353553385 : f32
    %407 = vector.broadcast %cst_172 : f32 to vector<8x8xf32>
    %408 = arith.mulf %406, %407 : vector<8x8xf32>
    %409 = arith.addf %408, %335 : vector<8x8xf32>
    %cst_173 = arith.constant dense<0xFF800000> : vector<8xf32>
    %410 = vector.multi_reduction <maximumf>, %409, %cst_173 [1] : vector<8x8xf32> to vector<8xf32>
    %411 = vector.shape_cast %410 : vector<8xf32> to vector<8x1xf32>
    %412 = vector.broadcast %411 : vector<8x1xf32> to vector<8x8xf32>
    %413 = arith.subf %409, %412 : vector<8x8xf32>
    %414 = math.exp %413 : vector<8x8xf32>
    %cst_174 = arith.constant dense<0.000000e+00> : vector<8xf32>
    %415 = vector.multi_reduction <add>, %414, %cst_174 [1] : vector<8x8xf32> to vector<8xf32>
    %416 = vector.shape_cast %415 : vector<8xf32> to vector<8x1xf32>
    %417 = tpu.reciprocal %416 {approx = true} : vector<8x1xf32> -> vector<8x1xf32>
    %418 = vector.broadcast %417 : vector<8x1xf32> to vector<8x8xf32>
    %419 = arith.mulf %414, %418 : vector<8x8xf32>
    %c8_175 = arith.constant 8 : index
    %c24_176 = arith.constant 24 : index
    %420 = vector.load %arg27[%c8_175, %c24_176] : memref<16x32xf32, #tpu.memory_space<vmem>>, vector<8x8xf32>
    tpu.vector_store %arg27[%c8_175, %c24_176], %419 {strides = array<i32>} : memref<16x32xf32, #tpu.memory_space<vmem>>, vector<8x8xf32>,
    %cst_177 = arith.constant dense<0.000000e+00> : vector<8x8xf32>
    %421 = tpu.matmul %419, %404, %cst_177 {dimension_numbers = #tpu.dot_dimension_numbers<[1], [0], [0], [1], [0, 0, 1, 1], [], []>} : vector<8x8xf32>, vector<8x8xf32>, vector<8x8xf32> -> vector<8x8xf32>
    %c8_178 = arith.constant 8 : index
    %c24_179 = arith.constant 24 : index
    %422 = vector.load %arg28[%c8_178, %c24_179] : memref<16x32xf32, #tpu.memory_space<vmem>>, vector<8x8xf32>
    tpu.vector_store %arg28[%c8_178, %c24_179], %421 {strides = array<i32>} : memref<16x32xf32, #tpu.memory_space<vmem>>, vector<8x8xf32>,
    %c0_180 = arith.constant 0 : index
    %c0_181 = arith.constant 0 : index
    %423 = vector.load %arg28[%c0_180, %c0_181] : memref<16x32xf32, #tpu.memory_space<vmem>>, vector<16x32xf32>
    %c0_182 = arith.constant 0 : index
    %c0_183 = arith.constant 0 : index
    %424 = vector.load %arg15[%c0_182, %c0_183] : memref<32x32xf32, #tpu.memory_space<vmem>>, vector<32x32xf32>
    %cst_184 = arith.constant dense<0.000000e+00> : vector<16x32xf32>
    %425 = tpu.matmul %423, %424, %cst_184 {dimension_numbers = #tpu.dot_dimension_numbers<[1], [0], [0], [1], [0, 0, 1, 1], [], []>} : vector<16x32xf32>, vector<32x32xf32>, vector<16x32xf32> -> vector<16x32xf32>
    %c0_185 = arith.constant 0 : index
    %c0_186 = arith.constant 0 : index
    %426 = vector.load %arg16[%c0_185, %c0_186] : memref<1x32xf32, #tpu.memory_space<vmem>>, vector<1x32xf32>
    %427 = vector.shape_cast %426 : vector<1x32xf32> to vector<32xf32>
    %428 = vector.shape_cast %427 : vector<32xf32> to vector<1x32xf32>
    %429 = vector.broadcast %428 : vector<1x32xf32> to vector<16x32xf32>
    %430 = arith.addf %425, %429 : vector<16x32xf32>
    %431 = arith.addf %430, %227 : vector<16x32xf32>
    %c0_187 = arith.constant 0 : index
    %c0_188 = arith.constant 0 : index
    %432 = vector.load %arg17[%c0_187, %c0_188] : memref<1x32xf32, #tpu.memory_space<vmem>>, vector<1x32xf32>
    %433 = vector.shape_cast %432 : vector<1x32xf32> to vector<32xf32>
    %c0_189 = arith.constant 0 : index
    %c0_190 = arith.constant 0 : index
    %434 = vector.load %arg18[%c0_189, %c0_190] : memref<1x32xf32, #tpu.memory_space<vmem>>, vector<1x32xf32>
    %435 = vector.shape_cast %434 : vector<1x32xf32> to vector<32xf32>
    %cst_191 = arith.constant dense<0.000000e+00> : vector<16xf32>
    %436 = vector.multi_reduction <add>, %431, %cst_191 [1] : vector<16x32xf32> to vector<16xf32>
    %437 = vector.shape_cast %436 : vector<16xf32> to vector<16x1xf32>
    %cst_192 = arith.constant 3.200000e+01 : f32
    %438 = vector.broadcast %cst_192 : f32 to vector<16x1xf32>
    %439 = arith.divf %437, %438 : vector<16x1xf32>
    %440 = vector.broadcast %439 : vector<16x1xf32> to vector<16x32xf32>
    %441 = arith.subf %431, %440 : vector<16x32xf32>
    %442 = arith.mulf %441, %441 : vector<16x32xf32>
    %cst_193 = arith.constant dense<0.000000e+00> : vector<16xf32>
    %443 = vector.multi_reduction <add>, %442, %cst_193 [1] : vector<16x32xf32> to vector<16xf32>
    %444 = vector.shape_cast %443 : vector<16xf32> to vector<16x1xf32>
    %cst_194 = arith.constant 3.200000e+01 : f32
    %445 = vector.broadcast %cst_194 : f32 to vector<16x1xf32>
    %446 = arith.divf %444, %445 : vector<16x1xf32>
    %447 = vector.broadcast %439 : vector<16x1xf32> to vector<16x32xf32>
    %448 = arith.subf %431, %447 : vector<16x32xf32>
    %cst_195 = arith.constant 9.99999974E-6 : f32
    %449 = vector.broadcast %cst_195 : f32 to vector<16x1xf32>
    %450 = arith.addf %446, %449 : vector<16x1xf32>
    %451 = math.rsqrt %450 : vector<16x1xf32>
    %452 = vector.broadcast %451 : vector<16x1xf32> to vector<16x32xf32>
    %453 = arith.mulf %448, %452 : vector<16x32xf32>
    %454 = vector.shape_cast %433 : vector<32xf32> to vector<1x32xf32>
    %455 = vector.broadcast %454 : vector<1x32xf32> to vector<16x32xf32>
    %456 = arith.mulf %453, %455 : vector<16x32xf32>
    %457 = vector.shape_cast %435 : vector<32xf32> to vector<1x32xf32>
    %458 = vector.broadcast %457 : vector<1x32xf32> to vector<16x32xf32>
    %459 = arith.addf %456, %458 : vector<16x32xf32>
    %c0_196 = arith.constant 0 : index
    %c0_197 = arith.constant 0 : index
    %460 = vector.load %arg19[%c0_196, %c0_197] : memref<32x64xf32, #tpu.memory_space<vmem>>, vector<32x64xf32>
    %cst_198 = arith.constant dense<0.000000e+00> : vector<16x64xf32>
    %461 = tpu.matmul %459, %460, %cst_198 {dimension_numbers = #tpu.dot_dimension_numbers<[1], [0], [0], [1], [0, 0, 1, 1], [], []>} : vector<16x32xf32>, vector<32x64xf32>, vector<16x64xf32> -> vector<16x64xf32>
    %c0_199 = arith.constant 0 : index
    %c0_200 = arith.constant 0 : index
    %462 = vector.load %arg20[%c0_199, %c0_200] : memref<1x64xf32, #tpu.memory_space<vmem>>, vector<1x64xf32>
    %463 = vector.shape_cast %462 : vector<1x64xf32> to vector<64xf32>
    %464 = vector.shape_cast %463 : vector<64xf32> to vector<1x64xf32>
    %465 = vector.broadcast %464 : vector<1x64xf32> to vector<16x64xf32>
    %466 = arith.addf %461, %465 : vector<16x64xf32>
    %cst_201 = arith.constant 0.000000e+00 : f32
    %467 = vector.broadcast %cst_201 : f32 to vector<16x64xf32>
    %468 = arith.maximumf %466, %467 : vector<16x64xf32>
    %c0_202 = arith.constant 0 : index
    %c0_203 = arith.constant 0 : index
    %469 = vector.load %arg21[%c0_202, %c0_203] : memref<64x32xf32, #tpu.memory_space<vmem>>, vector<64x32xf32>
    %cst_204 = arith.constant dense<0.000000e+00> : vector<16x32xf32>
    %470 = tpu.matmul %468, %469, %cst_204 {dimension_numbers = #tpu.dot_dimension_numbers<[1], [0], [0], [1], [0, 0, 1, 1], [], []>} : vector<16x64xf32>, vector<64x32xf32>, vector<16x32xf32> -> vector<16x32xf32>
    %c0_205 = arith.constant 0 : index
    %c0_206 = arith.constant 0 : index
    %471 = vector.load %arg22[%c0_205, %c0_206] : memref<1x32xf32, #tpu.memory_space<vmem>>, vector<1x32xf32>
    %472 = vector.shape_cast %471 : vector<1x32xf32> to vector<32xf32>
    %473 = vector.shape_cast %472 : vector<32xf32> to vector<1x32xf32>
    %474 = vector.broadcast %473 : vector<1x32xf32> to vector<16x32xf32>
    %475 = arith.addf %470, %474 : vector<16x32xf32>
    %476 = arith.addf %475, %459 : vector<16x32xf32>
    %c0_207 = arith.constant 0 : index
    %c0_208 = arith.constant 0 : index
    %477 = vector.load %arg23[%c0_207, %c0_208] : memref<1x32xf32, #tpu.memory_space<vmem>>, vector<1x32xf32>
    %478 = vector.shape_cast %477 : vector<1x32xf32> to vector<32xf32>
    %c0_209 = arith.constant 0 : index
    %c0_210 = arith.constant 0 : index
    %479 = vector.load %arg24[%c0_209, %c0_210] : memref<1x32xf32, #tpu.memory_space<vmem>>, vector<1x32xf32>
    %480 = vector.shape_cast %479 : vector<1x32xf32> to vector<32xf32>
    %cst_211 = arith.constant dense<0.000000e+00> : vector<16xf32>
    %481 = vector.multi_reduction <add>, %476, %cst_211 [1] : vector<16x32xf32> to vector<16xf32>
    %482 = vector.shape_cast %481 : vector<16xf32> to vector<16x1xf32>
    %cst_212 = arith.constant 3.200000e+01 : f32
    %483 = vector.broadcast %cst_212 : f32 to vector<16x1xf32>
    %484 = arith.divf %482, %483 : vector<16x1xf32>
    %485 = vector.broadcast %484 : vector<16x1xf32> to vector<16x32xf32>
    %486 = arith.subf %476, %485 : vector<16x32xf32>
    %487 = arith.mulf %486, %486 : vector<16x32xf32>
    %cst_213 = arith.constant dense<0.000000e+00> : vector<16xf32>
    %488 = vector.multi_reduction <add>, %487, %cst_213 [1] : vector<16x32xf32> to vector<16xf32>
    %489 = vector.shape_cast %488 : vector<16xf32> to vector<16x1xf32>
    %cst_214 = arith.constant 3.200000e+01 : f32
    %490 = vector.broadcast %cst_214 : f32 to vector<16x1xf32>
    %491 = arith.divf %489, %490 : vector<16x1xf32>
    %492 = vector.broadcast %484 : vector<16x1xf32> to vector<16x32xf32>
    %493 = arith.subf %476, %492 : vector<16x32xf32>
    %cst_215 = arith.constant 9.99999974E-6 : f32
    %494 = vector.broadcast %cst_215 : f32 to vector<16x1xf32>
    %495 = arith.addf %491, %494 : vector<16x1xf32>
    %496 = math.rsqrt %495 : vector<16x1xf32>
    %497 = vector.broadcast %496 : vector<16x1xf32> to vector<16x32xf32>
    %498 = arith.mulf %493, %497 : vector<16x32xf32>
    %499 = vector.shape_cast %478 : vector<32xf32> to vector<1x32xf32>
    %500 = vector.broadcast %499 : vector<1x32xf32> to vector<16x32xf32>
    %501 = arith.mulf %498, %500 : vector<16x32xf32>
    %502 = vector.shape_cast %480 : vector<32xf32> to vector<1x32xf32>
    %503 = vector.broadcast %502 : vector<1x32xf32> to vector<16x32xf32>
    %504 = arith.addf %501, %503 : vector<16x32xf32>
    %c0_216 = arith.constant 0 : index
    %c0_217 = arith.constant 0 : index
    %505 = vector.load %arg25[%c0_216, %c0_217] : memref<16x32xf32, #tpu.memory_space<vmem>>, vector<16x32xf32>
    tpu.vector_store %arg25[%c0_216, %c0_217], %504 {strides = array<i32>} : memref<16x32xf32, #tpu.memory_space<vmem>>, vector<16x32xf32>,
    return
  }
  func.func @transform_0(%arg0: i32) -> (i32, i32) {
    %c0_i32 = arith.constant 0 : i32
    %c0_i32_0 = arith.constant 0 : i32
    %c0_i32_1 = arith.constant 0 : i32
    return %c0_i32, %c0_i32_0 : i32, i32
  }
  func.func @transform_1(%arg0: i32) -> (i32, i32) {
    %c0_i32 = arith.constant 0 : i32
    %c0_i32_0 = arith.constant 0 : i32
    %c0_i32_1 = arith.constant 0 : i32
    return %c0_i32, %c0_i32_0 : i32, i32
  }
  func.func @transform_2(%arg0: i32) -> (i32, i32, i32) {
    %c0_i32 = arith.constant 0 : i32
    %c0_i32_0 = arith.constant 0 : i32
    %c0_i32_1 = arith.constant 0 : i32
    %c0_i32_2 = arith.constant 0 : i32
    return %c0_i32, %c0_i32_0, %c0_i32_1 : i32, i32, i32
  }
  func.func @transform_3(%arg0: i32) -> (i32, i32, i32) {
    %c0_i32 = arith.constant 0 : i32
    %c0_i32_0 = arith.constant 0 : i32
    %c0_i32_1 = arith.constant 0 : i32
    %c0_i32_2 = arith.constant 0 : i32
    return %c0_i32, %c0_i32_0, %c0_i32_1 : i32, i32, i32
  }
  func.func @transform_4(%arg0: i32) -> (i32, i32) {
    %c0_i32 = arith.constant 0 : i32
    %c0_i32_0 = arith.constant 0 : i32
    %c0_i32_1 = arith.constant 0 : i32
    return %c0_i32, %c0_i32_0 : i32, i32
  }
  func.func @transform_5(%arg0: i32) -> (i32, i32) {
    %c0_i32 = arith.constant 0 : i32
    %c0_i32_0 = arith.constant 0 : i32
    %c0_i32_1 = arith.constant 0 : i32
    return %c0_i32, %c0_i32_0 : i32, i32
  }
  func.func @transform_6(%arg0: i32) -> (i32, i32) {
    %c0_i32 = arith.constant 0 : i32
    %c0_i32_0 = arith.constant 0 : i32
    %c0_i32_1 = arith.constant 0 : i32
    return %c0_i32, %c0_i32_0 : i32, i32
  }
  func.func @transform_7(%arg0: i32) -> (i32, i32) {
    %c0_i32 = arith.constant 0 : i32
    %c0_i32_0 = arith.constant 0 : i32
    %c0_i32_1 = arith.constant 0 : i32
    return %c0_i32, %c0_i32_0 : i32, i32
  }
  func.func @transform_8(%arg0: i32) -> (i32, i32) {
    %c0_i32 = arith.constant 0 : i32
    %c0_i32_0 = arith.constant 0 : i32
    %c0_i32_1 = arith.constant 0 : i32
    return %c0_i32, %c0_i32_0 : i32, i32
  }
  func.func @transform_9(%arg0: i32) -> (i32, i32) {
    %c0_i32 = arith.constant 0 : i32
    %c0_i32_0 = arith.constant 0 : i32
    %c0_i32_1 = arith.constant 0 : i32
    return %c0_i32, %c0_i32_0 : i32, i32
  }
  func.func @transform_10(%arg0: i32) -> (i32, i32) {
    %c0_i32 = arith.constant 0 : i32
    %c0_i32_0 = arith.constant 0 : i32
    %c0_i32_1 = arith.constant 0 : i32
    return %c0_i32, %c0_i32_0 : i32, i32
  }
  func.func @transform_11(%arg0: i32) -> (i32, i32) {
    %c0_i32 = arith.constant 0 : i32
    %c0_i32_0 = arith.constant 0 : i32
    %c0_i32_1 = arith.constant 0 : i32
    return %c0_i32, %c0_i32_0 : i32, i32
  }
  func.func @transform_12(%arg0: i32) -> (i32, i32) {
    %c0_i32 = arith.constant 0 : i32
    %c0_i32_0 = arith.constant 0 : i32
    %c0_i32_1 = arith.constant 0 : i32
    return %c0_i32, %c0_i32_0 : i32, i32
  }
  func.func @transform_13(%arg0: i32) -> (i32, i32) {
    %c0_i32 = arith.constant 0 : i32
    %c0_i32_0 = arith.constant 0 : i32
    %c0_i32_1 = arith.constant 0 : i32
    return %c0_i32, %c0_i32_0 : i32, i32
  }
  func.func @transform_14(%arg0: i32) -> (i32, i32) {
    %c0_i32 = arith.constant 0 : i32
    %c0_i32_0 = arith.constant 0 : i32
    %c0_i32_1 = arith.constant 0 : i32
    return %c0_i32, %c0_i32_0 : i32, i32
  }
  func.func @transform_15(%arg0: i32) -> (i32, i32) {
    %c0_i32 = arith.constant 0 : i32
    %c0_i32_0 = arith.constant 0 : i32
    %c0_i32_1 = arith.constant 0 : i32
    return %c0_i32, %c0_i32_0 : i32, i32
  }
  func.func @transform_16(%arg0: i32) -> (i32, i32) {
    %c0_i32 = arith.constant 0 : i32
    %c0_i32_0 = arith.constant 0 : i32
    %c0_i32_1 = arith.constant 0 : i32
    return %c0_i32, %c0_i32_0 : i32, i32
  }
  func.func @transform_17(%arg0: i32) -> (i32, i32) {
    %c0_i32 = arith.constant 0 : i32
    %c0_i32_0 = arith.constant 0 : i32
    %c0_i32_1 = arith.constant 0 : i32
    return %c0_i32, %c0_i32_0 : i32, i32
  }
  func.func @transform_18(%arg0: i32) -> (i32, i32) {
    %c0_i32 = arith.constant 0 : i32
    %c0_i32_0 = arith.constant 0 : i32
    %c0_i32_1 = arith.constant 0 : i32
    return %c0_i32, %c0_i32_0 : i32, i32
  }
  func.func @transform_19(%arg0: i32) -> (i32, i32) {
    %c0_i32 = arith.constant 0 : i32
    %c0_i32_0 = arith.constant 0 : i32
    %c0_i32_1 = arith.constant 0 : i32
    return %c0_i32, %c0_i32_0 : i32, i32
  }
  func.func @transform_20(%arg0: i32) -> (i32, i32) {
    %c0_i32 = arith.constant 0 : i32
    %c0_i32_0 = arith.constant 0 : i32
    %c0_i32_1 = arith.constant 0 : i32
    return %c0_i32, %c0_i32_0 : i32, i32
  }
  func.func @transform_21(%arg0: i32) -> (i32, i32) {
    %c0_i32 = arith.constant 0 : i32
    %c0_i32_0 = arith.constant 0 : i32
    %c0_i32_1 = arith.constant 0 : i32
    return %c0_i32, %c0_i32_0 : i32, i32
  }
  func.func @transform_22(%arg0: i32) -> (i32, i32) {
    %c0_i32 = arith.constant 0 : i32
    %c0_i32_0 = arith.constant 0 : i32
    %c0_i32_1 = arith.constant 0 : i32
    return %c0_i32, %c0_i32_0 : i32, i32
  }
  func.func @transform_23(%arg0: i32) -> (i32, i32) {
    %c0_i32 = arith.constant 0 : i32
    %c0_i32_0 = arith.constant 0 : i32
    %c0_i32_1 = arith.constant 0 : i32
    return %c0_i32, %c0_i32_0 : i32, i32
  }
  func.func @transform_24(%arg0: i32) -> (i32, i32) {
    %c0_i32 = arith.constant 0 : i32
    %c0_i32_0 = arith.constant 0 : i32
    %c0_i32_1 = arith.constant 0 : i32
    return %c0_i32, %c0_i32_0 : i32, i32
  }
  func.func @transform_25(%arg0: i32) -> (i32, i32) {
    %c0_i32 = arith.constant 0 : i32
    %c0_i32_0 = arith.constant 0 : i32
    %c0_i32_1 = arith.constant 0 : i32
    return %c0_i32, %c0_i32_0 : i32, i32
  }
  func.func @transform_26(%arg0: i32) -> (i32, i32) {
    %c0_i32 = arith.constant 0 : i32
    %c0_i32_0 = arith.constant 0 : i32
    %c0_i32_1 = arith.constant 0 : i32
    return %c0_i32, %c0_i32_0 : i32, i32
  }
}

</mosaic_0001>

<llo_original>
// kernel: decoder_layer_forward.1
$region0: #{decoder_layer_forward.1}
  #allocation0 [shape = 'u32[]', space=smem, size = 0x4, offset = 0x4, fixed_abs, tag = 'smem constant byte address 0x4 - core index']
  #allocation1 [shape = 'u32[72,128]{1,0:T(1,128)}', space=vmem, size = 0x9000, scoped, tag = 'internal scratch']
  #allocation2 [shape = 'f32[16,32]{1,0:T(8,128)}', space=vmem, size = 0x2000, scoped, tag = 'scratch operand']
  %s0 = inlined_call_operand.vmem [shape: f32[16,32], index: 0, kind: input, shape index: {}]
  %s1 = inlined_call_operand.vmem [shape: f32[16,32], index: 1, kind: input, shape index: {}]
  %s2 = inlined_call_operand.vmem [shape: f32[2,8,8], index: 2, kind: input, shape index: {}]
  %s3 = inlined_call_operand.vmem [shape: f32[2,8,8], index: 3, kind: input, shape index: {}]
  %s4 = inlined_call_operand.vmem [shape: f32[32,96], index: 4, kind: input, shape index: {}]
  %s5 = inlined_call_operand.vmem [shape: f32[1,96], index: 5, kind: input, shape index: {}]
  %s6 = inlined_call_operand.vmem [shape: f32[32,32], index: 6, kind: input, shape index: {}]
  %s7 = inlined_call_operand.vmem [shape: f32[1,32], index: 7, kind: input, shape index: {}]
  %s8 = inlined_call_operand.vmem [shape: f32[1,32], index: 8, kind: input, shape index: {}]
  %s9 = inlined_call_operand.vmem [shape: f32[1,32], index: 9, kind: input, shape index: {}]
  %s10 = inlined_call_operand.vmem [shape: f32[32,32], index: 10, kind: input, shape index: {}]
  %s11 = inlined_call_operand.vmem [shape: f32[1,32], index: 11, kind: input, shape index: {}]
  %s12 = inlined_call_operand.vmem [shape: f32[32,64], index: 12, kind: input, shape index: {}]
  %s13 = inlined_call_operand.vmem [shape: f32[1,64], index: 13, kind: input, shape index: {}]
  %s14 = inlined_call_operand.vmem [shape: f32[32,32], index: 14, kind: input, shape index: {}]
  %s15 = inlined_call_operand.vmem [shape: f32[1,32], index: 15, kind: input, shape index: {}]
  %s16 = inlined_call_operand.vmem [shape: f32[1,32], index: 16, kind: input, shape index: {}]
  %s17 = inlined_call_operand.vmem [shape: f32[1,32], index: 17, kind: input, shape index: {}]
  %s18 = inlined_call_operand.vmem [shape: f32[32,64], index: 18, kind: input, shape index: {}]
  %s19 = inlined_call_operand.vmem [shape: f32[1,64], index: 19, kind: input, shape index: {}]
  %s20 = inlined_call_operand.vmem [shape: f32[64,32], index: 20, kind: input, shape index: {}]
  %s21 = inlined_call_operand.vmem [shape: f32[1,32], index: 21, kind: input, shape index: {}]
  %s22 = inlined_call_operand.vmem [shape: f32[1,32], index: 22, kind: input, shape index: {}]
  %s23 = inlined_call_operand.vmem [shape: f32[1,32], index: 23, kind: input, shape index: {}]
  %s24 = inlined_call_operand.hbm [shape: f32[16,32], index: 24, kind: output, shape index: {0}]
  %s25 = inlined_call_operand.vmem [shape: f32[16,32], index: 25, kind: output, shape index: {1}]
  %s26 = inlined_call_operand.vmem [shape: f32[16,32], index: 26, kind: output, shape index: {2}]
  %27 = xla_tuple %s24, %s25, %s26
  %s28 = sld [smem:[#allocation0]]
  $region122: #{decoder_layer_forward.1} parent=0
    _
  %s30 = ssub.s32 1, %s28
  %s31 = scalar_select 0, %s30, %s28
  $region1: #{decoder_layer_forward.1} parent=0
    #allocation3 [shape = 'u8[8192]{0}', space=vmem, size = 0x2000, scoped, tag = 'output window, operand 0, single buffered']
    #allocation4 [shape = 's32[1]{0}', space=sflag, size = 0x4, scoped, tag = 'scoped memory for decoder_layer_forward.1']
    %32 = vsyncpa [#allocation4], 0
    // Predicated region
    $region2: #{decoder_layer_forward.1} parent=1 // pred_check
      _
    $region3: #{decoder_layer_forward.1} parent=1 // pred_check_branch
      %34 = sbr.rel (0) target = $region5
    $region4: #{decoder_layer_forward.1} parent=1 // pred_region
      _
    $region5: #{decoder_layer_forward.1} parent=1 // pred_fallthru
      _
    // Predicated region
    $region6: #{decoder_layer_forward.1} parent=1 // pred_check
      _
    $region7: #{decoder_layer_forward.1} parent=1 // pred_check_branch
      %36 = sbr.rel (0) target = $region9
    $region8: #{decoder_layer_forward.1} parent=1 // pred_region
      _
    $region9: #{decoder_layer_forward.1} parent=1 // pred_fallthru
      _
    // Predicated region
    $region10: #{decoder_layer_forward.1} parent=1 // pred_check
      _
    $region11: #{decoder_layer_forward.1} parent=1 // pred_check_branch
      %38 = sbr.rel (0) target = $region13
    $region12: #{decoder_layer_forward.1} parent=1 // pred_region
      _
    $region13: #{decoder_layer_forward.1} parent=1 // pred_fallthru
      _
    // Predicated region
    $region14: #{decoder_layer_forward.1} parent=1 // pred_check
      _
    $region15: #{decoder_layer_forward.1} parent=1 // pred_check_branch
      %40 = sbr.rel (0) target = $region17
    $region16: #{decoder_layer_forward.1} parent=1 // pred_region
      _
    $region17: #{decoder_layer_forward.1} parent=1 // pred_fallthru
      _
    // Predicated region
    $region18: #{decoder_layer_forward.1} parent=1 // pred_check
      _
    $region19: #{decoder_layer_forward.1} parent=1 // pred_check_branch
      %42 = sbr.rel (0) target = $region21
    $region20: #{decoder_layer_forward.1} parent=1 // pred_region
      _
    $region21: #{decoder_layer_forward.1} parent=1 // pred_fallthru
      _
    // Predicated region
    $region22: #{decoder_layer_forward.1} parent=1 // pred_check
      _
    $region23: #{decoder_layer_forward.1} parent=1 // pred_check_branch
      %44 = sbr.rel (0) target = $region25
    $region24: #{decoder_layer_forward.1} parent=1 // pred_region
      _
    $region25: #{decoder_layer_forward.1} parent=1 // pred_fallthru
      _
    // Predicated region
    $region26: #{decoder_layer_forward.1} parent=1 // pred_check
      _
    $region27: #{decoder_layer_forward.1} parent=1 // pred_check_branch
      %46 = sbr.rel (0) target = $region29
    $region28: #{decoder_layer_forward.1} parent=1 // pred_region
      _
    $region29: #{decoder_layer_forward.1} parent=1 // pred_fallthru
      _
    // Predicated region
    $region30: #{decoder_layer_forward.1} parent=1 // pred_check
      _
    $region31: #{decoder_layer_forward.1} parent=1 // pred_check_branch
      %48 = sbr.rel (0) target = $region33
    $region32: #{decoder_layer_forward.1} parent=1 // pred_region
      _
    $region33: #{decoder_layer_forward.1} parent=1 // pred_fallthru
      _
    // Predicated region
    $region34: #{decoder_layer_forward.1} parent=1 // pred_check
      _
    $region35: #{decoder_layer_forward.1} parent=1 // pred_check_branch
      %50 = sbr.rel (0) target = $region37
    $region36: #{decoder_layer_forward.1} parent=1 // pred_region
      _
    $region37: #{decoder_layer_forward.1} parent=1 // pred_fallthru
      _
    // Predicated region
    $region38: #{decoder_layer_forward.1} parent=1 // pred_check
      _
    $region39: #{decoder_layer_forward.1} parent=1 // pred_check_branch
      %52 = sbr.rel (0) target = $region41
    $region40: #{decoder_layer_forward.1} parent=1 // pred_region
      _
    $region41: #{decoder_layer_forward.1} parent=1 // pred_fallthru
      _
    // Predicated region
    $region42: #{decoder_layer_forward.1} parent=1 // pred_check
      _
    $region43: #{decoder_layer_forward.1} parent=1 // pred_check_branch
      %54 = sbr.rel (0) target = $region45
    $region44: #{decoder_layer_forward.1} parent=1 // pred_region
      _
    $region45: #{decoder_layer_forward.1} parent=1 // pred_fallthru
      _
    // Predicated region
    $region46: #{decoder_layer_forward.1} parent=1 // pred_check
      _
    $region47: #{decoder_layer_forward.1} parent=1 // pred_check_branch
      %56 = sbr.rel (0) target = $region49
    $region48: #{decoder_layer_forward.1} parent=1 // pred_region
      _
    $region49: #{decoder_layer_forward.1} parent=1 // pred_fallthru
      _
    // Predicated region
    $region50: #{decoder_layer_forward.1} parent=1 // pred_check
      _
    $region51: #{decoder_layer_forward.1} parent=1 // pred_check_branch
      %58 = sbr.rel (0) target = $region53
    $region52: #{decoder_layer_forward.1} parent=1 // pred_region
      _
    $region53: #{decoder_layer_forward.1} parent=1 // pred_fallthru
      _
    // Predicated region
    $region54: #{decoder_layer_forward.1} parent=1 // pred_check
      _
    $region55: #{decoder_layer_forward.1} parent=1 // pred_check_branch
      %60 = sbr.rel (0) target = $region57
    $region56: #{decoder_layer_forward.1} parent=1 // pred_region
      _
    $region57: #{decoder_layer_forward.1} parent=1 // pred_fallthru
      _
    // Predicated region
    $region58: #{decoder_layer_forward.1} parent=1 // pred_check
      _
    $region59: #{decoder_layer_forward.1} parent=1 // pred_check_branch
      %62 = sbr.rel (0) target = $region61
    $region60: #{decoder_layer_forward.1} parent=1 // pred_region
      _
    $region61: #{decoder_layer_forward.1} parent=1 // pred_fallthru
      _
    // Predicated region
    $region62: #{decoder_layer_forward.1} parent=1 // pred_check
      _
    $region63: #{decoder_layer_forward.1} parent=1 // pred_check_branch
      %64 = sbr.rel (0) target = $region65
    $region64: #{decoder_layer_forward.1} parent=1 // pred_region
      _
    $region65: #{decoder_layer_forward.1} parent=1 // pred_fallthru
      _
    // Predicated region
    $region66: #{decoder_layer_forward.1} parent=1 // pred_check
      _
    $region67: #{decoder_layer_forward.1} parent=1 // pred_check_branch
      %66 = sbr.rel (0) target = $region69
    $region68: #{decoder_layer_forward.1} parent=1 // pred_region
      _
    $region69: #{decoder_layer_forward.1} parent=1 // pred_fallthru
      _
    // Predicated region
    $region70: #{decoder_layer_forward.1} parent=1 // pred_check
      _
    $region71: #{decoder_layer_forward.1} parent=1 // pred_check_branch
      %68 = sbr.rel (0) target = $region73
    $region72: #{decoder_layer_forward.1} parent=1 // pred_region
      _
    $region73: #{decoder_layer_forward.1} parent=1 // pred_fallthru
      _
    // Predicated region
    $region74: #{decoder_layer_forward.1} parent=1 // pred_check
      _
    $region75: #{decoder_layer_forward.1} parent=1 // pred_check_branch
      %70 = sbr.rel (0) target = $region77
    $region76: #{decoder_layer_forward.1} parent=1 // pred_region
      _
    $region77: #{decoder_layer_forward.1} parent=1 // pred_fallthru
      _
    // Predicated region
    $region78: #{decoder_layer_forward.1} parent=1 // pred_check
      _
    $region79: #{decoder_layer_forward.1} parent=1 // pred_check_branch
      %72 = sbr.rel (0) target = $region81
    $region80: #{decoder_layer_forward.1} parent=1 // pred_region
      _
    $region81: #{decoder_layer_forward.1} parent=1 // pred_fallthru
      _
    // Predicated region
    $region82: #{decoder_layer_forward.1} parent=1 // pred_check
      _
    $region83: #{decoder_layer_forward.1} parent=1 // pred_check_branch
      %74 = sbr.rel (0) target = $region85
    $region84: #{decoder_layer_forward.1} parent=1 // pred_region
      _
    $region85: #{decoder_layer_forward.1} parent=1 // pred_fallthru
      _
    // Predicated region
    $region86: #{decoder_layer_forward.1} parent=1 // pred_check
      _
    $region87: #{decoder_layer_forward.1} parent=1 // pred_check_branch
      %76 = sbr.rel (0) target = $region89
    $region88: #{decoder_layer_forward.1} parent=1 // pred_region
      _
    $region89: #{decoder_layer_forward.1} parent=1 // pred_fallthru
      _
    // Predicated region
    $region90: #{decoder_layer_forward.1} parent=1 // pred_check
      _
    $region91: #{decoder_layer_forward.1} parent=1 // pred_check_branch
      %78 = sbr.rel (0) target = $region93
    $region92: #{decoder_layer_forward.1} parent=1 // pred_region
      _
    $region93: #{decoder_layer_forward.1} parent=1 // pred_fallthru
      _
    // Predicated region
    $region94: #{decoder_layer_forward.1} parent=1 // pred_check
      _
    $region95: #{decoder_layer_forward.1} parent=1 // pred_check_branch
      %80 = sbr.rel (0) target = $region97
    $region96: #{decoder_layer_forward.1} parent=1 // pred_region
      _
    $region97: #{decoder_layer_forward.1} parent=1 // pred_fallthru
      _
    %v81 = vld [vmem:[%s0] sm:$0xff]
    %v82 = vld [vmem:[%s0 + $0x8] sm:$0xff]
    %v83 = vld [vmem:[%s1] sm:$0xff]
    %v84 = vld [vmem:[%s1 + $0x8] sm:$0xff]
    %v85 = vld [vmem:[%s4] sm:$0xff]
    %v86 = vld [vmem:[%s4 + $0x8] sm:$0xff]
    %v87 = vld [vmem:[%s4 + $0x10] sm:$0xff]
    %v88 = vld [vmem:[%s4 + $0x18] sm:$0xff]
    %v89 = vld [vmem:[%s5] sm:$0x1]
    %v91 = vperm.slane %v89, 0
    %vm93 = vcmask 261120
    %v95 = vsel %vm93, %v81, 0
    %v98 = vsel %vm93, %v82, 0
    %100 = vmatpush.msra.mxu0 0.0
    %101 = vmatpush.msra.mxu0 0.0
    %102 = vmatpush.msra.mxu0 0.0
    %103 = vmatpush.msra.mxu0 0.0
    %104 = vmatpush.msra.mxu0 0.0
    %105 = vmatpush.msra.mxu0 0.0
    %106 = vmatpush.msra.mxu0 0.0
    %107 = vmatpush.msra.mxu0 0.0
    %108 = vmatpush.msra.mxu0 0.0
    %109 = vmatpush.msra.mxu0 0.0
    %110 = vmatpush.msra.mxu0 0.0
    %111 = vmatpush.msra.mxu0 0.0
    %112 = vmatpush.msra.mxu0 %v88
    %113 = vmatpush.msra.mxu0 %v87
    %114 = vmatpush.msra.mxu0 %v86
    %115 = vmatpush.msra.mxu0 %v85
    %116 = vmatmul.f32.gmra.mxu0 %v95
    %v117 = vpop.f32.mrf.mxu0
    %v118 = vadd.f32 %v91, %v117
    %119 = vmatmul.f32.gmra.mxu0 %v98
    %v120 = vpop.f32.mrf.mxu0
    %v121 = vadd.f32 %v91, %v120
    %122 = vdwg.mxu0
    %v123 = vld [vmem:[%s2] sm:$0xff]
    %v124 = vld [vmem:[%s2 + $0x8] sm:$0xff]
    %126 = vrot.lane.b32.xlu0 %v118, 96
    %v127 = vpop.permute.xlu0 %126
    %vm128 = vcmask 64512
    %v129 = vsel %vm128, %v118, 0
    %v131 = vsel %vm128, %v127, 0
    %133 = vmatpush.xpose.msra.mxu0 0.0
    %134 = vmatpush.xpose.msra.mxu0 0.0
    %135 = vmatpush.xpose.msra.mxu0 0.0
    %136 = vmatpush.xpose.msra.mxu0 0.0
    %137 = vmatpush.xpose.msra.mxu0 0.0
    %138 = vmatpush.xpose.msra.mxu0 0.0
    %139 = vmatpush.xpose.msra.mxu0 0.0
    %140 = vmatpush.xpose.msra.mxu0 0.0
    %141 = vmatpush.xpose.msra.mxu0 0.0
    %142 = vmatpush.xpose.msra.mxu0 0.0
    %143 = vmatpush.xpose.msra.mxu0 0.0
    %144 = vmatpush.xpose.msra.mxu0 0.0
    %145 = vmatpush.xpose.msra.mxu0 0.0
    %146 = vmatpush.xpose.msra.mxu0 0.0
    %147 = vmatpush.xpose.msra.mxu0 0.0
    %148 = vmatpush.xpose.msra.mxu0 %v131
    %149 = vmatmul.f32.gmra.mxu0 %v129
    %v150 = vpop.f32.mrf.mxu0
    %v151 = vadd.f32 0.0, %v150
    %152 = vdwg.mxu0
    %v153 = vmul.f32 %v151, 0.35355338
    %v154 = vadd.f32 %v153, %v123
    %v155 = vsel %vm128, %v154, -inf
    %156 = vmax.xlane.f32.xlu0 %v155
    %v157 = vpop.xlane.xlu0 %156
    %v158 = vsub.f32 %v154, %v157
    %v159 = vmul.f32 %v158, 1.442695
    %v160 = vpow.pop %v159
    %v161 = vsel %vm128, %v160, 0.0
    %162 = vadd.xlane.f32.xlu0 %v161
    %v163 = vpop.xlane.xlu0 %162
    %v164 = vrcp.pop %v163
    %v165 = vmul.f32 %v160, %v164
    %166 = vst.msk [vmem:[%s25] sm:$0xff] %vm128, %v165
    %167 = vrot.lane.b32.xlu0 %v118, 64
    %v168 = vpop.permute.xlu0 %167
    %v171 = vsel %vm128, %v165, 0
    %173 = vmatpush.msra.mxu0 0.0
    %174 = vmatpush.msra.mxu0 0.0
    %175 = vmatpush.msra.mxu0 0.0
    %176 = vmatpush.msra.mxu0 0.0
    %177 = vmatpush.msra.mxu0 0.0
    %178 = vmatpush.msra.mxu0 0.0
    %179 = vmatpush.msra.mxu0 0.0
    %180 = vmatpush.msra.mxu0 0.0
    %181 = vmatpush.msra.mxu0 0.0
    %182 = vmatpush.msra.mxu0 0.0
    %183 = vmatpush.msra.mxu0 0.0
    %184 = vmatpush.msra.mxu0 0.0
    %185 = vmatpush.msra.mxu0 0.0
    %186 = vmatpush.msra.mxu0 0.0
    %187 = vmatpush.msra.mxu0 0.0
    %188 = vmatpush.msra.mxu0 %v168
    %189 = vmatmul.f32.gmra.mxu0 %v171
    %v190 = vpop.f32.mrf.mxu0
    %v191 = vadd.f32 0.0, %v190
    %192 = vdwg.mxu0
    %193 = vst.msk [vmem:[#allocation2] sm:$0xff] %vm128, %v191
    %194 = vrot.lane.b32.xlu0 %v118, 120
    %v195 = vpop.permute.xlu0 %194
    %196 = vrot.lane.b32.xlu0 %v118, 88
    %v197 = vpop.permute.xlu0 %196
    %v198 = vsel %vm128, %v195, 0
    %v200 = vsel %vm128, %v197, 0
    %202 = vmatpush.xpose.msra.mxu0 0.0
    %203 = vmatpush.xpose.msra.mxu0 0.0
    %204 = vmatpush.xpose.msra.mxu0 0.0
    %205 = vmatpush.xpose.msra.mxu0 0.0
    %206 = vmatpush.xpose.msra.mxu0 0.0
    %207 = vmatpush.xpose.msra.mxu0 0.0
    %208 = vmatpush.xpose.msra.mxu0 0.0
    %209 = vmatpush.xpose.msra.mxu0 0.0
    %210 = vmatpush.xpose.msra.mxu0 0.0
    %211 = vmatpush.xpose.msra.mxu0 0.0
    %212 = vmatpush.xpose.msra.mxu0 0.0
    %213 = vmatpush.xpose.msra.mxu0 0.0
    %214 = vmatpush.xpose.msra.mxu0 0.0
    %215 = vmatpush.xpose.msra.mxu0 0.0
    %216 = vmatpush.xpose.msra.mxu0 0.0
    %217 = vmatpush.xpose.msra.mxu0 %v200
    %218 = vmatmul.f32.gmra.mxu0 %v198
    %v219 = vpop.f32.mrf.mxu0
    %v220 = vadd.f32 0.0, %v219
    %221 = vdwg.mxu0
    %v222 = vmul.f32 %v220, 0.35355338
    %v223 = vadd.f32 %v222, %v123
    %v224 = vsel %vm128, %v223, -inf
    %225 = vmax.xlane.f32.xlu0 %v224
    %v226 = vpop.xlane.xlu0 %225
    %v227 = vsub.f32 %v223, %v226
    %v228 = vmul.f32 %v227, 1.442695
    %v229 = vpow.pop %v228
    %v230 = vsel %vm128, %v229, 0.0
    %231 = vadd.xlane.f32.xlu0 %v230
    %v232 = vpop.xlane.xlu0 %231
    %v233 = vrcp.pop %v232
    %v234 = vmul.f32 %v229, %v233
    %236 = vrot.lane.b32.xlu0 %v234, 8
    %v237 = vpop.permute.xlu0 %236
    %vm239 = vcmask 130112
    %240 = vst.msk [vmem:[%s25] sm:$0xff] %vm239, %v237
    %241 = vrot.lane.b32.xlu0 %v118, 56
    %v242 = vpop.permute.xlu0 %241
    %v244 = vsel %vm128, %v234, 0
    %246 = vmatpush.msra.mxu0 0.0
    %247 = vmatpush.msra.mxu0 0.0
    %248 = vmatpush.msra.mxu0 0.0
    %249 = vmatpush.msra.mxu0 0.0
    %250 = vmatpush.msra.mxu0 0.0
    %251 = vmatpush.msra.mxu0 0.0
    %252 = vmatpush.msra.mxu0 0.0
    %253 = vmatpush.msra.mxu0 0.0
    %254 = vmatpush.msra.mxu0 0.0
    %255 = vmatpush.msra.mxu0 0.0
    %256 = vmatpush.msra.mxu0 0.0
    %257 = vmatpush.msra.mxu0 0.0
    %258 = vmatpush.msra.mxu0 0.0
    %259 = vmatpush.msra.mxu0 0.0
    %260 = vmatpush.msra.mxu0 0.0
    %261 = vmatpush.msra.mxu0 %v242
    %262 = vmatmul.f32.gmra.mxu0 %v244
    %v263 = vpop.f32.mrf.mxu0
    %v264 = vadd.f32 0.0, %v263
    %265 = vdwg.mxu0
    %267 = vrot.lane.b32.xlu0 %v264, 8
    %v268 = vpop.permute.xlu0 %267
    %270 = vst.msk [vmem:[#allocation2] sm:$0xff] %vm239, %v268
    %271 = vrot.lane.b32.xlu0 %v118, 112
    %v272 = vpop.permute.xlu0 %271
    %273 = vrot.lane.b32.xlu0 %v118, 80
    %v274 = vpop.permute.xlu0 %273
    %v275 = vsel %vm128, %v272, 0
    %v277 = vsel %vm128, %v274, 0
    %279 = vmatpush.xpose.msra.mxu0 0.0
    %280 = vmatpush.xpose.msra.mxu0 0.0
    %281 = vmatpush.xpose.msra.mxu0 0.0
    %282 = vmatpush.xpose.msra.mxu0 0.0
    %283 = vmatpush.xpose.msra.mxu0 0.0
    %284 = vmatpush.xpose.msra.mxu0 0.0
    %285 = vmatpush.xpose.msra.mxu0 0.0
    %286 = vmatpush.xpose.msra.mxu0 0.0
    %287 = vmatpush.xpose.msra.mxu0 0.0
    %288 = vmatpush.xpose.msra.mxu0 0.0
    %289 = vmatpush.xpose.msra.mxu0 0.0
    %290 = vmatpush.xpose.msra.mxu0 0.0
    %291 = vmatpush.xpose.msra.mxu0 0.0
    %292 = vmatpush.xpose.msra.mxu0 0.0
    %293 = vmatpush.xpose.msra.mxu0 0.0
    %294 = vmatpush.xpose.msra.mxu0 %v277
    %295 = vmatmul.f32.gmra.mxu0 %v275
    %v296 = vpop.f32.mrf.mxu0
    %v297 = vadd.f32 0.0, %v296
    %298 = vdwg.mxu0
    %v299 = vmul.f32 %v297, 0.35355338
    %v300 = vadd.f32 %v299, %v123
    %v301 = vsel %vm128, %v300, -inf
    %302 = vmax.xlane.f32.xlu0 %v301
    %v303 = vpop.xlane.xlu0 %302
    %v304 = vsub.f32 %v300, %v303
    %v305 = vmul.f32 %v304, 1.442695
    %v306 = vpow.pop %v305
    %v307 = vsel %vm128, %v306, 0.0
    %308 = vadd.xlane.f32.xlu0 %v307
    %v309 = vpop.xlane.xlu0 %308
    %v310 = vrcp.pop %v309
    %v311 = vmul.f32 %v306, %v310
    %313 = vrot.lane.b32.xlu0 %v311, 16
    %v314 = vpop.permute.xlu0 %313
    %vm316 = vcmask 195712
    %317 = vst.msk [vmem:[%s25] sm:$0xff] %vm316, %v314
    %318 = vrot.lane.b32.xlu0 %v118, 48
    %v319 = vpop.permute.xlu0 %318
    %v321 = vsel %vm128, %v311, 0
    %323 = vmatpush.msra.mxu0 0.0
    %324 = vmatpush.msra.mxu0 0.0
    %325 = vmatpush.msra.mxu0 0.0
    %326 = vmatpush.msra.mxu0 0.0
    %327 = vmatpush.msra.mxu0 0.0
    %328 = vmatpush.msra.mxu0 0.0
    %329 = vmatpush.msra.mxu0 0.0
    %330 = vmatpush.msra.mxu0 0.0
    %331 = vmatpush.msra.mxu0 0.0
    %332 = vmatpush.msra.mxu0 0.0
    %333 = vmatpush.msra.mxu0 0.0
    %334 = vmatpush.msra.mxu0 0.0
    %335 = vmatpush.msra.mxu0 0.0
    %336 = vmatpush.msra.mxu0 0.0
    %337 = vmatpush.msra.mxu0 0.0
    %338 = vmatpush.msra.mxu0 %v319
    %339 = vmatmul.f32.gmra.mxu0 %v321
    %v340 = vpop.f32.mrf.mxu0
    %v341 = vadd.f32 0.0, %v340
    %342 = vdwg.mxu0
    %344 = vrot.lane.b32.xlu0 %v341, 16
    %v345 = vpop.permute.xlu0 %344
    %347 = vst.msk [vmem:[#allocation2] sm:$0xff] %vm316, %v345
    %348 = vrot.lane.b32.xlu0 %v118, 104
    %v349 = vpop.permute.xlu0 %348
    %350 = vrot.lane.b32.xlu0 %v118, 72
    %v351 = vpop.permute.xlu0 %350
    %v352 = vsel %vm128, %v349, 0
    %v354 = vsel %vm128, %v351, 0
    %356 = vmatpush.xpose.msra.mxu0 0.0
    %357 = vmatpush.xpose.msra.mxu0 0.0
    %358 = vmatpush.xpose.msra.mxu0 0.0
    %359 = vmatpush.xpose.msra.mxu0 0.0
    %360 = vmatpush.xpose.msra.mxu0 0.0
    %361 = vmatpush.xpose.msra.mxu0 0.0
    %362 = vmatpush.xpose.msra.mxu0 0.0
    %363 = vmatpush.xpose.msra.mxu0 0.0
    %364 = vmatpush.xpose.msra.mxu0 0.0
    %365 = vmatpush.xpose.msra.mxu0 0.0
    %366 = vmatpush.xpose.msra.mxu0 0.0
    %367 = vmatpush.xpose.msra.mxu0 0.0
    %368 = vmatpush.xpose.msra.mxu0 0.0
    %369 = vmatpush.xpose.msra.mxu0 0.0
    %370 = vmatpush.xpose.msra.mxu0 0.0
    %371 = vmatpush.xpose.msra.mxu0 %v354
    %372 = vmatmul.f32.gmra.mxu0 %v352
    %v373 = vpop.f32.mrf.mxu0
    %v374 = vadd.f32 0.0, %v373
    %375 = vdwg.mxu0
    %v376 = vmul.f32 %v374, 0.35355338
    %v377 = vadd.f32 %v376, %v123
    %v378 = vsel %vm128, %v377, -inf
    %379 = vmax.xlane.f32.xlu0 %v378
    %v380 = vpop.xlane.xlu0 %379
    %v381 = vsub.f32 %v377, %v380
    %v382 = vmul.f32 %v381, 1.442695
    %v383 = vpow.pop %v382
    %v384 = vsel %vm128, %v383, 0.0
    %385 = vadd.xlane.f32.xlu0 %v384
    %v386 = vpop.xlane.xlu0 %385
    %v387 = vrcp.pop %v386
    %v388 = vmul.f32 %v383, %v387
    %390 = vrot.lane.b32.xlu0 %v388, 24
    %v391 = vpop.permute.xlu0 %390
    %vm393 = vcmask 261312
    %394 = vst.msk [vmem:[%s25] sm:$0xff] %vm393, %v391
    %395 = vrot.lane.b32.xlu0 %v118, 40
    %v396 = vpop.permute.xlu0 %395
    %v398 = vsel %vm128, %v388, 0
    %400 = vmatpush.msra.mxu0 0.0
    %401 = vmatpush.msra.mxu0 0.0
    %402 = vmatpush.msra.mxu0 0.0
    %403 = vmatpush.msra.mxu0 0.0
    %404 = vmatpush.msra.mxu0 0.0
    %405 = vmatpush.msra.mxu0 0.0
    %406 = vmatpush.msra.mxu0 0.0
    %407 = vmatpush.msra.mxu0 0.0
    %408 = vmatpush.msra.mxu0 0.0
    %409 = vmatpush.msra.mxu0 0.0
    %410 = vmatpush.msra.mxu0 0.0
    %411 = vmatpush.msra.mxu0 0.0
    %412 = vmatpush.msra.mxu0 0.0
    %413 = vmatpush.msra.mxu0 0.0
    %414 = vmatpush.msra.mxu0 0.0
    %415 = vmatpush.msra.mxu0 %v396
    %416 = vmatmul.f32.gmra.mxu0 %v398
    %v417 = vpop.f32.mrf.mxu0
    %v418 = vadd.f32 0.0, %v417
    %419 = vdwg.mxu0
    %421 = vrot.lane.b32.xlu0 %v418, 24
    %v422 = vpop.permute.xlu0 %421
    %424 = vst.msk [vmem:[#allocation2] sm:$0xff] %vm393, %v422
    %426 = vrot.lane.b32.xlu0 %v121, 96
    %v427 = vpop.permute.xlu0 %426
    %v428 = vsel %vm128, %v121, 0
    %v430 = vsel %vm128, %v427, 0
    %432 = vmatpush.xpose.msra.mxu0 0.0
    %433 = vmatpush.xpose.msra.mxu0 0.0
    %434 = vmatpush.xpose.msra.mxu0 0.0
    %435 = vmatpush.xpose.msra.mxu0 0.0
    %436 = vmatpush.xpose.msra.mxu0 0.0
    %437 = vmatpush.xpose.msra.mxu0 0.0
    %438 = vmatpush.xpose.msra.mxu0 0.0
    %439 = vmatpush.xpose.msra.mxu0 0.0
    %440 = vmatpush.xpose.msra.mxu0 0.0
    %441 = vmatpush.xpose.msra.mxu0 0.0
    %442 = vmatpush.xpose.msra.mxu0 0.0
    %443 = vmatpush.xpose.msra.mxu0 0.0
    %444 = vmatpush.xpose.msra.mxu0 0.0
    %445 = vmatpush.xpose.msra.mxu0 0.0
    %446 = vmatpush.xpose.msra.mxu0 0.0
    %447 = vmatpush.xpose.msra.mxu0 %v430
    %448 = vmatmul.f32.gmra.mxu0 %v428
    %v449 = vpop.f32.mrf.mxu0
    %v450 = vadd.f32 0.0, %v449
    %451 = vdwg.mxu0
    %v452 = vmul.f32 %v450, 0.35355338
    %v453 = vadd.f32 %v452, %v124
    %v454 = vsel %vm128, %v453, -inf
    %455 = vmax.xlane.f32.xlu0 %v454
    %v456 = vpop.xlane.xlu0 %455
    %v457 = vsub.f32 %v453, %v456
    %v458 = vmul.f32 %v457, 1.442695
    %v459 = vpow.pop %v458
    %v460 = vsel %vm128, %v459, 0.0
    %461 = vadd.xlane.f32.xlu0 %v460
    %v462 = vpop.xlane.xlu0 %461
    %v463 = vrcp.pop %v462
    %v464 = vmul.f32 %v459, %v463
    %465 = vst.msk [vmem:[%s25 + $0x8] sm:$0xff] %vm128, %v464
    %466 = vrot.lane.b32.xlu0 %v121, 64
    %v467 = vpop.permute.xlu0 %466
    %v470 = vsel %vm128, %v464, 0
    %472 = vmatpush.msra.mxu0 0.0
    %473 = vmatpush.msra.mxu0 0.0
    %474 = vmatpush.msra.mxu0 0.0
    %475 = vmatpush.msra.mxu0 0.0
    %476 = vmatpush.msra.mxu0 0.0
    %477 = vmatpush.msra.mxu0 0.0
    %478 = vmatpush.msra.mxu0 0.0
    %479 = vmatpush.msra.mxu0 0.0
    %480 = vmatpush.msra.mxu0 0.0
    %481 = vmatpush.msra.mxu0 0.0
    %482 = vmatpush.msra.mxu0 0.0
    %483 = vmatpush.msra.mxu0 0.0
    %484 = vmatpush.msra.mxu0 0.0
    %485 = vmatpush.msra.mxu0 0.0
    %486 = vmatpush.msra.mxu0 0.0
    %487 = vmatpush.msra.mxu0 %v467
    %488 = vmatmul.f32.gmra.mxu0 %v470
    %v489 = vpop.f32.mrf.mxu0
    %v490 = vadd.f32 0.0, %v489
    %491 = vdwg.mxu0
    %492 = vst.msk [vmem:[#allocation2 + $0x8] sm:$0xff] %vm128, %v490
    %493 = vrot.lane.b32.xlu0 %v121, 120
    %v494 = vpop.permute.xlu0 %493
    %495 = vrot.lane.b32.xlu0 %v121, 88
    %v496 = vpop.permute.xlu0 %495
    %v497 = vsel %vm128, %v494, 0
    %v499 = vsel %vm128, %v496, 0
    %501 = vmatpush.xpose.msra.mxu0 0.0
    %502 = vmatpush.xpose.msra.mxu0 0.0
    %503 = vmatpush.xpose.msra.mxu0 0.0
    %504 = vmatpush.xpose.msra.mxu0 0.0
    %505 = vmatpush.xpose.msra.mxu0 0.0
    %506 = vmatpush.xpose.msra.mxu0 0.0
    %507 = vmatpush.xpose.msra.mxu0 0.0
    %508 = vmatpush.xpose.msra.mxu0 0.0
    %509 = vmatpush.xpose.msra.mxu0 0.0
    %510 = vmatpush.xpose.msra.mxu0 0.0
    %511 = vmatpush.xpose.msra.mxu0 0.0
    %512 = vmatpush.xpose.msra.mxu0 0.0
    %513 = vmatpush.xpose.msra.mxu0 0.0
    %514 = vmatpush.xpose.msra.mxu0 0.0
    %515 = vmatpush.xpose.msra.mxu0 0.0
    %516 = vmatpush.xpose.msra.mxu0 %v499
    %517 = vmatmul.f32.gmra.mxu0 %v497
    %v518 = vpop.f32.mrf.mxu0
    %v519 = vadd.f32 0.0, %v518
    %520 = vdwg.mxu0
    %v521 = vmul.f32 %v519, 0.35355338
    %v522 = vadd.f32 %v521, %v124
    %v523 = vsel %vm128, %v522, -inf
    %524 = vmax.xlane.f32.xlu0 %v523
    %v525 = vpop.xlane.xlu0 %524
    %v526 = vsub.f32 %v522, %v525
    %v527 = vmul.f32 %v526, 1.442695
    %v528 = vpow.pop %v527
    %v529 = vsel %vm128, %v528, 0.0
    %530 = vadd.xlane.f32.xlu0 %v529
    %v531 = vpop.xlane.xlu0 %530
    %v532 = vrcp.pop %v531
    %v533 = vmul.f32 %v528, %v532
    %535 = vrot.lane.b32.xlu0 %v533, 8
    %v536 = vpop.permute.xlu0 %535
    %538 = vst.msk [vmem:[%s25 + $0x8] sm:$0xff] %vm239, %v536
    %539 = vrot.lane.b32.xlu0 %v121, 56
    %v540 = vpop.permute.xlu0 %539
    %v542 = vsel %vm128, %v533, 0
    %544 = vmatpush.msra.mxu0 0.0
    %545 = vmatpush.msra.mxu0 0.0
    %546 = vmatpush.msra.mxu0 0.0
    %547 = vmatpush.msra.mxu0 0.0
    %548 = vmatpush.msra.mxu0 0.0
    %549 = vmatpush.msra.mxu0 0.0
    %550 = vmatpush.msra.mxu0 0.0
    %551 = vmatpush.msra.mxu0 0.0
    %552 = vmatpush.msra.mxu0 0.0
    %553 = vmatpush.msra.mxu0 0.0
    %554 = vmatpush.msra.mxu0 0.0
    %555 = vmatpush.msra.mxu0 0.0
    %556 = vmatpush.msra.mxu0 0.0
    %557 = vmatpush.msra.mxu0 0.0
    %558 = vmatpush.msra.mxu0 0.0
    %559 = vmatpush.msra.mxu0 %v540
    %560 = vmatmul.f32.gmra.mxu0 %v542
    %v561 = vpop.f32.mrf.mxu0
    %v562 = vadd.f32 0.0, %v561
    %563 = vdwg.mxu0
    %565 = vrot.lane.b32.xlu0 %v562, 8
    %v566 = vpop.permute.xlu0 %565
    %568 = vst.msk [vmem:[#allocation2 + $0x8] sm:$0xff] %vm239, %v566
    %569 = vrot.lane.b32.xlu0 %v121, 112
    %v570 = vpop.permute.xlu0 %569
    %571 = vrot.lane.b32.xlu0 %v121, 80
    %v572 = vpop.permute.xlu0 %571
    %v573 = vsel %vm128, %v570, 0
    %v575 = vsel %vm128, %v572, 0
    %577 = vmatpush.xpose.msra.mxu0 0.0
    %578 = vmatpush.xpose.msra.mxu0 0.0
    %579 = vmatpush.xpose.msra.mxu0 0.0
    %580 = vmatpush.xpose.msra.mxu0 0.0
    %581 = vmatpush.xpose.msra.mxu0 0.0
    %582 = vmatpush.xpose.msra.mxu0 0.0
    %583 = vmatpush.xpose.msra.mxu0 0.0
    %584 = vmatpush.xpose.msra.mxu0 0.0
    %585 = vmatpush.xpose.msra.mxu0 0.0
    %586 = vmatpush.xpose.msra.mxu0 0.0
    %587 = vmatpush.xpose.msra.mxu0 0.0
    %588 = vmatpush.xpose.msra.mxu0 0.0
    %589 = vmatpush.xpose.msra.mxu0 0.0
    %590 = vmatpush.xpose.msra.mxu0 0.0
    %591 = vmatpush.xpose.msra.mxu0 0.0
    %592 = vmatpush.xpose.msra.mxu0 %v575
    %593 = vmatmul.f32.gmra.mxu0 %v573
    %v594 = vpop.f32.mrf.mxu0
    %v595 = vadd.f32 0.0, %v594
    %596 = vdwg.mxu0
    %v597 = vmul.f32 %v595, 0.35355338
    %v598 = vadd.f32 %v597, %v124
    %v599 = vsel %vm128, %v598, -inf
    %600 = vmax.xlane.f32.xlu0 %v599
    %v601 = vpop.xlane.xlu0 %600
    %v602 = vsub.f32 %v598, %v601
    %v603 = vmul.f32 %v602, 1.442695
    %v604 = vpow.pop %v603
    %v605 = vsel %vm128, %v604, 0.0
    %606 = vadd.xlane.f32.xlu0 %v605
    %v607 = vpop.xlane.xlu0 %606
    %v608 = vrcp.pop %v607
    %v609 = vmul.f32 %v604, %v608
    %611 = vrot.lane.b32.xlu0 %v609, 16
    %v612 = vpop.permute.xlu0 %611
    %614 = vst.msk [vmem:[%s25 + $0x8] sm:$0xff] %vm316, %v612
    %615 = vrot.lane.b32.xlu0 %v121, 48
    %v616 = vpop.permute.xlu0 %615
    %v618 = vsel %vm128, %v609, 0
    %620 = vmatpush.msra.mxu0 0.0
    %621 = vmatpush.msra.mxu0 0.0
    %622 = vmatpush.msra.mxu0 0.0
    %623 = vmatpush.msra.mxu0 0.0
    %624 = vmatpush.msra.mxu0 0.0
    %625 = vmatpush.msra.mxu0 0.0
    %626 = vmatpush.msra.mxu0 0.0
    %627 = vmatpush.msra.mxu0 0.0
    %628 = vmatpush.msra.mxu0 0.0
    %629 = vmatpush.msra.mxu0 0.0
    %630 = vmatpush.msra.mxu0 0.0
    %631 = vmatpush.msra.mxu0 0.0
    %632 = vmatpush.msra.mxu0 0.0
    %633 = vmatpush.msra.mxu0 0.0
    %634 = vmatpush.msra.mxu0 0.0
    %635 = vmatpush.msra.mxu0 %v616
    %636 = vmatmul.f32.gmra.mxu0 %v618
    %v637 = vpop.f32.mrf.mxu0
    %v638 = vadd.f32 0.0, %v637
    %639 = vdwg.mxu0
    %641 = vrot.lane.b32.xlu0 %v638, 16
    %v642 = vpop.permute.xlu0 %641
    %644 = vst.msk [vmem:[#allocation2 + $0x8] sm:$0xff] %vm316, %v642
    %645 = vrot.lane.b32.xlu0 %v121, 104
    %v646 = vpop.permute.xlu0 %645
    %647 = vrot.lane.b32.xlu0 %v121, 72
    %v648 = vpop.permute.xlu0 %647
    %v649 = vsel %vm128, %v646, 0
    %v651 = vsel %vm128, %v648, 0
    %653 = vmatpush.xpose.msra.mxu0 0.0
    %654 = vmatpush.xpose.msra.mxu0 0.0
    %655 = vmatpush.xpose.msra.mxu0 0.0
    %656 = vmatpush.xpose.msra.mxu0 0.0
    %657 = vmatpush.xpose.msra.mxu0 0.0
    %658 = vmatpush.xpose.msra.mxu0 0.0
    %659 = vmatpush.xpose.msra.mxu0 0.0
    %660 = vmatpush.xpose.msra.mxu0 0.0
    %661 = vmatpush.xpose.msra.mxu0 0.0
    %662 = vmatpush.xpose.msra.mxu0 0.0
    %663 = vmatpush.xpose.msra.mxu0 0.0
    %664 = vmatpush.xpose.msra.mxu0 0.0
    %665 = vmatpush.xpose.msra.mxu0 0.0
    %666 = vmatpush.xpose.msra.mxu0 0.0
    %667 = vmatpush.xpose.msra.mxu0 0.0
    %668 = vmatpush.xpose.msra.mxu0 %v651
    %669 = vmatmul.f32.gmra.mxu0 %v649
    %v670 = vpop.f32.mrf.mxu0
    %v671 = vadd.f32 0.0, %v670
    %672 = vdwg.mxu0
    %v673 = vmul.f32 %v671, 0.35355338
    %v674 = vadd.f32 %v673, %v124
    %v675 = vsel %vm128, %v674, -inf
    %676 = vmax.xlane.f32.xlu0 %v675
    %v677 = vpop.xlane.xlu0 %676
    %v678 = vsub.f32 %v674, %v677
    %v679 = vmul.f32 %v678, 1.442695
    %v680 = vpow.pop %v679
    %v681 = vsel %vm128, %v680, 0.0
    %682 = vadd.xlane.f32.xlu0 %v681
    %v683 = vpop.xlane.xlu0 %682
    %v684 = vrcp.pop %v683
    %v685 = vmul.f32 %v680, %v684
    %687 = vrot.lane.b32.xlu0 %v685, 24
    %v688 = vpop.permute.xlu0 %687
    %690 = vst.msk [vmem:[%s25 + $0x8] sm:$0xff] %vm393, %v688
    %691 = vrot.lane.b32.xlu0 %v121, 40
    %v692 = vpop.permute.xlu0 %691
    %v694 = vsel %vm128, %v685, 0
    %696 = vmatpush.msra.mxu0 0.0
    %697 = vmatpush.msra.mxu0 0.0
    %698 = vmatpush.msra.mxu0 0.0
    %699 = vmatpush.msra.mxu0 0.0
    %700 = vmatpush.msra.mxu0 0.0
    %701 = vmatpush.msra.mxu0 0.0
    %702 = vmatpush.msra.mxu0 0.0
    %703 = vmatpush.msra.mxu0 0.0
    %704 = vmatpush.msra.mxu0 0.0
    %705 = vmatpush.msra.mxu0 0.0
    %706 = vmatpush.msra.mxu0 0.0
    %707 = vmatpush.msra.mxu0 0.0
    %708 = vmatpush.msra.mxu0 0.0
    %709 = vmatpush.msra.mxu0 0.0
    %710 = vmatpush.msra.mxu0 0.0
    %711 = vmatpush.msra.mxu0 %v692
    %712 = vmatmul.f32.gmra.mxu0 %v694
    %v713 = vpop.f32.mrf.mxu0
    %v714 = vadd.f32 0.0, %v713
    %715 = vdwg.mxu0
    %717 = vrot.lane.b32.xlu0 %v714, 24
    %v718 = vpop.permute.xlu0 %717
    %720 = vst.msk [vmem:[#allocation2 + $0x8] sm:$0xff] %vm393, %v718
    %v721 = vld [vmem:[#allocation2] sm:$0xff]
    %v722 = vld [vmem:[#allocation2 + $0x8] sm:$0xff]
    %v723 = vld [vmem:[%s6] sm:$0xff]
    %v724 = vld [vmem:[%s6 + $0x8] sm:$0xff]
    %v725 = vld [vmem:[%s6 + $0x10] sm:$0xff]
    %v726 = vld [vmem:[%s6 + $0x18] sm:$0xff]
    %v727 = vld [vmem:[%s7] sm:$0x1]
    %v729 = vperm.slane %v727, 0
    %v732 = vsel %vm93, %v721, 0
    %v735 = vsel %vm93, %v722, 0
    %737 = vmatpush.msra.mxu0 0.0
    %738 = vmatpush.msra.mxu0 0.0
    %739 = vmatpush.msra.mxu0 0.0
    %740 = vmatpush.msra.mxu0 0.0
    %741 = vmatpush.msra.mxu0 0.0
    %742 = vmatpush.msra.mxu0 0.0
    %743 = vmatpush.msra.mxu0 0.0
    %744 = vmatpush.msra.mxu0 0.0
    %745 = vmatpush.msra.mxu0 0.0
    %746 = vmatpush.msra.mxu0 0.0
    %747 = vmatpush.msra.mxu0 0.0
    %748 = vmatpush.msra.mxu0 0.0
    %749 = vmatpush.msra.mxu0 %v726
    %750 = vmatpush.msra.mxu0 %v725
    %751 = vmatpush.msra.mxu0 %v724
    %752 = vmatpush.msra.mxu0 %v723
    %753 = vmatmul.f32.gmra.mxu0 %v732
    %v754 = vpop.f32.mrf.mxu0
    %v755 = vadd.f32 %v729, %v754
    %756 = vmatmul.f32.gmra.mxu0 %v735
    %v757 = vpop.f32.mrf.mxu0
    %v758 = vadd.f32 %v729, %v757
    %759 = vdwg.mxu0
    %v760 = vadd.f32 %v755, %v81
    %v761 = vadd.f32 %v758, %v82
    %v762 = vld [vmem:[%s8] sm:$0x1]
    %v763 = vld [vmem:[%s9] sm:$0x1]
    %v764 = vsel %vm93, %v760, 0.0
    %765 = vadd.xlane.f32.xlu0 %v764
    %v766 = vpop.xlane.xlu0 %765
    %v767 = vsel %vm93, %v761, 0.0
    %768 = vadd.xlane.f32.xlu0 %v767
    %v769 = vpop.xlane.xlu0 %768
    %v770 = vrcp.pop 32.0
    %v771 = vmul.f32 32.0, %v770
    %v772 = vsub.f32 1.0, %v771
    %v773 = vmul.f32 %v770, %v772
    %v774 = vadd.f32 %v770, %v773
    %vm775 = vweird.f32 %v770
    %v776 = vsel %vm775, %v770, %v774
    %v777 = vmul.f32 %v766, %v776
    %v778 = vmul.f32 %v769, %v776
    %v779 = vsub.f32 %v760, %v777
    %v780 = vsub.f32 %v761, %v778
    %v781 = vmul.f32 %v779, %v779
    %v782 = vmul.f32 %v780, %v780
    %v783 = vsel %vm93, %v781, 0.0
    %784 = vadd.xlane.f32.xlu0 %v783
    %v785 = vpop.xlane.xlu0 %784
    %v786 = vsel %vm93, %v782, 0.0
    %787 = vadd.xlane.f32.xlu0 %v786
    %v788 = vpop.xlane.xlu0 %787
    %v789 = vmul.f32 %v785, %v776
    %v790 = vmul.f32 %v788, %v776
    %v791 = vadd.f32 %v789, 1e-05
    %v792 = vadd.f32 %v790, 1e-05
    %v793 = vrsqrt.pop %v791
    %v794 = vmul.f32 %v793, %v791
    %v795 = vmul.f32 %v794, %v793
    %v796 = vmul.f32 0.5, %v795
    %v797 = vsub.f32 1.5, %v796
    %v798 = vmul.f32 %v793, %v797
    %vm799 = vweird.f32 %v791
    %vm800 = vweird.f32 %v793
    %vm801 = vmor %vm799, %vm800
    %v802 = vsel %vm801, %v793, %v798
    %v803 = vrsqrt.pop %v792
    %v804 = vmul.f32 %v803, %v792
    %v805 = vmul.f32 %v804, %v803
    %v806 = vmul.f32 0.5, %v805
    %v807 = vsub.f32 1.5, %v806
    %v808 = vmul.f32 %v803, %v807
    %vm809 = vweird.f32 %v792
    %vm810 = vweird.f32 %v803
    %vm811 = vmor %vm809, %vm810
    %v812 = vsel %vm811, %v803, %v808
    %v813 = vmul.f32 %v779, %v802
    %v814 = vmul.f32 %v780, %v812
    %v816 = vperm.slane %v762, 0
    %v818 = vmul.f32 %v813, %v816
    %v819 = vmul.f32 %v814, %v816
    %v821 = vperm.slane %v763, 0
    %v823 = vadd.f32 %v818, %v821
    %v824 = vadd.f32 %v819, %v821
    %v825 = vld [vmem:[%s10] sm:$0xff]
    %v826 = vld [vmem:[%s10 + $0x8] sm:$0xff]
    %v827 = vld [vmem:[%s10 + $0x10] sm:$0xff]
    %v828 = vld [vmem:[%s10 + $0x18] sm:$0xff]
    %v829 = vld [vmem:[%s11] sm:$0x1]
    %v831 = vperm.slane %v829, 0
    %v834 = vsel %vm93, %v823, 0
    %v837 = vsel %vm93, %v824, 0
    %839 = vmatpush.msra.mxu0 0.0
    %840 = vmatpush.msra.mxu0 0.0
    %841 = vmatpush.msra.mxu0 0.0
    %842 = vmatpush.msra.mxu0 0.0
    %843 = vmatpush.msra.mxu0 0.0
    %844 = vmatpush.msra.mxu0 0.0
    %845 = vmatpush.msra.mxu0 0.0
    %846 = vmatpush.msra.mxu0 0.0
    %847 = vmatpush.msra.mxu0 0.0
    %848 = vmatpush.msra.mxu0 0.0
    %849 = vmatpush.msra.mxu0 0.0
    %850 = vmatpush.msra.mxu0 0.0
    %851 = vmatpush.msra.mxu0 %v828
    %852 = vmatpush.msra.mxu0 %v827
    %853 = vmatpush.msra.mxu0 %v826
    %854 = vmatpush.msra.mxu0 %v825
    %855 = vmatmul.f32.gmra.mxu0 %v834
    %v856 = vpop.f32.mrf.mxu0
    %v857 = vadd.f32 %v831, %v856
    %858 = vmatmul.f32.gmra.mxu0 %v837
    %v859 = vpop.f32.mrf.mxu0
    %v860 = vadd.f32 %v831, %v859
    %861 = vdwg.mxu0
    %v862 = vld [vmem:[%s12] sm:$0xff]
    %v863 = vld [vmem:[%s12 + $0x8] sm:$0xff]
    %v864 = vld [vmem:[%s12 + $0x10] sm:$0xff]
    %v865 = vld [vmem:[%s12 + $0x18] sm:$0xff]
    %v866 = vld [vmem:[%s13] sm:$0x1]
    %v868 = vperm.slane %v866, 0
    %v871 = vsel %vm93, %v83, 0
    %v874 = vsel %vm93, %v84, 0
    %876 = vmatpush.msra.mxu0 0.0
    %877 = vmatpush.msra.mxu0 0.0
    %878 = vmatpush.msra.mxu0 0.0
    %879 = vmatpush.msra.mxu0 0.0
    %880 = vmatpush.msra.mxu0 0.0
    %881 = vmatpush.msra.mxu0 0.0
    %882 = vmatpush.msra.mxu0 0.0
    %883 = vmatpush.msra.mxu0 0.0
    %884 = vmatpush.msra.mxu0 0.0
    %885 = vmatpush.msra.mxu0 0.0
    %886 = vmatpush.msra.mxu0 0.0
    %887 = vmatpush.msra.mxu0 0.0
    %888 = vmatpush.msra.mxu0 %v865
    %889 = vmatpush.msra.mxu0 %v864
    %890 = vmatpush.msra.mxu0 %v863
    %891 = vmatpush.msra.mxu0 %v862
    %892 = vmatmul.f32.gmra.mxu0 %v871
    %v893 = vpop.f32.mrf.mxu0
    %v894 = vadd.f32 %v868, %v893
    %895 = vmatmul.f32.gmra.mxu0 %v874
    %v896 = vpop.f32.mrf.mxu0
    %v897 = vadd.f32 %v868, %v896
    %898 = vdwg.mxu0
    %v899 = vld [vmem:[%s3] sm:$0xff]
    %v900 = vld [vmem:[%s3 + $0x8] sm:$0xff]
    %v902 = vsel %vm128, %v857, 0
    %v905 = vsel %vm128, %v894, 0
    %907 = vmatpush.xpose.msra.mxu0 0.0
    %908 = vmatpush.xpose.msra.mxu0 0.0
    %909 = vmatpush.xpose.msra.mxu0 0.0
    %910 = vmatpush.xpose.msra.mxu0 0.0
    %911 = vmatpush.xpose.msra.mxu0 0.0
    %912 = vmatpush.xpose.msra.mxu0 0.0
    %913 = vmatpush.xpose.msra.mxu0 0.0
    %914 = vmatpush.xpose.msra.mxu0 0.0
    %915 = vmatpush.xpose.msra.mxu0 0.0
    %916 = vmatpush.xpose.msra.mxu0 0.0
    %917 = vmatpush.xpose.msra.mxu0 0.0
    %918 = vmatpush.xpose.msra.mxu0 0.0
    %919 = vmatpush.xpose.msra.mxu0 0.0
    %920 = vmatpush.xpose.msra.mxu0 0.0
    %921 = vmatpush.xpose.msra.mxu0 0.0
    %922 = vmatpush.xpose.msra.mxu0 %v905
    %923 = vmatmul.f32.gmra.mxu0 %v902
    %v924 = vpop.f32.mrf.mxu0
    %v925 = vadd.f32 0.0, %v924
    %926 = vdwg.mxu0
    %v927 = vmul.f32 %v925, 0.35355338
    %v928 = vadd.f32 %v927, %v899
    %v929 = vsel %vm128, %v928, -inf
    %930 = vmax.xlane.f32.xlu0 %v929
    %v931 = vpop.xlane.xlu0 %930
    %v932 = vsub.f32 %v928, %v931
    %v933 = vmul.f32 %v932, 1.442695
    %v934 = vpow.pop %v933
    %v935 = vsel %vm128, %v934, 0.0
    %936 = vadd.xlane.f32.xlu0 %v935
    %v937 = vpop.xlane.xlu0 %936
    %v938 = vrcp.pop %v937
    %v939 = vmul.f32 %v934, %v938
    %940 = vst.msk [vmem:[%s26] sm:$0xff] %vm128, %v939
    %941 = vrot.lane.b32.xlu0 %v894, 96
    %v942 = vpop.permute.xlu0 %941
    %v945 = vsel %vm128, %v939, 0
    %947 = vmatpush.msra.mxu0 0.0
    %948 = vmatpush.msra.mxu0 0.0
    %949 = vmatpush.msra.mxu0 0.0
    %950 = vmatpush.msra.mxu0 0.0
    %951 = vmatpush.msra.mxu0 0.0
    %952 = vmatpush.msra.mxu0 0.0
    %953 = vmatpush.msra.mxu0 0.0
    %954 = vmatpush.msra.mxu0 0.0
    %955 = vmatpush.msra.mxu0 0.0
    %956 = vmatpush.msra.mxu0 0.0
    %957 = vmatpush.msra.mxu0 0.0
    %958 = vmatpush.msra.mxu0 0.0
    %959 = vmatpush.msra.mxu0 0.0
    %960 = vmatpush.msra.mxu0 0.0
    %961 = vmatpush.msra.mxu0 0.0
    %962 = vmatpush.msra.mxu0 %v942
    %963 = vmatmul.f32.gmra.mxu0 %v945
    %v964 = vpop.f32.mrf.mxu0
    %v965 = vadd.f32 0.0, %v964
    %966 = vdwg.mxu0
    %967 = vst.msk [vmem:[#allocation2] sm:$0xff] %vm128, %v965
    %968 = vrot.lane.b32.xlu0 %v857, 120
    %v969 = vpop.permute.xlu0 %968
    %970 = vrot.lane.b32.xlu0 %v894, 120
    %v971 = vpop.permute.xlu0 %970
    %v972 = vsel %vm128, %v969, 0
    %v974 = vsel %vm128, %v971, 0
    %976 = vmatpush.xpose.msra.mxu0 0.0
    %977 = vmatpush.xpose.msra.mxu0 0.0
    %978 = vmatpush.xpose.msra.mxu0 0.0
    %979 = vmatpush.xpose.msra.mxu0 0.0
    %980 = vmatpush.xpose.msra.mxu0 0.0
    %981 = vmatpush.xpose.msra.mxu0 0.0
    %982 = vmatpush.xpose.msra.mxu0 0.0
    %983 = vmatpush.xpose.msra.mxu0 0.0
    %984 = vmatpush.xpose.msra.mxu0 0.0
    %985 = vmatpush.xpose.msra.mxu0 0.0
    %986 = vmatpush.xpose.msra.mxu0 0.0
    %987 = vmatpush.xpose.msra.mxu0 0.0
    %988 = vmatpush.xpose.msra.mxu0 0.0
    %989 = vmatpush.xpose.msra.mxu0 0.0
    %990 = vmatpush.xpose.msra.mxu0 0.0
    %991 = vmatpush.xpose.msra.mxu0 %v974
    %992 = vmatmul.f32.gmra.mxu0 %v972
    %v993 = vpop.f32.mrf.mxu0
    %v994 = vadd.f32 0.0, %v993
    %995 = vdwg.mxu0
    %v996 = vmul.f32 %v994, 0.35355338
    %v997 = vadd.f32 %v996, %v899
    %v998 = vsel %vm128, %v997, -inf
    %999 = vmax.xlane.f32.xlu0 %v998
    %v1000 = vpop.xlane.xlu0 %999
    %v1001 = vsub.f32 %v997, %v1000
    %v1002 = vmul.f32 %v1001, 1.442695
    %v1003 = vpow.pop %v1002
    %v1004 = vsel %vm128, %v1003, 0.0
    %1005 = vadd.xlane.f32.xlu0 %v1004
    %v1006 = vpop.xlane.xlu0 %1005
    %v1007 = vrcp.pop %v1006
    %v1008 = vmul.f32 %v1003, %v1007
    %1010 = vrot.lane.b32.xlu0 %v1008, 8
    %v1011 = vpop.permute.xlu0 %1010
    %1013 = vst.msk [vmem:[%s26] sm:$0xff] %vm239, %v1011
    %1014 = vrot.lane.b32.xlu0 %v894, 88
    %v1015 = vpop.permute.xlu0 %1014
    %v1017 = vsel %vm128, %v1008, 0
    %1019 = vmatpush.msra.mxu0 0.0
    %1020 = vmatpush.msra.mxu0 0.0
    %1021 = vmatpush.msra.mxu0 0.0
    %1022 = vmatpush.msra.mxu0 0.0
    %1023 = vmatpush.msra.mxu0 0.0
    %1024 = vmatpush.msra.mxu0 0.0
    %1025 = vmatpush.msra.mxu0 0.0
    %1026 = vmatpush.msra.mxu0 0.0
    %1027 = vmatpush.msra.mxu0 0.0
    %1028 = vmatpush.msra.mxu0 0.0
    %1029 = vmatpush.msra.mxu0 0.0
    %1030 = vmatpush.msra.mxu0 0.0
    %1031 = vmatpush.msra.mxu0 0.0
    %1032 = vmatpush.msra.mxu0 0.0
    %1033 = vmatpush.msra.mxu0 0.0
    %1034 = vmatpush.msra.mxu0 %v1015
    %1035 = vmatmul.f32.gmra.mxu0 %v1017
    %v1036 = vpop.f32.mrf.mxu0
    %v1037 = vadd.f32 0.0, %v1036
    %1038 = vdwg.mxu0
    %1040 = vrot.lane.b32.xlu0 %v1037, 8
    %v1041 = vpop.permute.xlu0 %1040
    %1043 = vst.msk [vmem:[#allocation2] sm:$0xff] %vm239, %v1041
    %1044 = vrot.lane.b32.xlu0 %v857, 112
    %v1045 = vpop.permute.xlu0 %1044
    %1046 = vrot.lane.b32.xlu0 %v894, 112
    %v1047 = vpop.permute.xlu0 %1046
    %v1048 = vsel %vm128, %v1045, 0
    %v1050 = vsel %vm128, %v1047, 0
    %1052 = vmatpush.xpose.msra.mxu0 0.0
    %1053 = vmatpush.xpose.msra.mxu0 0.0
    %1054 = vmatpush.xpose.msra.mxu0 0.0
    %1055 = vmatpush.xpose.msra.mxu0 0.0
    %1056 = vmatpush.xpose.msra.mxu0 0.0
    %1057 = vmatpush.xpose.msra.mxu0 0.0
    %1058 = vmatpush.xpose.msra.mxu0 0.0
    %1059 = vmatpush.xpose.msra.mxu0 0.0
    %1060 = vmatpush.xpose.msra.mxu0 0.0
    %1061 = vmatpush.xpose.msra.mxu0 0.0
    %1062 = vmatpush.xpose.msra.mxu0 0.0
    %1063 = vmatpush.xpose.msra.mxu0 0.0
    %1064 = vmatpush.xpose.msra.mxu0 0.0
    %1065 = vmatpush.xpose.msra.mxu0 0.0
    %1066 = vmatpush.xpose.msra.mxu0 0.0
    %1067 = vmatpush.xpose.msra.mxu0 %v1050
    %1068 = vmatmul.f32.gmra.mxu0 %v1048
    %v1069 = vpop.f32.mrf.mxu0
    %v1070 = vadd.f32 0.0, %v1069
    %1071 = vdwg.mxu0
    %v1072 = vmul.f32 %v1070, 0.35355338
    %v1073 = vadd.f32 %v1072, %v899
    %v1074 = vsel %vm128, %v1073, -inf
    %1075 = vmax.xlane.f32.xlu0 %v1074
    %v1076 = vpop.xlane.xlu0 %1075
    %v1077 = vsub.f32 %v1073, %v1076
    %v1078 = vmul.f32 %v1077, 1.442695
    %v1079 = vpow.pop %v1078
    %v1080 = vsel %vm128, %v1079, 0.0
    %1081 = vadd.xlane.f32.xlu0 %v1080
    %v1082 = vpop.xlane.xlu0 %1081
    %v1083 = vrcp.pop %v1082
    %v1084 = vmul.f32 %v1079, %v1083
    %1086 = vrot.lane.b32.xlu0 %v1084, 16
    %v1087 = vpop.permute.xlu0 %1086
    %1089 = vst.msk [vmem:[%s26] sm:$0xff] %vm316, %v1087
    %1090 = vrot.lane.b32.xlu0 %v894, 80
    %v1091 = vpop.permute.xlu0 %1090
    %v1093 = vsel %vm128, %v1084, 0
    %1095 = vmatpush.msra.mxu0 0.0
    %1096 = vmatpush.msra.mxu0 0.0
    %1097 = vmatpush.msra.mxu0 0.0
    %1098 = vmatpush.msra.mxu0 0.0
    %1099 = vmatpush.msra.mxu0 0.0
    %1100 = vmatpush.msra.mxu0 0.0
    %1101 = vmatpush.msra.mxu0 0.0
    %1102 = vmatpush.msra.mxu0 0.0
    %1103 = vmatpush.msra.mxu0 0.0
    %1104 = vmatpush.msra.mxu0 0.0
    %1105 = vmatpush.msra.mxu0 0.0
    %1106 = vmatpush.msra.mxu0 0.0
    %1107 = vmatpush.msra.mxu0 0.0
    %1108 = vmatpush.msra.mxu0 0.0
    %1109 = vmatpush.msra.mxu0 0.0
    %1110 = vmatpush.msra.mxu0 %v1091
    %1111 = vmatmul.f32.gmra.mxu0 %v1093
    %v1112 = vpop.f32.mrf.mxu0
    %v1113 = vadd.f32 0.0, %v1112
    %1114 = vdwg.mxu0
    %1116 = vrot.lane.b32.xlu0 %v1113, 16
    %v1117 = vpop.permute.xlu0 %1116
    %1119 = vst.msk [vmem:[#allocation2] sm:$0xff] %vm316, %v1117
    %1120 = vrot.lane.b32.xlu0 %v857, 104
    %v1121 = vpop.permute.xlu0 %1120
    %1122 = vrot.lane.b32.xlu0 %v894, 104
    %v1123 = vpop.permute.xlu0 %1122
    %v1124 = vsel %vm128, %v1121, 0
    %v1126 = vsel %vm128, %v1123, 0
    %1128 = vmatpush.xpose.msra.mxu0 0.0
    %1129 = vmatpush.xpose.msra.mxu0 0.0
    %1130 = vmatpush.xpose.msra.mxu0 0.0
    %1131 = vmatpush.xpose.msra.mxu0 0.0
    %1132 = vmatpush.xpose.msra.mxu0 0.0
    %1133 = vmatpush.xpose.msra.mxu0 0.0
    %1134 = vmatpush.xpose.msra.mxu0 0.0
    %1135 = vmatpush.xpose.msra.mxu0 0.0
    %1136 = vmatpush.xpose.msra.mxu0 0.0
    %1137 = vmatpush.xpose.msra.mxu0 0.0
    %1138 = vmatpush.xpose.msra.mxu0 0.0
    %1139 = vmatpush.xpose.msra.mxu0 0.0
    %1140 = vmatpush.xpose.msra.mxu0 0.0
    %1141 = vmatpush.xpose.msra.mxu0 0.0
    %1142 = vmatpush.xpose.msra.mxu0 0.0
    %1143 = vmatpush.xpose.msra.mxu0 %v1126
    %1144 = vmatmul.f32.gmra.mxu0 %v1124
    %v1145 = vpop.f32.mrf.mxu0
    %v1146 = vadd.f32 0.0, %v1145
    %1147 = vdwg.mxu0
    %v1148 = vmul.f32 %v1146, 0.35355338
    %v1149 = vadd.f32 %v1148, %v899
    %v1150 = vsel %vm128, %v1149, -inf
    %1151 = vmax.xlane.f32.xlu0 %v1150
    %v1152 = vpop.xlane.xlu0 %1151
    %v1153 = vsub.f32 %v1149, %v1152
    %v1154 = vmul.f32 %v1153, 1.442695
    %v1155 = vpow.pop %v1154
    %v1156 = vsel %vm128, %v1155, 0.0
    %1157 = vadd.xlane.f32.xlu0 %v1156
    %v1158 = vpop.xlane.xlu0 %1157
    %v1159 = vrcp.pop %v1158
    %v1160 = vmul.f32 %v1155, %v1159
    %1162 = vrot.lane.b32.xlu0 %v1160, 24
    %v1163 = vpop.permute.xlu0 %1162
    %1165 = vst.msk [vmem:[%s26] sm:$0xff] %vm393, %v1163
    %1166 = vrot.lane.b32.xlu0 %v894, 72
    %v1167 = vpop.permute.xlu0 %1166
    %v1169 = vsel %vm128, %v1160, 0
    %1171 = vmatpush.msra.mxu0 0.0
    %1172 = vmatpush.msra.mxu0 0.0
    %1173 = vmatpush.msra.mxu0 0.0
    %1174 = vmatpush.msra.mxu0 0.0
    %1175 = vmatpush.msra.mxu0 0.0
    %1176 = vmatpush.msra.mxu0 0.0
    %1177 = vmatpush.msra.mxu0 0.0
    %1178 = vmatpush.msra.mxu0 0.0
    %1179 = vmatpush.msra.mxu0 0.0
    %1180 = vmatpush.msra.mxu0 0.0
    %1181 = vmatpush.msra.mxu0 0.0
    %1182 = vmatpush.msra.mxu0 0.0
    %1183 = vmatpush.msra.mxu0 0.0
    %1184 = vmatpush.msra.mxu0 0.0
    %1185 = vmatpush.msra.mxu0 0.0
    %1186 = vmatpush.msra.mxu0 %v1167
    %1187 = vmatmul.f32.gmra.mxu0 %v1169
    %v1188 = vpop.f32.mrf.mxu0
    %v1189 = vadd.f32 0.0, %v1188
    %1190 = vdwg.mxu0
    %1192 = vrot.lane.b32.xlu0 %v1189, 24
    %v1193 = vpop.permute.xlu0 %1192
    %1195 = vst.msk [vmem:[#allocation2] sm:$0xff] %vm393, %v1193
    %v1197 = vsel %vm128, %v860, 0
    %v1200 = vsel %vm128, %v897, 0
    %1202 = vmatpush.xpose.msra.mxu0 0.0
    %1203 = vmatpush.xpose.msra.mxu0 0.0
    %1204 = vmatpush.xpose.msra.mxu0 0.0
    %1205 = vmatpush.xpose.msra.mxu0 0.0
    %1206 = vmatpush.xpose.msra.mxu0 0.0
    %1207 = vmatpush.xpose.msra.mxu0 0.0
    %1208 = vmatpush.xpose.msra.mxu0 0.0
    %1209 = vmatpush.xpose.msra.mxu0 0.0
    %1210 = vmatpush.xpose.msra.mxu0 0.0
    %1211 = vmatpush.xpose.msra.mxu0 0.0
    %1212 = vmatpush.xpose.msra.mxu0 0.0
    %1213 = vmatpush.xpose.msra.mxu0 0.0
    %1214 = vmatpush.xpose.msra.mxu0 0.0
    %1215 = vmatpush.xpose.msra.mxu0 0.0
    %1216 = vmatpush.xpose.msra.mxu0 0.0
    %1217 = vmatpush.xpose.msra.mxu0 %v1200
    %1218 = vmatmul.f32.gmra.mxu0 %v1197
    %v1219 = vpop.f32.mrf.mxu0
    %v1220 = vadd.f32 0.0, %v1219
    %1221 = vdwg.mxu0
    %v1222 = vmul.f32 %v1220, 0.35355338
    %v1223 = vadd.f32 %v1222, %v900
    %v1224 = vsel %vm128, %v1223, -inf
    %1225 = vmax.xlane.f32.xlu0 %v1224
    %v1226 = vpop.xlane.xlu0 %1225
    %v1227 = vsub.f32 %v1223, %v1226
    %v1228 = vmul.f32 %v1227, 1.442695
    %v1229 = vpow.pop %v1228
    %v1230 = vsel %vm128, %v1229, 0.0
    %1231 = vadd.xlane.f32.xlu0 %v1230
    %v1232 = vpop.xlane.xlu0 %1231
    %v1233 = vrcp.pop %v1232
    %v1234 = vmul.f32 %v1229, %v1233
    %1235 = vst.msk [vmem:[%s26 + $0x8] sm:$0xff] %vm128, %v1234
    %1236 = vrot.lane.b32.xlu0 %v897, 96
    %v1237 = vpop.permute.xlu0 %1236
    %v1240 = vsel %vm128, %v1234, 0
    %1242 = vmatpush.msra.mxu0 0.0
    %1243 = vmatpush.msra.mxu0 0.0
    %1244 = vmatpush.msra.mxu0 0.0
    %1245 = vmatpush.msra.mxu0 0.0
    %1246 = vmatpush.msra.mxu0 0.0
    %1247 = vmatpush.msra.mxu0 0.0
    %1248 = vmatpush.msra.mxu0 0.0
    %1249 = vmatpush.msra.mxu0 0.0
    %1250 = vmatpush.msra.mxu0 0.0
    %1251 = vmatpush.msra.mxu0 0.0
    %1252 = vmatpush.msra.mxu0 0.0
    %1253 = vmatpush.msra.mxu0 0.0
    %1254 = vmatpush.msra.mxu0 0.0
    %1255 = vmatpush.msra.mxu0 0.0
    %1256 = vmatpush.msra.mxu0 0.0
    %1257 = vmatpush.msra.mxu0 %v1237
    %1258 = vmatmul.f32.gmra.mxu0 %v1240
    %v1259 = vpop.f32.mrf.mxu0
    %v1260 = vadd.f32 0.0, %v1259
    %1261 = vdwg.mxu0
    %1262 = vst.msk [vmem:[#allocation2 + $0x8] sm:$0xff] %vm128, %v1260
    %1263 = vrot.lane.b32.xlu0 %v860, 120
    %v1264 = vpop.permute.xlu0 %1263
    %1265 = vrot.lane.b32.xlu0 %v897, 120
    %v1266 = vpop.permute.xlu0 %1265
    %v1267 = vsel %vm128, %v1264, 0
    %v1269 = vsel %vm128, %v1266, 0
    %1271 = vmatpush.xpose.msra.mxu0 0.0
    %1272 = vmatpush.xpose.msra.mxu0 0.0
    %1273 = vmatpush.xpose.msra.mxu0 0.0
    %1274 = vmatpush.xpose.msra.mxu0 0.0
    %1275 = vmatpush.xpose.msra.mxu0 0.0
    %1276 = vmatpush.xpose.msra.mxu0 0.0
    %1277 = vmatpush.xpose.msra.mxu0 0.0
    %1278 = vmatpush.xpose.msra.mxu0 0.0
    %1279 = vmatpush.xpose.msra.mxu0 0.0
    %1280 = vmatpush.xpose.msra.mxu0 0.0
    %1281 = vmatpush.xpose.msra.mxu0 0.0
    %1282 = vmatpush.xpose.msra.mxu0 0.0
    %1283 = vmatpush.xpose.msra.mxu0 0.0
    %1284 = vmatpush.xpose.msra.mxu0 0.0
    %1285 = vmatpush.xpose.msra.mxu0 0.0
    %1286 = vmatpush.xpose.msra.mxu0 %v1269
    %1287 = vmatmul.f32.gmra.mxu0 %v1267
    %v1288 = vpop.f32.mrf.mxu0
    %v1289 = vadd.f32 0.0, %v1288
    %1290 = vdwg.mxu0
    %v1291 = vmul.f32 %v1289, 0.35355338
    %v1292 = vadd.f32 %v1291, %v900
    %v1293 = vsel %vm128, %v1292, -inf
    %1294 = vmax.xlane.f32.xlu0 %v1293
    %v1295 = vpop.xlane.xlu0 %1294
    %v1296 = vsub.f32 %v1292, %v1295
    %v1297 = vmul.f32 %v1296, 1.442695
    %v1298 = vpow.pop %v1297
    %v1299 = vsel %vm128, %v1298, 0.0
    %1300 = vadd.xlane.f32.xlu0 %v1299
    %v1301 = vpop.xlane.xlu0 %1300
    %v1302 = vrcp.pop %v1301
    %v1303 = vmul.f32 %v1298, %v1302
    %1305 = vrot.lane.b32.xlu0 %v1303, 8
    %v1306 = vpop.permute.xlu0 %1305
    %1308 = vst.msk [vmem:[%s26 + $0x8] sm:$0xff] %vm239, %v1306
    %1309 = vrot.lane.b32.xlu0 %v897, 88
    %v1310 = vpop.permute.xlu0 %1309
    %v1312 = vsel %vm128, %v1303, 0
    %1314 = vmatpush.msra.mxu0 0.0
    %1315 = vmatpush.msra.mxu0 0.0
    %1316 = vmatpush.msra.mxu0 0.0
    %1317 = vmatpush.msra.mxu0 0.0
    %1318 = vmatpush.msra.mxu0 0.0
    %1319 = vmatpush.msra.mxu0 0.0
    %1320 = vmatpush.msra.mxu0 0.0
    %1321 = vmatpush.msra.mxu0 0.0
    %1322 = vmatpush.msra.mxu0 0.0
    %1323 = vmatpush.msra.mxu0 0.0
    %1324 = vmatpush.msra.mxu0 0.0
    %1325 = vmatpush.msra.mxu0 0.0
    %1326 = vmatpush.msra.mxu0 0.0
    %1327 = vmatpush.msra.mxu0 0.0
    %1328 = vmatpush.msra.mxu0 0.0
    %1329 = vmatpush.msra.mxu0 %v1310
    %1330 = vmatmul.f32.gmra.mxu0 %v1312
    %v1331 = vpop.f32.mrf.mxu0
    %v1332 = vadd.f32 0.0, %v1331
    %1333 = vdwg.mxu0
    %1335 = vrot.lane.b32.xlu0 %v1332, 8
    %v1336 = vpop.permute.xlu0 %1335
    %1338 = vst.msk [vmem:[#allocation2 + $0x8] sm:$0xff] %vm239, %v1336
    %1339 = vrot.lane.b32.xlu0 %v860, 112
    %v1340 = vpop.permute.xlu0 %1339
    %1341 = vrot.lane.b32.xlu0 %v897, 112
    %v1342 = vpop.permute.xlu0 %1341
    %v1343 = vsel %vm128, %v1340, 0
    %v1345 = vsel %vm128, %v1342, 0
    %1347 = vmatpush.xpose.msra.mxu0 0.0
    %1348 = vmatpush.xpose.msra.mxu0 0.0
    %1349 = vmatpush.xpose.msra.mxu0 0.0
    %1350 = vmatpush.xpose.msra.mxu0 0.0
    %1351 = vmatpush.xpose.msra.mxu0 0.0
    %1352 = vmatpush.xpose.msra.mxu0 0.0
    %1353 = vmatpush.xpose.msra.mxu0 0.0
    %1354 = vmatpush.xpose.msra.mxu0 0.0
    %1355 = vmatpush.xpose.msra.mxu0 0.0
    %1356 = vmatpush.xpose.msra.mxu0 0.0
    %1357 = vmatpush.xpose.msra.mxu0 0.0
    %1358 = vmatpush.xpose.msra.mxu0 0.0
    %1359 = vmatpush.xpose.msra.mxu0 0.0
    %1360 = vmatpush.xpose.msra.mxu0 0.0
    %1361 = vmatpush.xpose.msra.mxu0 0.0
    %1362 = vmatpush.xpose.msra.mxu0 %v1345
    %1363 = vmatmul.f32.gmra.mxu0 %v1343
    %v1364 = vpop.f32.mrf.mxu0
    %v1365 = vadd.f32 0.0, %v1364
    %1366 = vdwg.mxu0
    %v1367 = vmul.f32 %v1365, 0.35355338
    %v1368 = vadd.f32 %v1367, %v900
    %v1369 = vsel %vm128, %v1368, -inf
    %1370 = vmax.xlane.f32.xlu0 %v1369
    %v1371 = vpop.xlane.xlu0 %1370
    %v1372 = vsub.f32 %v1368, %v1371
    %v1373 = vmul.f32 %v1372, 1.442695
    %v1374 = vpow.pop %v1373
    %v1375 = vsel %vm128, %v1374, 0.0
    %1376 = vadd.xlane.f32.xlu0 %v1375
    %v1377 = vpop.xlane.xlu0 %1376
    %v1378 = vrcp.pop %v1377
    %v1379 = vmul.f32 %v1374, %v1378
    %1381 = vrot.lane.b32.xlu0 %v1379, 16
    %v1382 = vpop.permute.xlu0 %1381
    %1384 = vst.msk [vmem:[%s26 + $0x8] sm:$0xff] %vm316, %v1382
    %1385 = vrot.lane.b32.xlu0 %v897, 80
    %v1386 = vpop.permute.xlu0 %1385
    %v1388 = vsel %vm128, %v1379, 0
    %1390 = vmatpush.msra.mxu0 0.0
    %1391 = vmatpush.msra.mxu0 0.0
    %1392 = vmatpush.msra.mxu0 0.0
    %1393 = vmatpush.msra.mxu0 0.0
    %1394 = vmatpush.msra.mxu0 0.0
    %1395 = vmatpush.msra.mxu0 0.0
    %1396 = vmatpush.msra.mxu0 0.0
    %1397 = vmatpush.msra.mxu0 0.0
    %1398 = vmatpush.msra.mxu0 0.0
    %1399 = vmatpush.msra.mxu0 0.0
    %1400 = vmatpush.msra.mxu0 0.0
    %1401 = vmatpush.msra.mxu0 0.0
    %1402 = vmatpush.msra.mxu0 0.0
    %1403 = vmatpush.msra.mxu0 0.0
    %1404 = vmatpush.msra.mxu0 0.0
    %1405 = vmatpush.msra.mxu0 %v1386
    %1406 = vmatmul.f32.gmra.mxu0 %v1388
    %v1407 = vpop.f32.mrf.mxu0
    %v1408 = vadd.f32 0.0, %v1407
    %1409 = vdwg.mxu0
    %1411 = vrot.lane.b32.xlu0 %v1408, 16
    %v1412 = vpop.permute.xlu0 %1411
    %1414 = vst.msk [vmem:[#allocation2 + $0x8] sm:$0xff] %vm316, %v1412
    %1415 = vrot.lane.b32.xlu0 %v860, 104
    %v1416 = vpop.permute.xlu0 %1415
    %1417 = vrot.lane.b32.xlu0 %v897, 104
    %v1418 = vpop.permute.xlu0 %1417
    %v1419 = vsel %vm128, %v1416, 0
    %v1421 = vsel %vm128, %v1418, 0
    %1423 = vmatpush.xpose.msra.mxu0 0.0
    %1424 = vmatpush.xpose.msra.mxu0 0.0
    %1425 = vmatpush.xpose.msra.mxu0 0.0
    %1426 = vmatpush.xpose.msra.mxu0 0.0
    %1427 = vmatpush.xpose.msra.mxu0 0.0
    %1428 = vmatpush.xpose.msra.mxu0 0.0
    %1429 = vmatpush.xpose.msra.mxu0 0.0
    %1430 = vmatpush.xpose.msra.mxu0 0.0
    %1431 = vmatpush.xpose.msra.mxu0 0.0
    %1432 = vmatpush.xpose.msra.mxu0 0.0
    %1433 = vmatpush.xpose.msra.mxu0 0.0
    %1434 = vmatpush.xpose.msra.mxu0 0.0
    %1435 = vmatpush.xpose.msra.mxu0 0.0
    %1436 = vmatpush.xpose.msra.mxu0 0.0
    %1437 = vmatpush.xpose.msra.mxu0 0.0
    %1438 = vmatpush.xpose.msra.mxu0 %v1421
    %1439 = vmatmul.f32.gmra.mxu0 %v1419
    %v1440 = vpop.f32.mrf.mxu0
    %v1441 = vadd.f32 0.0, %v1440
    %1442 = vdwg.mxu0
    %v1443 = vmul.f32 %v1441, 0.35355338
    %v1444 = vadd.f32 %v1443, %v900
    %v1445 = vsel %vm128, %v1444, -inf
    %1446 = vmax.xlane.f32.xlu0 %v1445
    %v1447 = vpop.xlane.xlu0 %1446
    %v1448 = vsub.f32 %v1444, %v1447
    %v1449 = vmul.f32 %v1448, 1.442695
    %v1450 = vpow.pop %v1449
    %v1451 = vsel %vm128, %v1450, 0.0
    %1452 = vadd.xlane.f32.xlu0 %v1451
    %v1453 = vpop.xlane.xlu0 %1452
    %v1454 = vrcp.pop %v1453
    %v1455 = vmul.f32 %v1450, %v1454
    %1457 = vrot.lane.b32.xlu0 %v1455, 24
    %v1458 = vpop.permute.xlu0 %1457
    %1460 = vst.msk [vmem:[%s26 + $0x8] sm:$0xff] %vm393, %v1458
    %1461 = vrot.lane.b32.xlu0 %v897, 72
    %v1462 = vpop.permute.xlu0 %1461
    %v1464 = vsel %vm128, %v1455, 0
    %1466 = vmatpush.msra.mxu0 0.0
    %1467 = vmatpush.msra.mxu0 0.0
    %1468 = vmatpush.msra.mxu0 0.0
    %1469 = vmatpush.msra.mxu0 0.0
    %1470 = vmatpush.msra.mxu0 0.0
    %1471 = vmatpush.msra.mxu0 0.0
    %1472 = vmatpush.msra.mxu0 0.0
    %1473 = vmatpush.msra.mxu0 0.0
    %1474 = vmatpush.msra.mxu0 0.0
    %1475 = vmatpush.msra.mxu0 0.0
    %1476 = vmatpush.msra.mxu0 0.0
    %1477 = vmatpush.msra.mxu0 0.0
    %1478 = vmatpush.msra.mxu0 0.0
    %1479 = vmatpush.msra.mxu0 0.0
    %1480 = vmatpush.msra.mxu0 0.0
    %1481 = vmatpush.msra.mxu0 %v1462
    %1482 = vmatmul.f32.gmra.mxu0 %v1464
    %v1483 = vpop.f32.mrf.mxu0
    %v1484 = vadd.f32 0.0, %v1483
    %1485 = vdwg.mxu0
    %1487 = vrot.lane.b32.xlu0 %v1484, 24
    %v1488 = vpop.permute.xlu0 %1487
    %1490 = vst.msk [vmem:[#allocation2 + $0x8] sm:$0xff] %vm393, %v1488
    %v1491 = vld [vmem:[#allocation2] sm:$0xff]
    %v1492 = vld [vmem:[#allocation2 + $0x8] sm:$0xff]
    %v1493 = vld [vmem:[%s14] sm:$0xff]
    %v1494 = vld [vmem:[%s14 + $0x8] sm:$0xff]
    %v1495 = vld [vmem:[%s14 + $0x10] sm:$0xff]
    %v1496 = vld [vmem:[%s14 + $0x18] sm:$0xff]
    %v1497 = vld [vmem:[%s15] sm:$0x1]
    %v1499 = vperm.slane %v1497, 0
    %v1502 = vsel %vm93, %v1491, 0
    %v1505 = vsel %vm93, %v1492, 0
    %1507 = vmatpush.msra.mxu0 0.0
    %1508 = vmatpush.msra.mxu0 0.0
    %1509 = vmatpush.msra.mxu0 0.0
    %1510 = vmatpush.msra.mxu0 0.0
    %1511 = vmatpush.msra.mxu0 0.0
    %1512 = vmatpush.msra.mxu0 0.0
    %1513 = vmatpush.msra.mxu0 0.0
    %1514 = vmatpush.msra.mxu0 0.0
    %1515 = vmatpush.msra.mxu0 0.0
    %1516 = vmatpush.msra.mxu0 0.0
    %1517 = vmatpush.msra.mxu0 0.0
    %1518 = vmatpush.msra.mxu0 0.0
    %1519 = vmatpush.msra.mxu0 %v1496
    %1520 = vmatpush.msra.mxu0 %v1495
    %1521 = vmatpush.msra.mxu0 %v1494
    %1522 = vmatpush.msra.mxu0 %v1493
    %1523 = vmatmul.f32.gmra.mxu0 %v1502
    %v1524 = vpop.f32.mrf.mxu0
    %v1525 = vadd.f32 %v1499, %v1524
    %1526 = vmatmul.f32.gmra.mxu0 %v1505
    %v1527 = vpop.f32.mrf.mxu0
    %v1528 = vadd.f32 %v1499, %v1527
    %1529 = vdwg.mxu0
    %v1530 = vadd.f32 %v1525, %v823
    %v1531 = vadd.f32 %v1528, %v824
    %v1532 = vld [vmem:[%s16] sm:$0x1]
    %v1533 = vld [vmem:[%s17] sm:$0x1]
    %v1534 = vsel %vm93, %v1530, 0.0
    %1535 = vadd.xlane.f32.xlu0 %v1534
    %v1536 = vpop.xlane.xlu0 %1535
    %v1537 = vsel %vm93, %v1531, 0.0
    %1538 = vadd.xlane.f32.xlu0 %v1537
    %v1539 = vpop.xlane.xlu0 %1538
    %v1540 = vmul.f32 %v1536, %v776
    %v1541 = vmul.f32 %v1539, %v776
    %v1542 = vsub.f32 %v1530, %v1540
    %v1543 = vsub.f32 %v1531, %v1541
    %v1544 = vmul.f32 %v1542, %v1542
    %v1545 = vmul.f32 %v1543, %v1543
    %v1546 = vsel %vm93, %v1544, 0.0
    %1547 = vadd.xlane.f32.xlu0 %v1546
    %v1548 = vpop.xlane.xlu0 %1547
    %v1549 = vsel %vm93, %v1545, 0.0
    %1550 = vadd.xlane.f32.xlu0 %v1549
    %v1551 = vpop.xlane.xlu0 %1550
    %v1552 = vmul.f32 %v1548, %v776
    %v1553 = vmul.f32 %v1551, %v776
    %v1554 = vadd.f32 %v1552, 1e-05
    %v1555 = vadd.f32 %v1553, 1e-05
    %v1556 = vrsqrt.pop %v1554
    %v1557 = vmul.f32 %v1556, %v1554
    %v1558 = vmul.f32 %v1557, %v1556
    %v1559 = vmul.f32 0.5, %v1558
    %v1560 = vsub.f32 1.5, %v1559
    %v1561 = vmul.f32 %v1556, %v1560
    %vm1562 = vweird.f32 %v1554
    %vm1563 = vweird.f32 %v1556
    %vm1564 = vmor %vm1562, %vm1563
    %v1565 = vsel %vm1564, %v1556, %v1561
    %v1566 = vrsqrt.pop %v1555
    %v1567 = vmul.f32 %v1566, %v1555
    %v1568 = vmul.f32 %v1567, %v1566
    %v1569 = vmul.f32 0.5, %v1568
    %v1570 = vsub.f32 1.5, %v1569
    %v1571 = vmul.f32 %v1566, %v1570
    %vm1572 = vweird.f32 %v1555
    %vm1573 = vweird.f32 %v1566
    %vm1574 = vmor %vm1572, %vm1573
    %v1575 = vsel %vm1574, %v1566, %v1571
    %v1576 = vmul.f32 %v1542, %v1565
    %v1577 = vmul.f32 %v1543, %v1575
    %v1579 = vperm.slane %v1532, 0
    %v1581 = vmul.f32 %v1576, %v1579
    %v1582 = vmul.f32 %v1577, %v1579
    %v1584 = vperm.slane %v1533, 0
    %v1586 = vadd.f32 %v1581, %v1584
    %v1587 = vadd.f32 %v1582, %v1584
    %v1588 = vld [vmem:[%s18] sm:$0xff]
    %v1589 = vld [vmem:[%s18 + $0x8] sm:$0xff]
    %v1590 = vld [vmem:[%s18 + $0x10] sm:$0xff]
    %v1591 = vld [vmem:[%s18 + $0x18] sm:$0xff]
    %v1592 = vld [vmem:[%s19] sm:$0x1]
    %v1594 = vperm.slane %v1592, 0
    %v1597 = vsel %vm93, %v1586, 0
    %v1600 = vsel %vm93, %v1587, 0
    %1602 = vmatpush.msra.mxu0 0.0
    %1603 = vmatpush.msra.mxu0 0.0
    %1604 = vmatpush.msra.mxu0 0.0
    %1605 = vmatpush.msra.mxu0 0.0
    %1606 = vmatpush.msra.mxu0 0.0
    %1607 = vmatpush.msra.mxu0 0.0
    %1608 = vmatpush.msra.mxu0 0.0
    %1609 = vmatpush.msra.mxu0 0.0
    %1610 = vmatpush.msra.mxu0 0.0
    %1611 = vmatpush.msra.mxu0 0.0
    %1612 = vmatpush.msra.mxu0 0.0
    %1613 = vmatpush.msra.mxu0 0.0
    %1614 = vmatpush.msra.mxu0 %v1591
    %1615 = vmatpush.msra.mxu0 %v1590
    %1616 = vmatpush.msra.mxu0 %v1589
    %1617 = vmatpush.msra.mxu0 %v1588
    %1618 = vmatmul.f32.gmra.mxu0 %v1597
    %v1619 = vpop.f32.mrf.mxu0
    %v1620 = vadd.f32 %v1594, %v1619
    %1621 = vmatmul.f32.gmra.mxu0 %v1600
    %v1622 = vpop.f32.mrf.mxu0
    %v1623 = vadd.f32 %v1594, %v1622
    %1624 = vdwg.mxu0
    %v1625 = vmax.f32 %v1620, 0.0
    %v1626 = vmax.f32 %v1623, 0.0
    %v1627 = vld [vmem:[%s20] sm:$0xff]
    %v1628 = vld [vmem:[%s20 + $0x8] sm:$0xff]
    %v1629 = vld [vmem:[%s20 + $0x10] sm:$0xff]
    %v1630 = vld [vmem:[%s20 + $0x18] sm:$0xff]
    %v1631 = vld [vmem:[%s20 + $0x20] sm:$0xff]
    %v1632 = vld [vmem:[%s20 + $0x28] sm:$0xff]
    %v1633 = vld [vmem:[%s20 + $0x30] sm:$0xff]
    %v1634 = vld [vmem:[%s20 + $0x38] sm:$0xff]
    %v1635 = vld [vmem:[%s21] sm:$0x1]
    %v1637 = vperm.slane %v1635, 0
    %vm1639 = vcmask 523264
    %v1641 = vsel %vm1639, %v1625, 0
    %v1644 = vsel %vm1639, %v1626, 0
    %1646 = vmatpush.msra.mxu0 0.0
    %1647 = vmatpush.msra.mxu0 0.0
    %1648 = vmatpush.msra.mxu0 0.0
    %1649 = vmatpush.msra.mxu0 0.0
    %1650 = vmatpush.msra.mxu0 0.0
    %1651 = vmatpush.msra.mxu0 0.0
    %1652 = vmatpush.msra.mxu0 0.0
    %1653 = vmatpush.msra.mxu0 0.0
    %1654 = vmatpush.msra.mxu0 %v1634
    %1655 = vmatpush.msra.mxu0 %v1633
    %1656 = vmatpush.msra.mxu0 %v1632
    %1657 = vmatpush.msra.mxu0 %v1631
    %1658 = vmatpush.msra.mxu0 %v1630
    %1659 = vmatpush.msra.mxu0 %v1629
    %1660 = vmatpush.msra.mxu0 %v1628
    %1661 = vmatpush.msra.mxu0 %v1627
    %1662 = vmatmul.f32.gmra.mxu0 %v1641
    %v1663 = vpop.f32.mrf.mxu0
    %v1664 = vadd.f32 %v1637, %v1663
    %1665 = vmatmul.f32.gmra.mxu0 %v1644
    %v1666 = vpop.f32.mrf.mxu0
    %v1667 = vadd.f32 %v1637, %v1666
    %1668 = vdwg.mxu0
    %v1669 = vadd.f32 %v1664, %v1586
    %v1670 = vadd.f32 %v1667, %v1587
    %v1671 = vld [vmem:[%s22] sm:$0x1]
    %v1672 = vld [vmem:[%s23] sm:$0x1]
    %v1673 = vsel %vm93, %v1669, 0.0
    %1674 = vadd.xlane.f32.xlu0 %v1673
    %v1675 = vpop.xlane.xlu0 %1674
    %v1676 = vsel %vm93, %v1670, 0.0
    %1677 = vadd.xlane.f32.xlu0 %v1676
    %v1678 = vpop.xlane.xlu0 %1677
    %v1679 = vmul.f32 %v1675, %v776
    %v1680 = vmul.f32 %v1678, %v776
    %v1681 = vsub.f32 %v1669, %v1679
    %v1682 = vsub.f32 %v1670, %v1680
    %v1683 = vmul.f32 %v1681, %v1681
    %v1684 = vmul.f32 %v1682, %v1682
    %v1685 = vsel %vm93, %v1683, 0.0
    %1686 = vadd.xlane.f32.xlu0 %v1685
    %v1687 = vpop.xlane.xlu0 %1686
    %v1688 = vsel %vm93, %v1684, 0.0
    %1689 = vadd.xlane.f32.xlu0 %v1688
    %v1690 = vpop.xlane.xlu0 %1689
    %v1691 = vmul.f32 %v1687, %v776
    %v1692 = vmul.f32 %v1690, %v776
    %v1693 = vadd.f32 %v1691, 1e-05
    %v1694 = vadd.f32 %v1692, 1e-05
    %v1695 = vrsqrt.pop %v1693
    %v1696 = vmul.f32 %v1695, %v1693
    %v1697 = vmul.f32 %v1696, %v1695
    %v1698 = vmul.f32 0.5, %v1697
    %v1699 = vsub.f32 1.5, %v1698
    %v1700 = vmul.f32 %v1695, %v1699
    %vm1701 = vweird.f32 %v1693
    %vm1702 = vweird.f32 %v1695
    %vm1703 = vmor %vm1701, %vm1702
    %v1704 = vsel %vm1703, %v1695, %v1700
    %v1705 = vrsqrt.pop %v1694
    %v1706 = vmul.f32 %v1705, %v1694
    %v1707 = vmul.f32 %v1706, %v1705
    %v1708 = vmul.f32 0.5, %v1707
    %v1709 = vsub.f32 1.5, %v1708
    %v1710 = vmul.f32 %v1705, %v1709
    %vm1711 = vweird.f32 %v1694
    %vm1712 = vweird.f32 %v1705
    %vm1713 = vmor %vm1711, %vm1712
    %v1714 = vsel %vm1713, %v1705, %v1710
    %v1715 = vmul.f32 %v1681, %v1704
    %v1716 = vmul.f32 %v1682, %v1714
    %v1718 = vperm.slane %v1671, 0
    %v1720 = vmul.f32 %v1715, %v1718
    %v1721 = vmul.f32 %v1716, %v1718
    %v1723 = vperm.slane %v1672, 0
    %v1725 = vadd.f32 %v1720, %v1723
    %v1726 = vadd.f32 %v1721, %v1723
    %1727 = vst.msk [vmem:[#allocation3] sm:$0xff] %vm93, %v1725
    %1728 = vst.msk [vmem:[#allocation3 + $0x8] sm:$0xff] %vm93, %v1726
    // Predicated region
    $region98: #{decoder_layer_forward.1} parent=1 // pred_check
      _
    $region99: #{decoder_layer_forward.1} parent=1 // pred_check_branch
      %1730 = sbr.rel (0) target = $region101
    $region100: #{decoder_layer_forward.1} parent=1 // pred_region
      %1732 = vsyncadd [#allocation4], 0
      %s1733 = sshll.u32 [#allocation3], 4
      %s1734 = int_to_ptr.vmem [resolvable:$true] %s1733
      %s1735 = sshll.u32 %s24, 4
      %s1736 = int_to_ptr.hbm [resolvable:$true] %s1735
      %1741 = dma.vmem_to_hbm [thread:$0]  %s1734, 256, %s1736, [#allocation4], 128, 128, 8
    $region101: #{decoder_layer_forward.1} parent=1 // pred_fallthru
      _
    // Predicated region
    $region102: #{decoder_layer_forward.1} parent=1 // pred_check
      _
    $region103: #{decoder_layer_forward.1} parent=1 // pred_check_branch
      %1743 = sbr.rel (0) target = $region105
    $region104: #{decoder_layer_forward.1} parent=1 // pred_region
      _
    $region105: #{decoder_layer_forward.1} parent=1 // pred_fallthru
      _
    // Predicated region
    $region106: #{decoder_layer_forward.1} parent=1 // pred_check
      _
    $region107: #{decoder_layer_forward.1} parent=1 // pred_check_branch
      %1745 = sbr.rel (0) target = $region109
    $region108: #{decoder_layer_forward.1} parent=1 // pred_region
      _
    $region109: #{decoder_layer_forward.1} parent=1 // pred_fallthru
      _
    // Predicated region
    $region110: #{decoder_layer_forward.1} parent=1 // pred_check
      _
    $region111: #{decoder_layer_forward.1} parent=1 // pred_check_branch
      %1747 = sbr.rel (0) target = $region113
    $region112: #{decoder_layer_forward.1} parent=1 // pred_region
      %1749 = dma.done [#allocation4], 256
    $region113: #{decoder_layer_forward.1} parent=1 // pred_fallthru
      _
    // Predicated region
    $region114: #{decoder_layer_forward.1} parent=1 // pred_check
      _
    $region115: #{decoder_layer_forward.1} parent=1 // pred_check_branch
      %1751 = sbr.rel (0) target = $region117
    $region116: #{decoder_layer_forward.1} parent=1 // pred_region
      _
    $region117: #{decoder_layer_forward.1} parent=1 // pred_fallthru
      _
    // Predicated region
    $region118: #{decoder_layer_forward.1} parent=1 // pred_check
      _
    $region119: #{decoder_layer_forward.1} parent=1 // pred_check_branch
      %1753 = sbr.rel (0) target = $region121
    $region120: #{decoder_layer_forward.1} parent=1 // pred_region
      _
    $region121: #{decoder_layer_forward.1} parent=1 // pred_fallthru
      _
    %1754 = vsyncpa [#allocation4], 1

</llo_original>
